<compile_context>
chip_gen: v7x
topology: tpu7x:2x2x1
jax: 0.10.0
libtpu: 0.0.40
codegen_flags: <defaults>
</compile_context>

<pallas_src>
import jax
import jax.numpy as jnp
from jax.experimental import pallas as pl
from jax.experimental.pallas import tpu as pltpu

FEATURE_DIM = 1280


def _round_up(x, m):
    return (x + m - 1) // m * m


# ----------------------------------------------------------------------------
# Fused kernel: GAP+stem (HW reduction) -> feature_processor -> heads+select
# ----------------------------------------------------------------------------
def make_fused_kernel(n_clusters):
    def kernel(x_ref, cid_ref,
               sw_ref, sb_ref,
               w1_ref, b1_ref, w2_ref, b2_ref,
               cw1_ref, cb1_ref, cw2_ref, cb2_ref, cw3_ref, cb3_ref,
               gw1_ref, gb1_ref, gw2_ref, gb2_ref,
               out_ref, acc_ref):
        j = pl.program_id(1)

        @pl.when(j == 0)
        def _init():
            acc_ref[...] = jnp.zeros_like(acc_ref)

        # Partial global-average-pool over this HW tile (1/(H*W) is folded into
        # stem_w in the wrapper), pushed through the stem immediately so the
        # running accumulator is lane-dense (TILE_N, 1280).
        x = x_ref[...].astype(jnp.float32)                          # (TILE_N, C, HW_TILE)
        pooled_part = jnp.sum(x, axis=-1)                           # (TILE_N, C)
        acc_ref[...] += jnp.dot(pooled_part.astype(sw_ref.dtype), sw_ref[...],
                                preferred_element_type=jnp.float32)

        @pl.when(j == pl.num_programs(1) - 1)
        def _finalize():
            feats = acc_ref[...] + sb_ref[...]                      # (TILE_N, 1280)

            # feature_processor: 1280 -> 512 -> 256 (ReLU; Dropout = identity in eval)
            h = jnp.dot(feats.astype(w1_ref.dtype), w1_ref[...],
                        preferred_element_type=jnp.float32) + b1_ref[...]
            h = jnp.maximum(h, 0.0)
            f = jnp.dot(h.astype(w2_ref.dtype), w2_ref[...],
                        preferred_element_type=jnp.float32) + b2_ref[...]
            f = jnp.maximum(f, 0.0)                                  # (TILE_N, 256)

            cid = cid_ref[...]                                       # (TILE_N, 1) int32

            # All cluster heads on the full tile, per-row selection via mask.
            c_sel = jnp.zeros((f.shape[0], 2), jnp.float32)
            for c in range(n_clusters):                              # static unroll (small)
                h1 = jnp.maximum(
                    jnp.dot(f.astype(cw1_ref.dtype), cw1_ref[c],
                            preferred_element_type=jnp.float32) + cb1_ref[c], 0.0)
                h2 = jnp.maximum(
                    jnp.dot(h1.astype(cw2_ref.dtype), cw2_ref[c],
                            preferred_element_type=jnp.float32) + cb2_ref[c], 0.0)
                oc = jnp.tanh(
                    jnp.dot(h2.astype(cw3_ref.dtype), cw3_ref[c],
                            preferred_element_type=jnp.float32) + cb3_ref[c])
                c_sel = c_sel + (cid == c).astype(jnp.float32) * oc  # (TILE_N, 2)

            # Global head (computed once per tile, used for out-of-range ids).
            g1 = jnp.maximum(
                jnp.dot(f.astype(gw1_ref.dtype), gw1_ref[...],
                        preferred_element_type=jnp.float32) + gb1_ref[...], 0.0)
            g_out = jnp.tanh(
                jnp.dot(g1.astype(gw2_ref.dtype), gw2_ref[...],
                        preferred_element_type=jnp.float32) + gb2_ref[...])

            valid = jnp.logical_and(cid >= 0, cid < n_clusters)     # (TILE_N, 1)
            out_ref[...] = (jnp.where(valid, c_sel, g_out) * 3.0).astype(out_ref.dtype)

    return kernel


# ----------------------------------------------------------------------------
# Wrapper: padding, weight casts, BlockSpecs, grid
# ----------------------------------------------------------------------------
def microshift_predictor(x, cluster_id, params, n_clusters, *,
                         compute_dtype=jnp.float32, tile_n=128, hw_tile=1024):
    N, C, H, W = x.shape
    HW = H * W

    # Batch tile (multiple of 8 sublanes) and HW tile (multiple of 128 lanes).
    tile_n = max(8, min(tile_n, _round_up(N, 8)))
    n_pad = _round_up(N, tile_n)
    hw_tile = min(_round_up(HW, 128), _round_up(hw_tile, 128))
    hw_pad = _round_up(HW, hw_tile)

    x_flat = x.reshape(N, C, HW).astype(compute_dtype)
    x_flat = jnp.pad(x_flat, ((0, n_pad - N), (0, 0), (0, hw_pad - HW)))
    cid = jnp.pad(cluster_id.astype(jnp.int32), (0, n_pad - N)).reshape(n_pad, 1)

    # Fold the 1/(H*W) mean scale into the stem weight (zero-padded HW is exact).
    sw = (params["stem_w"] * (1.0 / HW)).astype(compute_dtype)

    def wcast(name):
        return params[name].astype(compute_dtype)

    def bcast(name):
        return params[name].astype(jnp.float32)

    grid = (n_pad // tile_n, hw_pad // hw_tile)
    const2 = lambda i, j: (0, 0)
    const3 = lambda i, j: (0, 0, 0)

    out = pl.pallas_call(
        make_fused_kernel(n_clusters),
        out_shape=jax.ShapeDtypeStruct((n_pad, 2), jnp.float32),
        grid_spec=pltpu.PrefetchScalarGridSpec(
            num_scalar_prefetch=0,
            grid=grid,
            in_specs=[
                pl.BlockSpec((tile_n, C, hw_tile), lambda i, j: (i, 0, j)),  # x
                pl.BlockSpec((tile_n, 1), lambda i, j: (i, 0)),              # cluster ids
                pl.BlockSpec((C, FEATURE_DIM), const2),                      # stem_w (pre-scaled)
                pl.BlockSpec((1, FEATURE_DIM), const2),                      # stem_b
                pl.BlockSpec((FEATURE_DIM, 512), const2),                    # fp_w1
                pl.BlockSpec((1, 512), const2),                              # fp_b1
                pl.BlockSpec((512, 256), const2),                            # fp_w2
                pl.BlockSpec((1, 256), const2),                              # fp_b2
                pl.BlockSpec((n_clusters, 256, 128), const3),                # cw1
                pl.BlockSpec((n_clusters, 1, 128), const3),                  # cb1
                pl.BlockSpec((n_clusters, 128, 64), const3),                 # cw2
                pl.BlockSpec((n_clusters, 1, 64), const3),                   # cb2
                pl.BlockSpec((n_clusters, 64, 2), const3),                   # cw3
                pl.BlockSpec((n_clusters, 1, 2), const3),                    # cb3
                pl.BlockSpec((256, 128), const2),                            # gw1
                pl.BlockSpec((1, 128), const2),                              # gb1
                pl.BlockSpec((128, 2), const2),                              # gw2
                pl.BlockSpec((1, 2), const2),                                # gb2
            ],
            out_specs=pl.BlockSpec((tile_n, 2), lambda i, j: (i, 0)),
            scratch_shapes=[pltpu.VMEM((tile_n, FEATURE_DIM), jnp.float32)],
        ),
        compiler_params=pltpu.CompilerParams(
            dimension_semantics=("parallel", "arbitrary"),
            vmem_limit_bytes=32 * 1024 * 1024,
        ),
    )(x_flat, cid,
      sw, bcast("stem_b"),
      wcast("fp_w1"), bcast("fp_b1"), wcast("fp_w2"), bcast("fp_b2"),
      wcast("cw1"), bcast("cb1"), wcast("cw2"), bcast("cb2"),
      wcast("cw3"), bcast("cb3"),
      wcast("gw1"), bcast("gb1"), wcast("gw2"), bcast("gb2"))

    return out[:N]


# ----------------------------------------------------------------------------
# Pure-JAX reference (mirrors the PyTorch forward with the same surrogate stem)
# ----------------------------------------------------------------------------
def reference_forward(x, cluster_id, params, n_clusters):
    N, C, H, W = x.shape
    pooled = x.reshape(N, C, H * W).mean(-1)
    feats = pooled @ params["stem_w"] + params["stem_b"]
    h = jax.nn.relu(feats @ params["fp_w1"] + params["fp_b1"])
    f = jax.nn.relu(h @ params["fp_w2"] + params["fp_b2"])
    outs = []
    for i in range(N):
        cid = int(cluster_id[i])
        fi = f[i:i + 1]
        if 0 <= cid < n_clusters:
            h1 = jax.nn.relu(fi @ params["cw1"][cid] + params["cb1"][cid])
            h2 = jax.nn.relu(h1 @ params["cw2"][cid] + params["cb2"][cid])
            o = jnp.tanh(h2 @ params["cw3"][cid] + params["cb3"][cid])
        else:
            g1 = jax.nn.relu(fi @ params["gw1"] + params["gb1"])
            o = jnp.tanh(g1 @ params["gw2"] + params["gb2"])
        outs.append(o)
    return jnp.concatenate(outs, axis=0) * 3.0


# ----------------------------------------------------------------------------
# Deterministic parameter initialization (shapes from the module's __init__).
# ----------------------------------------------------------------------------
def init_params(key, n_channels, n_clusters):
    ks = jax.random.split(key, 16)

    def w(k, shape, scale):
        return jax.random.normal(k, shape, jnp.float32) * scale

    return dict(
        stem_w=w(ks[0], (n_channels, FEATURE_DIM), 0.5),
        stem_b=w(ks[1], (1, FEATURE_DIM), 0.01),
        fp_w1=w(ks[2], (FEATURE_DIM, 512), 0.03),
        fp_b1=w(ks[3], (1, 512), 0.01),
        fp_w2=w(ks[4], (512, 256), 0.05),
        fp_b2=w(ks[5], (1, 256), 0.01),
        cw1=w(ks[6], (n_clusters, 256, 128), 0.06),
        cb1=w(ks[7], (n_clusters, 1, 128), 0.01),
        cw2=w(ks[8], (n_clusters, 128, 64), 0.09),
        cb2=w(ks[9], (n_clusters, 1, 64), 0.01),
        cw3=w(ks[10], (n_clusters, 64, 2), 0.12),
        cb3=w(ks[11], (n_clusters, 1, 2), 0.01),
        gw1=w(ks[12], (256, 128), 0.06),
        gb1=w(ks[13], (1, 128), 0.01),
        gw2=w(ks[14], (128, 2), 0.09),
        gb2=w(ks[15], (1, 2), 0.01),
    )


if __name__ == "__main__":
    key = jax.random.PRNGKey(0)
    n_clusters = 3
    N, C, H, W = 2, 4, 16, 16

    kx, kp = jax.random.split(key)
    x = jax.random.normal(kx, (N, C, H, W), jnp.float32)
    # sample 0 hits cluster head 1; sample 1 is out of range -> global head
    cluster_id = jnp.array([1, 7], dtype=jnp.int32)

    params = init_params(kp, C, n_clusters)

    out = microshift_predictor(x, cluster_id, params, n_clusters)
    out = jax.block_until_ready(out)

    assert out.shape == (N, 2) and out.dtype == jnp.float32
    ref = reference_forward(x, cluster_id, params, n_clusters)
    assert bool(jnp.all(jnp.isfinite(out)))
    assert bool(jnp.allclose(out, ref, atol=1e-2, rtol=1e-2)), (out, ref)
    print("KERNEL_OK")
</pallas_src>

<mosaic_0001>
module attributes {stable_mosaic.version = 11 : i64} {
  func.func @kernel(%arg0: i32, %arg1: i32, %arg2: memref<8x4x256xf32, #tpu.memory_space<vmem>>, %arg3: memref<8x1xi32, #tpu.memory_space<vmem>>, %arg4: memref<4x1280xf32, #tpu.memory_space<vmem>>, %arg5: memref<1x1280xf32, #tpu.memory_space<vmem>>, %arg6: memref<1280x512xf32, #tpu.memory_space<vmem>>, %arg7: memref<1x512xf32, #tpu.memory_space<vmem>>, %arg8: memref<512x256xf32, #tpu.memory_space<vmem>>, %arg9: memref<1x256xf32, #tpu.memory_space<vmem>>, %arg10: memref<3x256x128xf32, #tpu.memory_space<vmem>>, %arg11: memref<3x1x128xf32, #tpu.memory_space<vmem>>, %arg12: memref<3x128x64xf32, #tpu.memory_space<vmem>>, %arg13: memref<3x1x64xf32, #tpu.memory_space<vmem>>, %arg14: memref<3x64x2xf32, #tpu.memory_space<vmem>>, %arg15: memref<3x1x2xf32, #tpu.memory_space<vmem>>, %arg16: memref<256x128xf32, #tpu.memory_space<vmem>>, %arg17: memref<1x128xf32, #tpu.memory_space<vmem>>, %arg18: memref<128x2xf32, #tpu.memory_space<vmem>>, %arg19: memref<1x2xf32, #tpu.memory_space<vmem>>, %arg20: memref<8x2xf32, #tpu.memory_space<vmem>>, %arg21: memref<8x1280xf32, #tpu.memory_space<vmem>>) attributes {dimension_semantics = [#tpu.dimension_semantics<parallel>, #tpu.dimension_semantics<arbitrary>], iteration_bounds = array<i64: 1, 1>, scalar_prefetch = 0 : i64, scratch_operands = 1 : i64, tpu.core_type = #tpu.core_type<tc>, window_params = [{transform_indices = @transform_0, window_bounds = array<i64: 8, 4, 256>}, {transform_indices = @transform_1, window_bounds = array<i64: 8, 1>}, {pipeline_mode = #tpu.pipeline_mode<synchronous>, transform_indices = @transform_2, window_bounds = array<i64: 4, 1280>}, {pipeline_mode = #tpu.pipeline_mode<synchronous>, transform_indices = @transform_3, window_bounds = array<i64: 1, 1280>}, {pipeline_mode = #tpu.pipeline_mode<synchronous>, transform_indices = @transform_4, window_bounds = array<i64: 1280, 512>}, {pipeline_mode = #tpu.pipeline_mode<synchronous>, transform_indices = @transform_5, window_bounds = array<i64: 1, 512>}, {pipeline_mode = #tpu.pipeline_mode<synchronous>, transform_indices = @transform_6, window_bounds = array<i64: 512, 256>}, {pipeline_mode = #tpu.pipeline_mode<synchronous>, transform_indices = @transform_7, window_bounds = array<i64: 1, 256>}, {pipeline_mode = #tpu.pipeline_mode<synchronous>, transform_indices = @transform_8, window_bounds = array<i64: 3, 256, 128>}, {pipeline_mode = #tpu.pipeline_mode<synchronous>, transform_indices = @transform_9, window_bounds = array<i64: 3, 1, 128>}, {pipeline_mode = #tpu.pipeline_mode<synchronous>, transform_indices = @transform_10, window_bounds = array<i64: 3, 128, 64>}, {pipeline_mode = #tpu.pipeline_mode<synchronous>, transform_indices = @transform_11, window_bounds = array<i64: 3, 1, 64>}, {pipeline_mode = #tpu.pipeline_mode<synchronous>, transform_indices = @transform_12, window_bounds = array<i64: 3, 64, 2>}, {pipeline_mode = #tpu.pipeline_mode<synchronous>, transform_indices = @transform_13, window_bounds = array<i64: 3, 1, 2>}, {pipeline_mode = #tpu.pipeline_mode<synchronous>, transform_indices = @transform_14, window_bounds = array<i64: 256, 128>}, {pipeline_mode = #tpu.pipeline_mode<synchronous>, transform_indices = @transform_15, window_bounds = array<i64: 1, 128>}, {pipeline_mode = #tpu.pipeline_mode<synchronous>, transform_indices = @transform_16, window_bounds = array<i64: 128, 2>}, {pipeline_mode = #tpu.pipeline_mode<synchronous>, transform_indices = @transform_17, window_bounds = array<i64: 1, 2>}, {transform_indices = @transform_18, window_bounds = array<i64: 8, 2>}]} {
    %c0_i32 = arith.constant 0 : i32
    %0 = arith.cmpi eq, %arg1, %c0_i32 : i32
    %1 = arith.extui %0 : i1 to i32
    %c0_i32_0 = arith.constant 0 : i32
    %2 = arith.cmpi ne, %1, %c0_i32_0 : i32
    scf.if %2 {
      %cst_12 = arith.constant 0.000000e+00 : f32
      %13 = vector.broadcast %cst_12 : f32 to vector<8x1280xf32>
      %c0_13 = arith.constant 0 : index
      %c0_14 = arith.constant 0 : index
      %14 = vector.load %arg21[%c0_13, %c0_14] : memref<8x1280xf32, #tpu.memory_space<vmem>>, vector<8x1280xf32>
      tpu.vector_store %arg21[%c0_13, %c0_14], %13 {strides = array<i32>} : memref<8x1280xf32, #tpu.memory_space<vmem>>, vector<8x1280xf32>,
    } else {
    }
    %c0 = arith.constant 0 : index
    %c0_1 = arith.constant 0 : index
    %c0_2 = arith.constant 0 : index
    %3 = vector.load %arg2[%c0, %c0_1, %c0_2] : memref<8x4x256xf32, #tpu.memory_space<vmem>>, vector<8x4x256xf32>
    %cst = arith.constant dense<0.000000e+00> : vector<8x4xf32>
    %4 = vector.multi_reduction <add>, %3, %cst [2] : vector<8x4x256xf32> to vector<8x4xf32>
    %c0_3 = arith.constant 0 : index
    %c0_4 = arith.constant 0 : index
    %5 = vector.load %arg21[%c0_3, %c0_4] : memref<8x1280xf32, #tpu.memory_space<vmem>>, vector<8x1280xf32>
    %c0_5 = arith.constant 0 : index
    %c0_6 = arith.constant 0 : index
    %6 = vector.load %arg4[%c0_5, %c0_6] : memref<4x1280xf32, #tpu.memory_space<vmem>>, vector<4x1280xf32>
    %cst_7 = arith.constant dense<0.000000e+00> : vector<8x1280xf32>
    %7 = tpu.matmul %4, %6, %cst_7 {dimension_numbers = #tpu.dot_dimension_numbers<[1], [0], [0], [1], [0, 0, 1, 1], [], []>} : vector<8x4xf32>, vector<4x1280xf32>, vector<8x1280xf32> -> vector<8x1280xf32>
    %8 = arith.addf %5, %7 : vector<8x1280xf32>
    %c0_8 = arith.constant 0 : index
    %c0_9 = arith.constant 0 : index
    %9 = vector.load %arg21[%c0_8, %c0_9] : memref<8x1280xf32, #tpu.memory_space<vmem>>, vector<8x1280xf32>
    tpu.vector_store %arg21[%c0_8, %c0_9], %8 {strides = array<i32>} : memref<8x1280xf32, #tpu.memory_space<vmem>>, vector<8x1280xf32>,
    %c0_i32_10 = arith.constant 0 : i32
    %10 = arith.cmpi eq, %arg1, %c0_i32_10 : i32
    %11 = arith.extui %10 : i1 to i32
    %c0_i32_11 = arith.constant 0 : i32
    %12 = arith.cmpi ne, %11, %c0_i32_11 : i32
    scf.if %12 {
      %c0_12 = arith.constant 0 : index
      %c0_13 = arith.constant 0 : index
      %13 = vector.load %arg21[%c0_12, %c0_13] : memref<8x1280xf32, #tpu.memory_space<vmem>>, vector<8x1280xf32>
      %c0_14 = arith.constant 0 : index
      %c0_15 = arith.constant 0 : index
      %14 = vector.load %arg5[%c0_14, %c0_15] : memref<1x1280xf32, #tpu.memory_space<vmem>>, vector<1x1280xf32>
      %15 = vector.broadcast %14 : vector<1x1280xf32> to vector<8x1280xf32>
      %16 = arith.addf %13, %15 : vector<8x1280xf32>
      %c0_16 = arith.constant 0 : index
      %c0_17 = arith.constant 0 : index
      %17 = vector.load %arg6[%c0_16, %c0_17] : memref<1280x512xf32, #tpu.memory_space<vmem>>, vector<1280x512xf32>
      %cst_18 = arith.constant dense<0.000000e+00> : vector<8x512xf32>
      %18 = tpu.matmul %16, %17, %cst_18 {dimension_numbers = #tpu.dot_dimension_numbers<[1], [0], [0], [1], [0, 0, 1, 1], [], []>} : vector<8x1280xf32>, vector<1280x512xf32>, vector<8x512xf32> -> vector<8x512xf32>
      %c0_19 = arith.constant 0 : index
      %c0_20 = arith.constant 0 : index
      %19 = vector.load %arg7[%c0_19, %c0_20] : memref<1x512xf32, #tpu.memory_space<vmem>>, vector<1x512xf32>
      %20 = vector.broadcast %19 : vector<1x512xf32> to vector<8x512xf32>
      %21 = arith.addf %18, %20 : vector<8x512xf32>
      %cst_21 = arith.constant 0.000000e+00 : f32
      %22 = vector.broadcast %cst_21 : f32 to vector<8x512xf32>
      %23 = arith.maximumf %21, %22 : vector<8x512xf32>
      %c0_22 = arith.constant 0 : index
      %c0_23 = arith.constant 0 : index
      %24 = vector.load %arg8[%c0_22, %c0_23] : memref<512x256xf32, #tpu.memory_space<vmem>>, vector<512x256xf32>
      %cst_24 = arith.constant dense<0.000000e+00> : vector<8x256xf32>
      %25 = tpu.matmul %23, %24, %cst_24 {dimension_numbers = #tpu.dot_dimension_numbers<[1], [0], [0], [1], [0, 0, 1, 1], [], []>} : vector<8x512xf32>, vector<512x256xf32>, vector<8x256xf32> -> vector<8x256xf32>
      %c0_25 = arith.constant 0 : index
      %c0_26 = arith.constant 0 : index
      %26 = vector.load %arg9[%c0_25, %c0_26] : memref<1x256xf32, #tpu.memory_space<vmem>>, vector<1x256xf32>
      %27 = vector.broadcast %26 : vector<1x256xf32> to vector<8x256xf32>
      %28 = arith.addf %25, %27 : vector<8x256xf32>
      %cst_27 = arith.constant 0.000000e+00 : f32
      %29 = vector.broadcast %cst_27 : f32 to vector<8x256xf32>
      %30 = arith.maximumf %28, %29 : vector<8x256xf32>
      %c0_28 = arith.constant 0 : index
      %c0_29 = arith.constant 0 : index
      %31 = vector.load %arg3[%c0_28, %c0_29] : memref<8x1xi32, #tpu.memory_space<vmem>>, vector<8x1xi32>
      %cst_30 = arith.constant 0.000000e+00 : f32
      %32 = vector.broadcast %cst_30 : f32 to vector<8x2xf32>
      %c0_31 = arith.constant 0 : index
      %c0_32 = arith.constant 0 : index
      %c0_33 = arith.constant 0 : index
      %33 = vector.load %arg10[%c0_31, %c0_32, %c0_33] : memref<3x256x128xf32, #tpu.memory_space<vmem>>, vector<1x256x128xf32>
      %34 = vector.shape_cast %33 : vector<1x256x128xf32> to vector<256x128xf32>
      %cst_34 = arith.constant dense<0.000000e+00> : vector<8x128xf32>
      %35 = tpu.matmul %30, %34, %cst_34 {dimension_numbers = #tpu.dot_dimension_numbers<[1], [0], [0], [1], [0, 0, 1, 1], [], []>} : vector<8x256xf32>, vector<256x128xf32>, vector<8x128xf32> -> vector<8x128xf32>
      %c0_35 = arith.constant 0 : index
      %c0_36 = arith.constant 0 : index
      %c0_37 = arith.constant 0 : index
      %36 = vector.load %arg11[%c0_35, %c0_36, %c0_37] : memref<3x1x128xf32, #tpu.memory_space<vmem>>, vector<1x1x128xf32>
      %37 = vector.shape_cast %36 : vector<1x1x128xf32> to vector<1x128xf32>
      %38 = vector.broadcast %37 : vector<1x128xf32> to vector<8x128xf32>
      %39 = arith.addf %35, %38 : vector<8x128xf32>
      %cst_38 = arith.constant 0.000000e+00 : f32
      %40 = vector.broadcast %cst_38 : f32 to vector<8x128xf32>
      %41 = arith.maximumf %39, %40 : vector<8x128xf32>
      %c0_39 = arith.constant 0 : index
      %c0_40 = arith.constant 0 : index
      %c0_41 = arith.constant 0 : index
      %42 = vector.load %arg12[%c0_39, %c0_40, %c0_41] : memref<3x128x64xf32, #tpu.memory_space<vmem>>, vector<1x128x64xf32>
      %43 = vector.shape_cast %42 : vector<1x128x64xf32> to vector<128x64xf32>
      %cst_42 = arith.constant dense<0.000000e+00> : vector<8x64xf32>
      %44 = tpu.matmul %41, %43, %cst_42 {dimension_numbers = #tpu.dot_dimension_numbers<[1], [0], [0], [1], [0, 0, 1, 1], [], []>} : vector<8x128xf32>, vector<128x64xf32>, vector<8x64xf32> -> vector<8x64xf32>
      %c0_43 = arith.constant 0 : index
      %c0_44 = arith.constant 0 : index
      %c0_45 = arith.constant 0 : index
      %45 = vector.load %arg13[%c0_43, %c0_44, %c0_45] : memref<3x1x64xf32, #tpu.memory_space<vmem>>, vector<1x1x64xf32>
      %46 = vector.shape_cast %45 : vector<1x1x64xf32> to vector<1x64xf32>
      %47 = vector.broadcast %46 : vector<1x64xf32> to vector<8x64xf32>
      %48 = arith.addf %44, %47 : vector<8x64xf32>
      %cst_46 = arith.constant 0.000000e+00 : f32
      %49 = vector.broadcast %cst_46 : f32 to vector<8x64xf32>
      %50 = arith.maximumf %48, %49 : vector<8x64xf32>
      %c0_47 = arith.constant 0 : index
      %c0_48 = arith.constant 0 : index
      %c0_49 = arith.constant 0 : index
      %51 = vector.load %arg14[%c0_47, %c0_48, %c0_49] : memref<3x64x2xf32, #tpu.memory_space<vmem>>, vector<1x64x2xf32>
      %52 = vector.shape_cast %51 : vector<1x64x2xf32> to vector<64x2xf32>
      %cst_50 = arith.constant dense<0.000000e+00> : vector<8x2xf32>
      %53 = tpu.matmul %50, %52, %cst_50 {dimension_numbers = #tpu.dot_dimension_numbers<[1], [0], [0], [1], [0, 0, 1, 1], [], []>} : vector<8x64xf32>, vector<64x2xf32>, vector<8x2xf32> -> vector<8x2xf32>
      %c0_51 = arith.constant 0 : index
      %c0_52 = arith.constant 0 : index
      %c0_53 = arith.constant 0 : index
      %54 = vector.load %arg15[%c0_51, %c0_52, %c0_53] : memref<3x1x2xf32, #tpu.memory_space<vmem>>, vector<1x1x2xf32>
      %55 = vector.shape_cast %54 : vector<1x1x2xf32> to vector<1x2xf32>
      %56 = vector.broadcast %55 : vector<1x2xf32> to vector<8x2xf32>
      %57 = arith.addf %53, %56 : vector<8x2xf32>
      %58 = math.tanh %57 : vector<8x2xf32>
      %c0_i32_54 = arith.constant 0 : i32
      %59 = vector.broadcast %c0_i32_54 : i32 to vector<8x1xi32>
      %60 = arith.cmpi eq, %31, %59 : vector<8x1xi32>
      %61 = arith.extui %60 : vector<8x1xi1> to vector<8x1xi32>
      %62 = arith.sitofp %61 : vector<8x1xi32> to vector<8x1xf32>
      %63 = vector.broadcast %62 : vector<8x1xf32> to vector<8x2xf32>
      %64 = arith.mulf %63, %58 : vector<8x2xf32>
      %65 = arith.addf %32, %64 : vector<8x2xf32>
      %c1 = arith.constant 1 : index
      %c0_55 = arith.constant 0 : index
      %c0_56 = arith.constant 0 : index
      %66 = vector.load %arg10[%c1, %c0_55, %c0_56] : memref<3x256x128xf32, #tpu.memory_space<vmem>>, vector<1x256x128xf32>
      %67 = vector.shape_cast %66 : vector<1x256x128xf32> to vector<256x128xf32>
      %cst_57 = arith.constant dense<0.000000e+00> : vector<8x128xf32>
      %68 = tpu.matmul %30, %67, %cst_57 {dimension_numbers = #tpu.dot_dimension_numbers<[1], [0], [0], [1], [0, 0, 1, 1], [], []>} : vector<8x256xf32>, vector<256x128xf32>, vector<8x128xf32> -> vector<8x128xf32>
      %c1_58 = arith.constant 1 : index
      %c0_59 = arith.constant 0 : index
      %c0_60 = arith.constant 0 : index
      %69 = vector.load %arg11[%c1_58, %c0_59, %c0_60] : memref<3x1x128xf32, #tpu.memory_space<vmem>>, vector<1x1x128xf32>
      %70 = vector.shape_cast %69 : vector<1x1x128xf32> to vector<1x128xf32>
      %71 = vector.broadcast %70 : vector<1x128xf32> to vector<8x128xf32>
      %72 = arith.addf %68, %71 : vector<8x128xf32>
      %cst_61 = arith.constant 0.000000e+00 : f32
      %73 = vector.broadcast %cst_61 : f32 to vector<8x128xf32>
      %74 = arith.maximumf %72, %73 : vector<8x128xf32>
      %c1_62 = arith.constant 1 : index
      %c0_63 = arith.constant 0 : index
      %c0_64 = arith.constant 0 : index
      %75 = vector.load %arg12[%c1_62, %c0_63, %c0_64] : memref<3x128x64xf32, #tpu.memory_space<vmem>>, vector<1x128x64xf32>
      %76 = vector.shape_cast %75 : vector<1x128x64xf32> to vector<128x64xf32>
      %cst_65 = arith.constant dense<0.000000e+00> : vector<8x64xf32>
      %77 = tpu.matmul %74, %76, %cst_65 {dimension_numbers = #tpu.dot_dimension_numbers<[1], [0], [0], [1], [0, 0, 1, 1], [], []>} : vector<8x128xf32>, vector<128x64xf32>, vector<8x64xf32> -> vector<8x64xf32>
      %c1_66 = arith.constant 1 : index
      %c0_67 = arith.constant 0 : index
      %c0_68 = arith.constant 0 : index
      %78 = vector.load %arg13[%c1_66, %c0_67, %c0_68] : memref<3x1x64xf32, #tpu.memory_space<vmem>>, vector<1x1x64xf32>
      %79 = vector.shape_cast %78 : vector<1x1x64xf32> to vector<1x64xf32>
      %80 = vector.broadcast %79 : vector<1x64xf32> to vector<8x64xf32>
      %81 = arith.addf %77, %80 : vector<8x64xf32>
      %cst_69 = arith.constant 0.000000e+00 : f32
      %82 = vector.broadcast %cst_69 : f32 to vector<8x64xf32>
      %83 = arith.maximumf %81, %82 : vector<8x64xf32>
      %c1_70 = arith.constant 1 : index
      %c0_71 = arith.constant 0 : index
      %c0_72 = arith.constant 0 : index
      %84 = vector.load %arg14[%c1_70, %c0_71, %c0_72] : memref<3x64x2xf32, #tpu.memory_space<vmem>>, vector<1x64x2xf32>
      %85 = vector.shape_cast %84 : vector<1x64x2xf32> to vector<64x2xf32>
      %cst_73 = arith.constant dense<0.000000e+00> : vector<8x2xf32>
      %86 = tpu.matmul %83, %85, %cst_73 {dimension_numbers = #tpu.dot_dimension_numbers<[1], [0], [0], [1], [0, 0, 1, 1], [], []>} : vector<8x64xf32>, vector<64x2xf32>, vector<8x2xf32> -> vector<8x2xf32>
      %c1_74 = arith.constant 1 : index
      %c0_75 = arith.constant 0 : index
      %c0_76 = arith.constant 0 : index
      %87 = vector.load %arg15[%c1_74, %c0_75, %c0_76] : memref<3x1x2xf32, #tpu.memory_space<vmem>>, vector<1x1x2xf32>
      %88 = vector.shape_cast %87 : vector<1x1x2xf32> to vector<1x2xf32>
      %89 = vector.broadcast %88 : vector<1x2xf32> to vector<8x2xf32>
      %90 = arith.addf %86, %89 : vector<8x2xf32>
      %91 = math.tanh %90 : vector<8x2xf32>
      %c1_i32 = arith.constant 1 : i32
      %92 = vector.broadcast %c1_i32 : i32 to vector<8x1xi32>
      %93 = arith.cmpi eq, %31, %92 : vector<8x1xi32>
      %94 = arith.extui %93 : vector<8x1xi1> to vector<8x1xi32>
      %95 = arith.sitofp %94 : vector<8x1xi32> to vector<8x1xf32>
      %96 = vector.broadcast %95 : vector<8x1xf32> to vector<8x2xf32>
      %97 = arith.mulf %96, %91 : vector<8x2xf32>
      %98 = arith.addf %65, %97 : vector<8x2xf32>
      %c2 = arith.constant 2 : index
      %c0_77 = arith.constant 0 : index
      %c0_78 = arith.constant 0 : index
      %99 = vector.load %arg10[%c2, %c0_77, %c0_78] : memref<3x256x128xf32, #tpu.memory_space<vmem>>, vector<1x256x128xf32>
      %100 = vector.shape_cast %99 : vector<1x256x128xf32> to vector<256x128xf32>
      %cst_79 = arith.constant dense<0.000000e+00> : vector<8x128xf32>
      %101 = tpu.matmul %30, %100, %cst_79 {dimension_numbers = #tpu.dot_dimension_numbers<[1], [0], [0], [1], [0, 0, 1, 1], [], []>} : vector<8x256xf32>, vector<256x128xf32>, vector<8x128xf32> -> vector<8x128xf32>
      %c2_80 = arith.constant 2 : index
      %c0_81 = arith.constant 0 : index
      %c0_82 = arith.constant 0 : index
      %102 = vector.load %arg11[%c2_80, %c0_81, %c0_82] : memref<3x1x128xf32, #tpu.memory_space<vmem>>, vector<1x1x128xf32>
      %103 = vector.shape_cast %102 : vector<1x1x128xf32> to vector<1x128xf32>
      %104 = vector.broadcast %103 : vector<1x128xf32> to vector<8x128xf32>
      %105 = arith.addf %101, %104 : vector<8x128xf32>
      %cst_83 = arith.constant 0.000000e+00 : f32
      %106 = vector.broadcast %cst_83 : f32 to vector<8x128xf32>
      %107 = arith.maximumf %105, %106 : vector<8x128xf32>
      %c2_84 = arith.constant 2 : index
      %c0_85 = arith.constant 0 : index
      %c0_86 = arith.constant 0 : index
      %108 = vector.load %arg12[%c2_84, %c0_85, %c0_86] : memref<3x128x64xf32, #tpu.memory_space<vmem>>, vector<1x128x64xf32>
      %109 = vector.shape_cast %108 : vector<1x128x64xf32> to vector<128x64xf32>
      %cst_87 = arith.constant dense<0.000000e+00> : vector<8x64xf32>
      %110 = tpu.matmul %107, %109, %cst_87 {dimension_numbers = #tpu.dot_dimension_numbers<[1], [0], [0], [1], [0, 0, 1, 1], [], []>} : vector<8x128xf32>, vector<128x64xf32>, vector<8x64xf32> -> vector<8x64xf32>
      %c2_88 = arith.constant 2 : index
      %c0_89 = arith.constant 0 : index
      %c0_90 = arith.constant 0 : index
      %111 = vector.load %arg13[%c2_88, %c0_89, %c0_90] : memref<3x1x64xf32, #tpu.memory_space<vmem>>, vector<1x1x64xf32>
      %112 = vector.shape_cast %111 : vector<1x1x64xf32> to vector<1x64xf32>
      %113 = vector.broadcast %112 : vector<1x64xf32> to vector<8x64xf32>
      %114 = arith.addf %110, %113 : vector<8x64xf32>
      %cst_91 = arith.constant 0.000000e+00 : f32
      %115 = vector.broadcast %cst_91 : f32 to vector<8x64xf32>
      %116 = arith.maximumf %114, %115 : vector<8x64xf32>
      %c2_92 = arith.constant 2 : index
      %c0_93 = arith.constant 0 : index
      %c0_94 = arith.constant 0 : index
      %117 = vector.load %arg14[%c2_92, %c0_93, %c0_94] : memref<3x64x2xf32, #tpu.memory_space<vmem>>, vector<1x64x2xf32>
      %118 = vector.shape_cast %117 : vector<1x64x2xf32> to vector<64x2xf32>
      %cst_95 = arith.constant dense<0.000000e+00> : vector<8x2xf32>
      %119 = tpu.matmul %116, %118, %cst_95 {dimension_numbers = #tpu.dot_dimension_numbers<[1], [0], [0], [1], [0, 0, 1, 1], [], []>} : vector<8x64xf32>, vector<64x2xf32>, vector<8x2xf32> -> vector<8x2xf32>
      %c2_96 = arith.constant 2 : index
      %c0_97 = arith.constant 0 : index
      %c0_98 = arith.constant 0 : index
      %120 = vector.load %arg15[%c2_96, %c0_97, %c0_98] : memref<3x1x2xf32, #tpu.memory_space<vmem>>, vector<1x1x2xf32>
      %121 = vector.shape_cast %120 : vector<1x1x2xf32> to vector<1x2xf32>
      %122 = vector.broadcast %121 : vector<1x2xf32> to vector<8x2xf32>
      %123 = arith.addf %119, %122 : vector<8x2xf32>
      %124 = math.tanh %123 : vector<8x2xf32>
      %c2_i32 = arith.constant 2 : i32
      %125 = vector.broadcast %c2_i32 : i32 to vector<8x1xi32>
      %126 = arith.cmpi eq, %31, %125 : vector<8x1xi32>
      %127 = arith.extui %126 : vector<8x1xi1> to vector<8x1xi32>
      %128 = arith.sitofp %127 : vector<8x1xi32> to vector<8x1xf32>
      %129 = vector.broadcast %128 : vector<8x1xf32> to vector<8x2xf32>
      %130 = arith.mulf %129, %124 : vector<8x2xf32>
      %131 = arith.addf %98, %130 : vector<8x2xf32>
      %c0_99 = arith.constant 0 : index
      %c0_100 = arith.constant 0 : index
      %132 = vector.load %arg16[%c0_99, %c0_100] : memref<256x128xf32, #tpu.memory_space<vmem>>, vector<256x128xf32>
      %cst_101 = arith.constant dense<0.000000e+00> : vector<8x128xf32>
      %133 = tpu.matmul %30, %132, %cst_101 {dimension_numbers = #tpu.dot_dimension_numbers<[1], [0], [0], [1], [0, 0, 1, 1], [], []>} : vector<8x256xf32>, vector<256x128xf32>, vector<8x128xf32> -> vector<8x128xf32>
      %c0_102 = arith.constant 0 : index
      %c0_103 = arith.constant 0 : index
      %134 = vector.load %arg17[%c0_102, %c0_103] : memref<1x128xf32, #tpu.memory_space<vmem>>, vector<1x128xf32>
      %135 = vector.broadcast %134 : vector<1x128xf32> to vector<8x128xf32>
      %136 = arith.addf %133, %135 : vector<8x128xf32>
      %cst_104 = arith.constant 0.000000e+00 : f32
      %137 = vector.broadcast %cst_104 : f32 to vector<8x128xf32>
      %138 = arith.maximumf %136, %137 : vector<8x128xf32>
      %c0_105 = arith.constant 0 : index
      %c0_106 = arith.constant 0 : index
      %139 = vector.load %arg18[%c0_105, %c0_106] : memref<128x2xf32, #tpu.memory_space<vmem>>, vector<128x2xf32>
      %cst_107 = arith.constant dense<0.000000e+00> : vector<8x2xf32>
      %140 = tpu.matmul %138, %139, %cst_107 {dimension_numbers = #tpu.dot_dimension_numbers<[1], [0], [0], [1], [0, 0, 1, 1], [], []>} : vector<8x128xf32>, vector<128x2xf32>, vector<8x2xf32> -> vector<8x2xf32>
      %c0_108 = arith.constant 0 : index
      %c0_109 = arith.constant 0 : index
      %141 = vector.load %arg19[%c0_108, %c0_109] : memref<1x2xf32, #tpu.memory_space<vmem>>, vector<1x2xf32>
      %142 = vector.broadcast %141 : vector<1x2xf32> to vector<8x2xf32>
      %143 = arith.addf %140, %142 : vector<8x2xf32>
      %144 = math.tanh %143 : vector<8x2xf32>
      %c0_i32_110 = arith.constant 0 : i32
      %145 = vector.broadcast %c0_i32_110 : i32 to vector<8x1xi32>
      %146 = arith.cmpi sge, %31, %145 : vector<8x1xi32>
      %c3_i32 = arith.constant 3 : i32
      %147 = vector.broadcast %c3_i32 : i32 to vector<8x1xi32>
      %148 = arith.cmpi slt, %31, %147 : vector<8x1xi32>
      %149 = arith.andi %146, %148 : vector<8x1xi1>
      %150 = vector.shape_cast %149 : vector<8x1xi1> to vector<8x1xi1>
      %151 = vector.broadcast %150 : vector<8x1xi1> to vector<8x2xi1>
      %152 = arith.select %151, %131, %144 : vector<8x2xi1>, vector<8x2xf32>
      %cst_111 = arith.constant 3.000000e+00 : f32
      %153 = vector.broadcast %cst_111 : f32 to vector<8x2xf32>
      %154 = arith.mulf %152, %153 : vector<8x2xf32>
      %c0_112 = arith.constant 0 : index
      %c0_113 = arith.constant 0 : index
      %155 = vector.load %arg20[%c0_112, %c0_113] : memref<8x2xf32, #tpu.memory_space<vmem>>, vector<8x2xf32>
      tpu.vector_store %arg20[%c0_112, %c0_113], %154 {strides = array<i32>} : memref<8x2xf32, #tpu.memory_space<vmem>>, vector<8x2xf32>,
    } else {
    }
    return
  }
  func.func @transform_0(%arg0: i32, %arg1: i32) -> (i32, i32, i32) {
    %c0_i32 = arith.constant 0 : i32
    %c0_i32_0 = arith.constant 0 : i32
    return %arg0, %c0_i32, %arg1 : i32, i32, i32
  }
  func.func @transform_1(%arg0: i32, %arg1: i32) -> (i32, i32) {
    %c0_i32 = arith.constant 0 : i32
    %c0_i32_0 = arith.constant 0 : i32
    return %arg0, %c0_i32 : i32, i32
  }
  func.func @transform_2(%arg0: i32, %arg1: i32) -> (i32, i32) {
    %c0_i32 = arith.constant 0 : i32
    %c0_i32_0 = arith.constant 0 : i32
    %c0_i32_1 = arith.constant 0 : i32
    return %c0_i32, %c0_i32_0 : i32, i32
  }
  func.func @transform_3(%arg0: i32, %arg1: i32) -> (i32, i32) {
    %c0_i32 = arith.constant 0 : i32
    %c0_i32_0 = arith.constant 0 : i32
    %c0_i32_1 = arith.constant 0 : i32
    return %c0_i32, %c0_i32_0 : i32, i32
  }
  func.func @transform_4(%arg0: i32, %arg1: i32) -> (i32, i32) {
    %c0_i32 = arith.constant 0 : i32
    %c0_i32_0 = arith.constant 0 : i32
    %c0_i32_1 = arith.constant 0 : i32
    return %c0_i32, %c0_i32_0 : i32, i32
  }
  func.func @transform_5(%arg0: i32, %arg1: i32) -> (i32, i32) {
    %c0_i32 = arith.constant 0 : i32
    %c0_i32_0 = arith.constant 0 : i32
    %c0_i32_1 = arith.constant 0 : i32
    return %c0_i32, %c0_i32_0 : i32, i32
  }
  func.func @transform_6(%arg0: i32, %arg1: i32) -> (i32, i32) {
    %c0_i32 = arith.constant 0 : i32
    %c0_i32_0 = arith.constant 0 : i32
    %c0_i32_1 = arith.constant 0 : i32
    return %c0_i32, %c0_i32_0 : i32, i32
  }
  func.func @transform_7(%arg0: i32, %arg1: i32) -> (i32, i32) {
    %c0_i32 = arith.constant 0 : i32
    %c0_i32_0 = arith.constant 0 : i32
    %c0_i32_1 = arith.constant 0 : i32
    return %c0_i32, %c0_i32_0 : i32, i32
  }
  func.func @transform_8(%arg0: i32, %arg1: i32) -> (i32, i32, i32) {
    %c0_i32 = arith.constant 0 : i32
    %c0_i32_0 = arith.constant 0 : i32
    %c0_i32_1 = arith.constant 0 : i32
    %c0_i32_2 = arith.constant 0 : i32
    return %c0_i32, %c0_i32_0, %c0_i32_1 : i32, i32, i32
  }
  func.func @transform_9(%arg0: i32, %arg1: i32) -> (i32, i32, i32) {
    %c0_i32 = arith.constant 0 : i32
    %c0_i32_0 = arith.constant 0 : i32
    %c0_i32_1 = arith.constant 0 : i32
    %c0_i32_2 = arith.constant 0 : i32
    return %c0_i32, %c0_i32_0, %c0_i32_1 : i32, i32, i32
  }
  func.func @transform_10(%arg0: i32, %arg1: i32) -> (i32, i32, i32) {
    %c0_i32 = arith.constant 0 : i32
    %c0_i32_0 = arith.constant 0 : i32
    %c0_i32_1 = arith.constant 0 : i32
    %c0_i32_2 = arith.constant 0 : i32
    return %c0_i32, %c0_i32_0, %c0_i32_1 : i32, i32, i32
  }
  func.func @transform_11(%arg0: i32, %arg1: i32) -> (i32, i32, i32) {
    %c0_i32 = arith.constant 0 : i32
    %c0_i32_0 = arith.constant 0 : i32
    %c0_i32_1 = arith.constant 0 : i32
    %c0_i32_2 = arith.constant 0 : i32
    return %c0_i32, %c0_i32_0, %c0_i32_1 : i32, i32, i32
  }
  func.func @transform_12(%arg0: i32, %arg1: i32) -> (i32, i32, i32) {
    %c0_i32 = arith.constant 0 : i32
    %c0_i32_0 = arith.constant 0 : i32
    %c0_i32_1 = arith.constant 0 : i32
    %c0_i32_2 = arith.constant 0 : i32
    return %c0_i32, %c0_i32_0, %c0_i32_1 : i32, i32, i32
  }
  func.func @transform_13(%arg0: i32, %arg1: i32) -> (i32, i32, i32) {
    %c0_i32 = arith.constant 0 : i32
    %c0_i32_0 = arith.constant 0 : i32
    %c0_i32_1 = arith.constant 0 : i32
    %c0_i32_2 = arith.constant 0 : i32
    return %c0_i32, %c0_i32_0, %c0_i32_1 : i32, i32, i32
  }
  func.func @transform_14(%arg0: i32, %arg1: i32) -> (i32, i32) {
    %c0_i32 = arith.constant 0 : i32
    %c0_i32_0 = arith.constant 0 : i32
    %c0_i32_1 = arith.constant 0 : i32
    return %c0_i32, %c0_i32_0 : i32, i32
  }
  func.func @transform_15(%arg0: i32, %arg1: i32) -> (i32, i32) {
    %c0_i32 = arith.constant 0 : i32
    %c0_i32_0 = arith.constant 0 : i32
    %c0_i32_1 = arith.constant 0 : i32
    return %c0_i32, %c0_i32_0 : i32, i32
  }
  func.func @transform_16(%arg0: i32, %arg1: i32) -> (i32, i32) {
    %c0_i32 = arith.constant 0 : i32
    %c0_i32_0 = arith.constant 0 : i32
    %c0_i32_1 = arith.constant 0 : i32
    return %c0_i32, %c0_i32_0 : i32, i32
  }
  func.func @transform_17(%arg0: i32, %arg1: i32) -> (i32, i32) {
    %c0_i32 = arith.constant 0 : i32
    %c0_i32_0 = arith.constant 0 : i32
    %c0_i32_1 = arith.constant 0 : i32
    return %c0_i32, %c0_i32_0 : i32, i32
  }
  func.func @transform_18(%arg0: i32, %arg1: i32) -> (i32, i32) {
    %c0_i32 = arith.constant 0 : i32
    %c0_i32_0 = arith.constant 0 : i32
    return %arg0, %c0_i32 : i32, i32
  }
}

</mosaic_0001>

<llo_original>
// kernel: tpu_custom_call.1
$region0: #{tpu_custom_call.1}
  #allocation0 [shape = 'u32[]', space=smem, size = 0x4, offset = 0x4, fixed_abs, tag = 'smem constant byte address 0x4 - core index']
  #allocation1 [shape = 'u32[144,128]{1,0:T(1,128)}', space=vmem, size = 0x12000, scoped, tag = 'internal scratch']
  #allocation2 [shape = 'f32[8,1280]{1,0:T(8,128)}', space=vmem, size = 0xa000, scoped, tag = 'scratch operand']
  %s0 = inlined_call_operand.hbm [shape: f32[8,4,256], index: 0, kind: input, shape index: {}]
  %s1 = inlined_call_operand.vmem [shape: s32[8,1], index: 1, kind: input, shape index: {}]
  %s2 = inlined_call_operand.hbm [shape: f32[4,1280], index: 2, kind: input, shape index: {}]
  %s3 = inlined_call_operand.hbm [shape: f32[1,1280], index: 3, kind: input, shape index: {}]
  %s4 = inlined_call_operand.hbm [shape: f32[1280,512], index: 4, kind: input, shape index: {}]
  %s5 = inlined_call_operand.hbm [shape: f32[1,512], index: 5, kind: input, shape index: {}]
  %s6 = inlined_call_operand.hbm [shape: f32[512,256], index: 6, kind: input, shape index: {}]
  %s7 = inlined_call_operand.hbm [shape: f32[1,256], index: 7, kind: input, shape index: {}]
  %s8 = inlined_call_operand.hbm [shape: f32[3,256,128], index: 8, kind: input, shape index: {}]
  %s9 = inlined_call_operand.hbm [shape: f32[3,1,128], index: 9, kind: input, shape index: {}]
  %s10 = inlined_call_operand.vmem [shape: f32[3,128,64], index: 10, kind: input, shape index: {}]
  %s11 = inlined_call_operand.hbm [shape: f32[3,1,64], index: 11, kind: input, shape index: {}]
  %s12 = inlined_call_operand.vmem [shape: f32[3,64,2], index: 12, kind: input, shape index: {}]
  %s13 = inlined_call_operand.vmem [shape: f32[3,1,2], index: 13, kind: input, shape index: {}]
  %s14 = inlined_call_operand.hbm [shape: f32[256,128], index: 14, kind: input, shape index: {}]
  %s15 = inlined_call_operand.hbm [shape: f32[1,128], index: 15, kind: input, shape index: {}]
  %s16 = inlined_call_operand.vmem [shape: f32[128,2], index: 16, kind: input, shape index: {}]
  %s17 = inlined_call_operand.hbm [shape: f32[1,2], index: 17, kind: input, shape index: {}]
  %s18 = inlined_call_operand.vmem [shape: f32[8,2], index: 18, kind: output, shape index: {}]
  %s19 = sld [smem:[#allocation0]]
  $region142: #{tpu_custom_call.1} parent=0
    _
  %s21 = ssub.s32 1, %s19
  %s22 = scalar_select 0, %s21, %s19
  $region1: #{tpu_custom_call.1} parent=0
    #allocation3 [shape = 'u8[32768]{0}', space=vmem, size = 0x8000, scoped, tag = 'input window, operand 0, single buffered']
    #allocation4 [shape = 's32[1]{0}', space=sflag, size = 0x4, scoped, tag = 'scoped memory for tpu_custom_call.1']
    #allocation5 [shape = 'u8[20480]{0}', space=vmem, size = 0x5000, scoped, tag = 'input window, operand 2, single buffered']
    #allocation6 [shape = 's32[1]{0}', space=sflag, size = 0x4, scoped, tag = 'scoped memory for tpu_custom_call.1']
    #allocation7 [shape = 'u8[5120]{0}', space=vmem, size = 0x1400, scoped, tag = 'input window, operand 3, single buffered']
    #allocation8 [shape = 'u8[2621440]{0}', space=vmem, size = 0x280000, scoped, tag = 'input window, operand 4, single buffered']
    #allocation9 [shape = 's32[1]{0}', space=sflag, size = 0x4, scoped, tag = 'scoped memory for tpu_custom_call.1']
    #allocation10 [shape = 'u8[2048]{0}', space=vmem, size = 0x800, scoped, tag = 'input window, operand 5, single buffered']
    #allocation11 [shape = 'u8[524288]{0}', space=vmem, size = 0x80000, scoped, tag = 'input window, operand 6, single buffered']
    #allocation12 [shape = 's32[1]{0}', space=sflag, size = 0x4, scoped, tag = 'scoped memory for tpu_custom_call.1']
    #allocation13 [shape = 'u8[1024]{0}', space=vmem, size = 0x400, scoped, tag = 'input window, operand 7, single buffered']
    #allocation14 [shape = 'u8[393216]{0}', space=vmem, size = 0x60000, scoped, tag = 'input window, operand 8, single buffered']
    #allocation15 [shape = 's32[1]{0}', space=sflag, size = 0x4, scoped, tag = 'scoped memory for tpu_custom_call.1']
    #allocation16 [shape = 'u8[1536]{0}', space=vmem, size = 0x800, scoped, tag = 'input window, operand 9, single buffered']
    #allocation17 [shape = 'u8[1536]{0}', space=vmem, size = 0x800, scoped, tag = 'input window, operand 11, single buffered']
    #allocation18 [shape = 's32[1]{0}', space=sflag, size = 0x4, scoped, tag = 'scoped memory for tpu_custom_call.1']
    #allocation19 [shape = 'u8[131072]{0}', space=vmem, size = 0x20000, scoped, tag = 'input window, operand 14, single buffered']
    #allocation20 [shape = 'u8[512]{0}', space=vmem, size = 0x400, scoped, tag = 'input window, operand 15, single buffered']
    #allocation21 [shape = 's32[1]{0}', space=sflag, size = 0x4, scoped, tag = 'scoped memory for tpu_custom_call.1']
    #allocation22 [shape = 'u8[512]{0}', space=vmem, size = 0x400, scoped, tag = 'input window, operand 17, single buffered']
    %23 = vsyncpa [#allocation4], 0
    %24 = vsyncpa [#allocation6], 0
    %25 = vsyncpa [#allocation9], 0
    %26 = vsyncpa [#allocation12], 0
    %27 = vsyncpa [#allocation15], 0
    %28 = vsyncpa [#allocation18], 0
    %29 = vsyncpa [#allocation21], 0
    // Predicated region
    $region2: #{tpu_custom_call.1} parent=1 // pred_check
      _
    $region3: #{tpu_custom_call.1} parent=1 // pred_check_branch
      %31 = sbr.rel (0) target = $region5
    $region4: #{tpu_custom_call.1} parent=1 // pred_region
      %s33 = ssub.s32 1024, 1024
      %34 = vsyncadd [#allocation4], %s33
      %s35 = sshll.u32 [#allocation3], 4
      %s36 = int_to_ptr.vmem [resolvable:$true] %s35
      %41 = dma.hbm_to_vmem [thread:$0]  %s0, 1024, %s36, [#allocation4], 128, 128, 8
    $region5: #{tpu_custom_call.1} parent=1 // pred_fallthru
      _
    // Predicated region
    $region6: #{tpu_custom_call.1} parent=1 // pred_check
      _
    $region7: #{tpu_custom_call.1} parent=1 // pred_check_branch
      %43 = sbr.rel (0) target = $region9
    $region8: #{tpu_custom_call.1} parent=1 // pred_region
      _
    $region9: #{tpu_custom_call.1} parent=1 // pred_fallthru
      _
    // Predicated region
    $region10: #{tpu_custom_call.1} parent=1 // pred_check
      _
    $region11: #{tpu_custom_call.1} parent=1 // pred_check_branch
      %45 = sbr.rel (0) target = $region13
    $region12: #{tpu_custom_call.1} parent=1 // pred_region
      %s47 = ssub.s32 640, 640
      %48 = vsyncadd [#allocation6], %s47
      %s50 = sshll.u32 [#allocation5], 4
      %s51 = int_to_ptr.vmem [resolvable:$true] %s50
      %53 = dma.hbm_to_vmem [thread:$0]  %s2, 640, %s51, [#allocation6]
    $region13: #{tpu_custom_call.1} parent=1 // pred_fallthru
      _
    // Predicated region
    $region14: #{tpu_custom_call.1} parent=1 // pred_check
      _
    $region15: #{tpu_custom_call.1} parent=1 // pred_check_branch
      %55 = sbr.rel (0) target = $region17
    $region16: #{tpu_custom_call.1} parent=1 // pred_region
      %s57 = ssub.s32 160, 160
      %58 = vsyncadd [#allocation6], %s57
      %s60 = sshll.u32 [#allocation7], 4
      %s61 = int_to_ptr.vmem [resolvable:$true] %s60
      %63 = dma.hbm_to_vmem [thread:$0]  %s3, 160, %s61, [#allocation6]
    $region17: #{tpu_custom_call.1} parent=1 // pred_fallthru
      _
    // Predicated region
    $region18: #{tpu_custom_call.1} parent=1 // pred_check
      _
    $region19: #{tpu_custom_call.1} parent=1 // pred_check_branch
      %65 = sbr.rel (0) target = $region21
    $region20: #{tpu_custom_call.1} parent=1 // pred_region
      %s67 = ssub.s32 81920, 81920
      %68 = vsyncadd [#allocation9], %s67
      %s69 = sshll.u32 [#allocation8], 4
      %s70 = int_to_ptr.vmem [resolvable:$true] %s69
      %75 = dma.hbm_to_vmem [thread:$0]  %s4, 81920, %s70, [#allocation9], 512, 512, 32
    $region21: #{tpu_custom_call.1} parent=1 // pred_fallthru
      _
    // Predicated region
    $region22: #{tpu_custom_call.1} parent=1 // pred_check
      _
    $region23: #{tpu_custom_call.1} parent=1 // pred_check_branch
      %77 = sbr.rel (0) target = $region25
    $region24: #{tpu_custom_call.1} parent=1 // pred_region
      %s79 = ssub.s32 64, 64
      %80 = vsyncadd [#allocation9], %s79
      %s82 = sshll.u32 [#allocation10], 4
      %s83 = int_to_ptr.vmem [resolvable:$true] %s82
      %85 = dma.hbm_to_vmem [thread:$0]  %s5, 64, %s83, [#allocation9]
    $region25: #{tpu_custom_call.1} parent=1 // pred_fallthru
      _
    // Predicated region
    $region26: #{tpu_custom_call.1} parent=1 // pred_check
      _
    $region27: #{tpu_custom_call.1} parent=1 // pred_check_branch
      %87 = sbr.rel (0) target = $region29
    $region28: #{tpu_custom_call.1} parent=1 // pred_region
      %s89 = ssub.s32 16384, 16384
      %90 = vsyncadd [#allocation12], %s89
      %s91 = sshll.u32 [#allocation11], 4
      %s92 = int_to_ptr.vmem [resolvable:$true] %s91
      %97 = dma.hbm_to_vmem [thread:$0]  %s6, 16384, %s92, [#allocation12], 256, 256, 16
    $region29: #{tpu_custom_call.1} parent=1 // pred_fallthru
      _
    // Predicated region
    $region30: #{tpu_custom_call.1} parent=1 // pred_check
      _
    $region31: #{tpu_custom_call.1} parent=1 // pred_check_branch
      %99 = sbr.rel (0) target = $region33
    $region32: #{tpu_custom_call.1} parent=1 // pred_region
      %s101 = ssub.s32 32, 32
      %102 = vsyncadd [#allocation12], %s101
      %s104 = sshll.u32 [#allocation13], 4
      %s105 = int_to_ptr.vmem [resolvable:$true] %s104
      %107 = dma.hbm_to_vmem [thread:$0]  %s7, 32, %s105, [#allocation12]
    $region33: #{tpu_custom_call.1} parent=1 // pred_fallthru
      _
    // Predicated region
    $region34: #{tpu_custom_call.1} parent=1 // pred_check
      _
    $region35: #{tpu_custom_call.1} parent=1 // pred_check_branch
      %109 = sbr.rel (0) target = $region37
    $region36: #{tpu_custom_call.1} parent=1 // pred_region
      %s111 = ssub.s32 12288, 12288
      %112 = vsyncadd [#allocation15], %s111
      %s113 = sshll.u32 [#allocation14], 4
      %s114 = int_to_ptr.vmem [resolvable:$true] %s113
      %119 = dma.hbm_to_vmem [thread:$0]  %s8, 12288, %s114, [#allocation15], 128, 128, 8
    $region37: #{tpu_custom_call.1} parent=1 // pred_fallthru
      _
    // Predicated region
    $region38: #{tpu_custom_call.1} parent=1 // pred_check
      _
    $region39: #{tpu_custom_call.1} parent=1 // pred_check_branch
      %121 = sbr.rel (0) target = $region41
    $region40: #{tpu_custom_call.1} parent=1 // pred_region
      %s123 = ssub.s32 48, 48
      %124 = vsyncadd [#allocation15], %s123
      %s125 = sshll.u32 [#allocation16], 4
      %s126 = int_to_ptr.vmem [resolvable:$true] %s125
      %131 = dma.hbm_to_vmem [thread:$0]  %s9, 48, %s126, [#allocation15], 16, 16, 1
    $region41: #{tpu_custom_call.1} parent=1 // pred_fallthru
      _
    // Predicated region
    $region42: #{tpu_custom_call.1} parent=1 // pred_check
      _
    $region43: #{tpu_custom_call.1} parent=1 // pred_check_branch
      %133 = sbr.rel (0) target = $region45
    $region44: #{tpu_custom_call.1} parent=1 // pred_region
      _
    $region45: #{tpu_custom_call.1} parent=1 // pred_fallthru
      _
    // Predicated region
    $region46: #{tpu_custom_call.1} parent=1 // pred_check
      _
    $region47: #{tpu_custom_call.1} parent=1 // pred_check_branch
      %135 = sbr.rel (0) target = $region49
    $region48: #{tpu_custom_call.1} parent=1 // pred_region
      %s137 = ssub.s32 48, 48
      %138 = vsyncadd [#allocation18], %s137
      %s139 = sshll.u32 [#allocation17], 4
      %s140 = int_to_ptr.vmem [resolvable:$true] %s139
      %145 = dma.hbm_to_vmem [thread:$0]  %s11, 48, %s140, [#allocation18], 16, 16, 1
    $region49: #{tpu_custom_call.1} parent=1 // pred_fallthru
      _
    // Predicated region
    $region50: #{tpu_custom_call.1} parent=1 // pred_check
      _
    $region51: #{tpu_custom_call.1} parent=1 // pred_check_branch
      %147 = sbr.rel (0) target = $region53
    $region52: #{tpu_custom_call.1} parent=1 // pred_region
      _
    $region53: #{tpu_custom_call.1} parent=1 // pred_fallthru
      _
    // Predicated region
    $region54: #{tpu_custom_call.1} parent=1 // pred_check
      _
    $region55: #{tpu_custom_call.1} parent=1 // pred_check_branch
      %149 = sbr.rel (0) target = $region57
    $region56: #{tpu_custom_call.1} parent=1 // pred_region
      _
    $region57: #{tpu_custom_call.1} parent=1 // pred_fallthru
      _
    // Predicated region
    $region58: #{tpu_custom_call.1} parent=1 // pred_check
      _
    $region59: #{tpu_custom_call.1} parent=1 // pred_check_branch
      %151 = sbr.rel (0) target = $region61
    $region60: #{tpu_custom_call.1} parent=1 // pred_region
      %s153 = ssub.s32 4096, 4096
      %154 = vsyncadd [#allocation18], %s153
      %s155 = sshll.u32 [#allocation19], 4
      %s156 = int_to_ptr.vmem [resolvable:$true] %s155
      %161 = dma.hbm_to_vmem [thread:$0]  %s14, 4096, %s156, [#allocation18], 128, 128, 8
    $region61: #{tpu_custom_call.1} parent=1 // pred_fallthru
      _
    // Predicated region
    $region62: #{tpu_custom_call.1} parent=1 // pred_check
      _
    $region63: #{tpu_custom_call.1} parent=1 // pred_check_branch
      %163 = sbr.rel (0) target = $region65
    $region64: #{tpu_custom_call.1} parent=1 // pred_region
      %s165 = ssub.s32 16, 16
      %166 = vsyncadd [#allocation21], %s165
      %s168 = sshll.u32 [#allocation20], 4
      %s169 = int_to_ptr.vmem [resolvable:$true] %s168
      %171 = dma.hbm_to_vmem [thread:$0]  %s15, 16, %s169, [#allocation21]
    $region65: #{tpu_custom_call.1} parent=1 // pred_fallthru
      _
    // Predicated region
    $region66: #{tpu_custom_call.1} parent=1 // pred_check
      _
    $region67: #{tpu_custom_call.1} parent=1 // pred_check_branch
      %173 = sbr.rel (0) target = $region69
    $region68: #{tpu_custom_call.1} parent=1 // pred_region
      _
    $region69: #{tpu_custom_call.1} parent=1 // pred_fallthru
      _
    // Predicated region
    $region70: #{tpu_custom_call.1} parent=1 // pred_check
      _
    $region71: #{tpu_custom_call.1} parent=1 // pred_check_branch
      %175 = sbr.rel (0) target = $region73
    $region72: #{tpu_custom_call.1} parent=1 // pred_region
      %s177 = ssub.s32 16, 16
      %178 = vsyncadd [#allocation21], %s177
      %s180 = sshll.u32 [#allocation22], 4
      %s181 = int_to_ptr.vmem [resolvable:$true] %s180
      %183 = dma.hbm_to_vmem [thread:$0]  %s17, 16, %s181, [#allocation21]
    $region73: #{tpu_custom_call.1} parent=1 // pred_fallthru
      _
    // Predicated region
    $region74: #{tpu_custom_call.1} parent=1 // pred_check
      _
    $region75: #{tpu_custom_call.1} parent=1 // pred_check_branch
      %185 = sbr.rel (0) target = $region77
    $region76: #{tpu_custom_call.1} parent=1 // pred_region
      %186 = dma.done [#allocation4], 1024
    $region77: #{tpu_custom_call.1} parent=1 // pred_fallthru
      _
    // Predicated region
    $region78: #{tpu_custom_call.1} parent=1 // pred_check
      _
    $region79: #{tpu_custom_call.1} parent=1 // pred_check_branch
      %188 = sbr.rel (0) target = $region81
    $region80: #{tpu_custom_call.1} parent=1 // pred_region
      %189 = dma.done [#allocation6], 640
    $region81: #{tpu_custom_call.1} parent=1 // pred_fallthru
      _
    // Predicated region
    $region82: #{tpu_custom_call.1} parent=1 // pred_check
      _
    $region83: #{tpu_custom_call.1} parent=1 // pred_check_branch
      %191 = sbr.rel (0) target = $region85
    $region84: #{tpu_custom_call.1} parent=1 // pred_region
      %192 = dma.done [#allocation6], 160
    $region85: #{tpu_custom_call.1} parent=1 // pred_fallthru
      _
    // Predicated region
    $region86: #{tpu_custom_call.1} parent=1 // pred_check
      _
    $region87: #{tpu_custom_call.1} parent=1 // pred_check_branch
      %194 = sbr.rel (0) target = $region89
    $region88: #{tpu_custom_call.1} parent=1 // pred_region
      %195 = dma.done [#allocation9], 81920
    $region89: #{tpu_custom_call.1} parent=1 // pred_fallthru
      _
    // Predicated region
    $region90: #{tpu_custom_call.1} parent=1 // pred_check
      _
    $region91: #{tpu_custom_call.1} parent=1 // pred_check_branch
      %197 = sbr.rel (0) target = $region93
    $region92: #{tpu_custom_call.1} parent=1 // pred_region
      %198 = dma.done [#allocation9], 64
    $region93: #{tpu_custom_call.1} parent=1 // pred_fallthru
      _
    // Predicated region
    $region94: #{tpu_custom_call.1} parent=1 // pred_check
      _
    $region95: #{tpu_custom_call.1} parent=1 // pred_check_branch
      %200 = sbr.rel (0) target = $region97
    $region96: #{tpu_custom_call.1} parent=1 // pred_region
      %201 = dma.done [#allocation12], 16384
    $region97: #{tpu_custom_call.1} parent=1 // pred_fallthru
      _
    // Predicated region
    $region98: #{tpu_custom_call.1} parent=1 // pred_check
      _
    $region99: #{tpu_custom_call.1} parent=1 // pred_check_branch
      %203 = sbr.rel (0) target = $region101
    $region100: #{tpu_custom_call.1} parent=1 // pred_region
      %204 = dma.done [#allocation12], 32
    $region101: #{tpu_custom_call.1} parent=1 // pred_fallthru
      _
    // Predicated region
    $region102: #{tpu_custom_call.1} parent=1 // pred_check
      _
    $region103: #{tpu_custom_call.1} parent=1 // pred_check_branch
      %206 = sbr.rel (0) target = $region105
    $region104: #{tpu_custom_call.1} parent=1 // pred_region
      %207 = dma.done [#allocation15], 12288
    $region105: #{tpu_custom_call.1} parent=1 // pred_fallthru
      _
    // Predicated region
    $region106: #{tpu_custom_call.1} parent=1 // pred_check
      _
    $region107: #{tpu_custom_call.1} parent=1 // pred_check_branch
      %209 = sbr.rel (0) target = $region109
    $region108: #{tpu_custom_call.1} parent=1 // pred_region
      %210 = dma.done [#allocation15], 48
    $region109: #{tpu_custom_call.1} parent=1 // pred_fallthru
      _
    // Predicated region
    $region110: #{tpu_custom_call.1} parent=1 // pred_check
      _
    $region111: #{tpu_custom_call.1} parent=1 // pred_check_branch
      %212 = sbr.rel (0) target = $region113
    $region112: #{tpu_custom_call.1} parent=1 // pred_region
      %213 = dma.done [#allocation18], 48
    $region113: #{tpu_custom_call.1} parent=1 // pred_fallthru
      _
    // Predicated region
    $region114: #{tpu_custom_call.1} parent=1 // pred_check
      _
    $region115: #{tpu_custom_call.1} parent=1 // pred_check_branch
      %215 = sbr.rel (0) target = $region117
    $region116: #{tpu_custom_call.1} parent=1 // pred_region
      %216 = dma.done [#allocation18], 4096
    $region117: #{tpu_custom_call.1} parent=1 // pred_fallthru
      _
    // Predicated region
    $region118: #{tpu_custom_call.1} parent=1 // pred_check
      _
    $region119: #{tpu_custom_call.1} parent=1 // pred_check_branch
      %218 = sbr.rel (0) target = $region121
    $region120: #{tpu_custom_call.1} parent=1 // pred_region
      %219 = dma.done [#allocation21], 16
    $region121: #{tpu_custom_call.1} parent=1 // pred_fallthru
      _
    // Predicated region
    $region122: #{tpu_custom_call.1} parent=1 // pred_check
      _
    $region123: #{tpu_custom_call.1} parent=1 // pred_check_branch
      %221 = sbr.rel (0) target = $region125
    $region124: #{tpu_custom_call.1} parent=1 // pred_region
      %222 = dma.done [#allocation21], 16
    $region125: #{tpu_custom_call.1} parent=1 // pred_fallthru
      _
    %p223 = scmp.eq.s32.totalorder 0, 0
    // Predicated region
    $region126: #{tpu_custom_call.1} parent=1 // pred_check
      %p224 = pneg %p223
    $region127: #{tpu_custom_call.1} parent=1 // pred_check_branch
      %226 = sbr.rel (%p224) target = $region129
    $region128: #{tpu_custom_call.1} parent=1 // pred_region
      %227 = vst [vmem:[#allocation2] sm:$0xff] 0.0
      %228 = vst [vmem:[#allocation2 + $0x8] sm:$0xff] 0.0
      %229 = vst [vmem:[#allocation2 + $0x10] sm:$0xff] 0.0
      %230 = vst [vmem:[#allocation2 + $0x18] sm:$0xff] 0.0
      %231 = vst [vmem:[#allocation2 + $0x20] sm:$0xff] 0.0
      %232 = vst [vmem:[#allocation2 + $0x28] sm:$0xff] 0.0
      %233 = vst [vmem:[#allocation2 + $0x30] sm:$0xff] 0.0
      %234 = vst [vmem:[#allocation2 + $0x38] sm:$0xff] 0.0
      %235 = vst [vmem:[#allocation2 + $0x40] sm:$0xff] 0.0
      %236 = vst [vmem:[#allocation2 + $0x48] sm:$0xff] 0.0
    $region129: #{tpu_custom_call.1} parent=1 // pred_fallthru
      _
    %v237 = vld [vmem:[#allocation3] sm:$0xff]
    %v238 = vld [vmem:[#allocation3 + $0x8] sm:$0xff]
    %v239 = vld [vmem:[#allocation3 + $0x10] sm:$0xff]
    %v240 = vld [vmem:[#allocation3 + $0x18] sm:$0xff]
    %v241 = vld [vmem:[#allocation3 + $0x20] sm:$0xff]
    %v242 = vld [vmem:[#allocation3 + $0x28] sm:$0xff]
    %v243 = vld [vmem:[#allocation3 + $0x30] sm:$0xff]
    %v244 = vld [vmem:[#allocation3 + $0x38] sm:$0xff]
    %v253 = vcombine.high %v237, %v237
    %v254 = vcombine.high %v238, %v238
    %v255 = vcombine.high %v239, %v239
    %v256 = vcombine.high %v240, %v240
    %v257 = vcombine.high %v241, %v241
    %v258 = vcombine.high %v242, %v242
    %v259 = vcombine.high %v243, %v243
    %v260 = vcombine.high %v244, %v244
    %vm269 = vcmask 1043456
    %v270 = vsel %vm269, %v237, 0.0
    %v271 = vsel %vm269, %v253, 0.0
    %v272 = vadd.f32 %v270, %v271
    %273 = vadd.xlane.f32.xlu0 %v272
    %v274 = vpop.xlane.xlu0 %273
    %v275 = vsel %vm269, %v238, 0.0
    %v276 = vsel %vm269, %v254, 0.0
    %v277 = vadd.f32 %v275, %v276
    %278 = vadd.xlane.f32.xlu0 %v277
    %v279 = vpop.xlane.xlu0 %278
    %v280 = vsel %vm269, %v239, 0.0
    %v281 = vsel %vm269, %v255, 0.0
    %v282 = vadd.f32 %v280, %v281
    %283 = vadd.xlane.f32.xlu0 %v282
    %v284 = vpop.xlane.xlu0 %283
    %v285 = vsel %vm269, %v240, 0.0
    %v286 = vsel %vm269, %v256, 0.0
    %v287 = vadd.f32 %v285, %v286
    %288 = vadd.xlane.f32.xlu0 %v287
    %v289 = vpop.xlane.xlu0 %288
    %v290 = vsel %vm269, %v241, 0.0
    %v291 = vsel %vm269, %v257, 0.0
    %v292 = vadd.f32 %v290, %v291
    %293 = vadd.xlane.f32.xlu0 %v292
    %v294 = vpop.xlane.xlu0 %293
    %v295 = vsel %vm269, %v242, 0.0
    %v296 = vsel %vm269, %v258, 0.0
    %v297 = vadd.f32 %v295, %v296
    %298 = vadd.xlane.f32.xlu0 %v297
    %v299 = vpop.xlane.xlu0 %298
    %v300 = vsel %vm269, %v243, 0.0
    %v301 = vsel %vm269, %v259, 0.0
    %v302 = vadd.f32 %v300, %v301
    %303 = vadd.xlane.f32.xlu0 %v302
    %v304 = vpop.xlane.xlu0 %303
    %v305 = vsel %vm269, %v244, 0.0
    %v306 = vsel %vm269, %v260, 0.0
    %v307 = vadd.f32 %v305, %v306
    %308 = vadd.xlane.f32.xlu0 %v307
    %v309 = vpop.xlane.xlu0 %308
    %v310 = vld [vmem:[#allocation2] sm:$0xff]
    %v311 = vld [vmem:[#allocation2 + $0x8] sm:$0xff]
    %v312 = vld [vmem:[#allocation2 + $0x10] sm:$0xff]
    %v313 = vld [vmem:[#allocation2 + $0x18] sm:$0xff]
    %v314 = vld [vmem:[#allocation2 + $0x20] sm:$0xff]
    %v315 = vld [vmem:[#allocation2 + $0x28] sm:$0xff]
    %v316 = vld [vmem:[#allocation2 + $0x30] sm:$0xff]
    %v317 = vld [vmem:[#allocation2 + $0x38] sm:$0xff]
    %v318 = vld [vmem:[#allocation2 + $0x40] sm:$0xff]
    %v319 = vld [vmem:[#allocation2 + $0x48] sm:$0xff]
    %v320 = vld [vmem:[#allocation5] sm:$0xff]
    %v321 = vld [vmem:[#allocation5 + $0x8] sm:$0xff]
    %v322 = vld [vmem:[#allocation5 + $0x10] sm:$0xff]
    %v323 = vld [vmem:[#allocation5 + $0x18] sm:$0xff]
    %v324 = vld [vmem:[#allocation5 + $0x20] sm:$0xff]
    %v333 = vlaneseq
    %v334 = vand.u32 %v333, 127
    %v335 = vlaneseq
    %v336 = vshrl.u32 %v335, 7
    %v337 = vsub.s32 %v334, %v336
    %v338 = vrot.slane %v274, %v337
    %v339 = vlaneseq
    %v340 = vshrl.u32 %v339, 7
    %v341 = vsub.s32 %v334, %v340
    %v342 = vrot.slane %v279, %v341
    %v343 = vlaneseq
    %v344 = vshrl.u32 %v343, 7
    %v345 = vsub.s32 %v334, %v344
    %v346 = vrot.slane %v284, %v345
    %v347 = vlaneseq
    %v348 = vshrl.u32 %v347, 7
    %v349 = vsub.s32 %v334, %v348
    %v350 = vrot.slane %v289, %v349
    %v351 = vlaneseq
    %v352 = vshrl.u32 %v351, 7
    %v353 = vsub.s32 %v334, %v352
    %v354 = vrot.slane %v294, %v353
    %v355 = vlaneseq
    %v356 = vshrl.u32 %v355, 7
    %v357 = vsub.s32 %v334, %v356
    %v358 = vrot.slane %v299, %v357
    %v359 = vlaneseq
    %v360 = vshrl.u32 %v359, 7
    %v361 = vsub.s32 %v334, %v360
    %v362 = vrot.slane %v304, %v361
    %v363 = vlaneseq
    %v364 = vshrl.u32 %v363, 7
    %v365 = vsub.s32 %v334, %v364
    %v366 = vrot.slane %v309, %v365
    %vm367 = vcmask 1041409
    %v368 = vsel %vm367, %v342, %v338
    %vm369 = vcmask 1042434
    %v370 = vsel %vm369, %v346, %v368
    %vm371 = vcmask 1043459
    %v372 = vsel %vm371, %v350, %v370
    %vm373 = vcmask 1044484
    %v374 = vsel %vm373, %v354, %v372
    %vm375 = vcmask 1045509
    %v376 = vsel %vm375, %v358, %v374
    %vm377 = vcmask 1046534
    %v378 = vsel %vm377, %v362, %v376
    %vm379 = vcmask 1047559
    %v380 = vsel %vm379, %v366, %v378
    %v386 = vcombine.high %v320, %v320
    %v387 = vcombine.high %v321, %v321
    %v388 = vcombine.high %v322, %v322
    %v389 = vcombine.high %v323, %v323
    %v390 = vcombine.high %v324, %v324
    %vm391 = vcmask 31744
    %v392 = vsel %vm391, %v380, 0
    %v394 = vsel %vm269, %v320, 0
    %v396 = vsel %vm269, %v386, 0
    %v398 = vsel %vm269, %v321, 0
    %v400 = vsel %vm269, %v387, 0
    %v402 = vsel %vm269, %v322, 0
    %v404 = vsel %vm269, %v388, 0
    %v406 = vsel %vm269, %v323, 0
    %v408 = vsel %vm269, %v389, 0
    %v410 = vsel %vm269, %v324, 0
    %v412 = vsel %vm269, %v390, 0
    %414 = vmatprep.subr.mxu0 %v396
    %415 = vmatpush1.msra.mxu0 %v394
    %416 = vmatprep.subr.mxu0 0.0
    %417 = vmatpush1.msra.mxu0 0.0
    %418 = vmatprep.subr.mxu0 0.0
    %419 = vmatpush1.msra.mxu0 0.0
    %420 = vmatprep.subr.mxu0 0.0
    %421 = vmatpush1.msra.mxu0 0.0
    %422 = vmatprep.subr.mxu0 0.0
    %423 = vmatpush1.msra.mxu0 0.0
    %424 = vmatprep.subr.mxu0 0.0
    %425 = vmatpush1.msra.mxu0 0.0
    %426 = vmatprep.subr.mxu0 0.0
    %427 = vmatpush1.msra.mxu0 0.0
    %428 = vmatprep.subr.mxu0 0.0
    %429 = vmatpush1.msra.mxu0 0.0
    %430 = vmatprep.subr.mxu0 0.0
    %431 = vmatpush1.msra.mxu0 0.0
    %432 = vmatprep.subr.mxu0 0.0
    %433 = vmatpush1.msra.mxu0 0.0
    %434 = vmatprep.subr.mxu0 0.0
    %435 = vmatpush1.msra.mxu0 0.0
    %436 = vmatprep.subr.mxu0 0.0
    %437 = vmatpush1.msra.mxu0 0.0
    %438 = vmatprep.subr.mxu0 0.0
    %439 = vmatpush1.msra.mxu0 0.0
    %440 = vmatprep.subr.mxu0 0.0
    %441 = vmatpush1.msra.mxu0 0.0
    %442 = vmatprep.subr.mxu0 0.0
    %443 = vmatpush1.msra.mxu0 0.0
    %444 = vmatprep.subr.mxu0 0.0
    %445 = vmatpush1.msra.mxu0 0.0
    %446 = vmatprep.subr.mxu0 0.0
    %447 = vmatpush1.msra.mxu0 0.0
    %448 = vmatprep.subr.mxu0 0.0
    %449 = vmatpush1.msra.mxu0 0.0
    %450 = vmatprep.subr.mxu0 0.0
    %451 = vmatpush1.msra.mxu0 0.0
    %452 = vmatprep.subr.mxu0 0.0
    %453 = vmatpush1.msra.mxu0 0.0
    %454 = vmatprep.subr.mxu0 0.0
    %455 = vmatpush1.msra.mxu0 0.0
    %456 = vmatprep.subr.mxu0 0.0
    %457 = vmatpush1.msra.mxu0 0.0
    %458 = vmatprep.subr.mxu0 0.0
    %459 = vmatpush1.msra.mxu0 0.0
    %460 = vmatprep.subr.mxu0 0.0
    %461 = vmatpush1.msra.mxu0 0.0
    %462 = vmatprep.subr.mxu0 0.0
    %463 = vmatpush1.msra.mxu0 0.0
    %464 = vmatprep.subr.mxu0 0.0
    %465 = vmatpush1.msra.mxu0 0.0
    %466 = vmatprep.subr.mxu0 0.0
    %467 = vmatpush1.msra.mxu0 0.0
    %468 = vmatprep.subr.mxu0 0.0
    %469 = vmatpush1.msra.mxu0 0.0
    %470 = vmatprep.subr.mxu0 0.0
    %471 = vmatpush1.msra.mxu0 0.0
    %472 = vmatprep.subr.mxu0 0.0
    %473 = vmatpush1.msra.mxu0 0.0
    %474 = vmatprep.subr.mxu0 0.0
    %475 = vmatpush1.msra.mxu0 0.0
    %476 = vmatprep.subr.mxu0 0.0
    %477 = vmatpush1.msra.mxu0 0.0
    %478 = vmatprep.mubr.f32.mxu0 0.0
    %479 = vmatmul.mubr.f32.gmra.mrb[0].mxu0 %v392
    %v480 = vpop.f32.mrb[0].mxu0
    %v481 = vadd.f32 0.0, %v480
    %v482 = vpop.f32.mrb[0].mxu0
    %v483 = vadd.f32 0.0, %v482
    %484 = vdwg.mxu0
    %485 = vmatprep.subr.mxu0 %v400
    %486 = vmatpush1.msra.mxu0 %v398
    %487 = vmatprep.subr.mxu0 0.0
    %488 = vmatpush1.msra.mxu0 0.0
    %489 = vmatprep.subr.mxu0 0.0
    %490 = vmatpush1.msra.mxu0 0.0
    %491 = vmatprep.subr.mxu0 0.0
    %492 = vmatpush1.msra.mxu0 0.0
    %493 = vmatprep.subr.mxu0 0.0
    %494 = vmatpush1.msra.mxu0 0.0
    %495 = vmatprep.subr.mxu0 0.0
    %496 = vmatpush1.msra.mxu0 0.0
    %497 = vmatprep.subr.mxu0 0.0
    %498 = vmatpush1.msra.mxu0 0.0
    %499 = vmatprep.subr.mxu0 0.0
    %500 = vmatpush1.msra.mxu0 0.0
    %501 = vmatprep.subr.mxu0 0.0
    %502 = vmatpush1.msra.mxu0 0.0
    %503 = vmatprep.subr.mxu0 0.0
    %504 = vmatpush1.msra.mxu0 0.0
    %505 = vmatprep.subr.mxu0 0.0
    %506 = vmatpush1.msra.mxu0 0.0
    %507 = vmatprep.subr.mxu0 0.0
    %508 = vmatpush1.msra.mxu0 0.0
    %509 = vmatprep.subr.mxu0 0.0
    %510 = vmatpush1.msra.mxu0 0.0
    %511 = vmatprep.subr.mxu0 0.0
    %512 = vmatpush1.msra.mxu0 0.0
    %513 = vmatprep.subr.mxu0 0.0
    %514 = vmatpush1.msra.mxu0 0.0
    %515 = vmatprep.subr.mxu0 0.0
    %516 = vmatpush1.msra.mxu0 0.0
    %517 = vmatprep.subr.mxu0 0.0
    %518 = vmatpush1.msra.mxu0 0.0
    %519 = vmatprep.subr.mxu0 0.0
    %520 = vmatpush1.msra.mxu0 0.0
    %521 = vmatprep.subr.mxu0 0.0
    %522 = vmatpush1.msra.mxu0 0.0
    %523 = vmatprep.subr.mxu0 0.0
    %524 = vmatpush1.msra.mxu0 0.0
    %525 = vmatprep.subr.mxu0 0.0
    %526 = vmatpush1.msra.mxu0 0.0
    %527 = vmatprep.subr.mxu0 0.0
    %528 = vmatpush1.msra.mxu0 0.0
    %529 = vmatprep.subr.mxu0 0.0
    %530 = vmatpush1.msra.mxu0 0.0
    %531 = vmatprep.subr.mxu0 0.0
    %532 = vmatpush1.msra.mxu0 0.0
    %533 = vmatprep.subr.mxu0 0.0
    %534 = vmatpush1.msra.mxu0 0.0
    %535 = vmatprep.subr.mxu0 0.0
    %536 = vmatpush1.msra.mxu0 0.0
    %537 = vmatprep.subr.mxu0 0.0
    %538 = vmatpush1.msra.mxu0 0.0
    %539 = vmatprep.subr.mxu0 0.0
    %540 = vmatpush1.msra.mxu0 0.0
    %541 = vmatprep.subr.mxu0 0.0
    %542 = vmatpush1.msra.mxu0 0.0
    %543 = vmatprep.subr.mxu0 0.0
    %544 = vmatpush1.msra.mxu0 0.0
    %545 = vmatprep.subr.mxu0 0.0
    %546 = vmatpush1.msra.mxu0 0.0
    %547 = vmatprep.subr.mxu0 0.0
    %548 = vmatpush1.msra.mxu0 0.0
    %549 = vmatprep.mubr.f32.mxu0 0.0
    %550 = vmatmul.mubr.f32.gmra.mrb[0].mxu0 %v392
    %v551 = vpop.f32.mrb[0].mxu0
    %v552 = vadd.f32 0.0, %v551
    %v553 = vpop.f32.mrb[0].mxu0
    %v554 = vadd.f32 0.0, %v553
    %555 = vdwg.mxu0
    %556 = vmatprep.subr.mxu0 %v404
    %557 = vmatpush1.msra.mxu0 %v402
    %558 = vmatprep.subr.mxu0 0.0
    %559 = vmatpush1.msra.mxu0 0.0
    %560 = vmatprep.subr.mxu0 0.0
    %561 = vmatpush1.msra.mxu0 0.0
    %562 = vmatprep.subr.mxu0 0.0
    %563 = vmatpush1.msra.mxu0 0.0
    %564 = vmatprep.subr.mxu0 0.0
    %565 = vmatpush1.msra.mxu0 0.0
    %566 = vmatprep.subr.mxu0 0.0
    %567 = vmatpush1.msra.mxu0 0.0
    %568 = vmatprep.subr.mxu0 0.0
    %569 = vmatpush1.msra.mxu0 0.0
    %570 = vmatprep.subr.mxu0 0.0
    %571 = vmatpush1.msra.mxu0 0.0
    %572 = vmatprep.subr.mxu0 0.0
    %573 = vmatpush1.msra.mxu0 0.0
    %574 = vmatprep.subr.mxu0 0.0
    %575 = vmatpush1.msra.mxu0 0.0
    %576 = vmatprep.subr.mxu0 0.0
    %577 = vmatpush1.msra.mxu0 0.0
    %578 = vmatprep.subr.mxu0 0.0
    %579 = vmatpush1.msra.mxu0 0.0
    %580 = vmatprep.subr.mxu0 0.0
    %581 = vmatpush1.msra.mxu0 0.0
    %582 = vmatprep.subr.mxu0 0.0
    %583 = vmatpush1.msra.mxu0 0.0
    %584 = vmatprep.subr.mxu0 0.0
    %585 = vmatpush1.msra.mxu0 0.0
    %586 = vmatprep.subr.mxu0 0.0
    %587 = vmatpush1.msra.mxu0 0.0
    %588 = vmatprep.subr.mxu0 0.0
    %589 = vmatpush1.msra.mxu0 0.0
    %590 = vmatprep.subr.mxu0 0.0
    %591 = vmatpush1.msra.mxu0 0.0
    %592 = vmatprep.subr.mxu0 0.0
    %593 = vmatpush1.msra.mxu0 0.0
    %594 = vmatprep.subr.mxu0 0.0
    %595 = vmatpush1.msra.mxu0 0.0
    %596 = vmatprep.subr.mxu0 0.0
    %597 = vmatpush1.msra.mxu0 0.0
    %598 = vmatprep.subr.mxu0 0.0
    %599 = vmatpush1.msra.mxu0 0.0
    %600 = vmatprep.subr.mxu0 0.0
    %601 = vmatpush1.msra.mxu0 0.0
    %602 = vmatprep.subr.mxu0 0.0
    %603 = vmatpush1.msra.mxu0 0.0
    %604 = vmatprep.subr.mxu0 0.0
    %605 = vmatpush1.msra.mxu0 0.0
    %606 = vmatprep.subr.mxu0 0.0
    %607 = vmatpush1.msra.mxu0 0.0
    %608 = vmatprep.subr.mxu0 0.0
    %609 = vmatpush1.msra.mxu0 0.0
    %610 = vmatprep.subr.mxu0 0.0
    %611 = vmatpush1.msra.mxu0 0.0
    %612 = vmatprep.subr.mxu0 0.0
    %613 = vmatpush1.msra.mxu0 0.0
    %614 = vmatprep.subr.mxu0 0.0
    %615 = vmatpush1.msra.mxu0 0.0
    %616 = vmatprep.subr.mxu0 0.0
    %617 = vmatpush1.msra.mxu0 0.0
    %618 = vmatprep.subr.mxu0 0.0
    %619 = vmatpush1.msra.mxu0 0.0
    %620 = vmatprep.mubr.f32.mxu0 0.0
    %621 = vmatmul.mubr.f32.gmra.mrb[0].mxu0 %v392
    %v622 = vpop.f32.mrb[0].mxu0
    %v623 = vadd.f32 0.0, %v622
    %v624 = vpop.f32.mrb[0].mxu0
    %v625 = vadd.f32 0.0, %v624
    %626 = vdwg.mxu0
    %627 = vmatprep.subr.mxu0 %v408
    %628 = vmatpush1.msra.mxu0 %v406
    %629 = vmatprep.subr.mxu0 0.0
    %630 = vmatpush1.msra.mxu0 0.0
    %631 = vmatprep.subr.mxu0 0.0
    %632 = vmatpush1.msra.mxu0 0.0
    %633 = vmatprep.subr.mxu0 0.0
    %634 = vmatpush1.msra.mxu0 0.0
    %635 = vmatprep.subr.mxu0 0.0
    %636 = vmatpush1.msra.mxu0 0.0
    %637 = vmatprep.subr.mxu0 0.0
    %638 = vmatpush1.msra.mxu0 0.0
    %639 = vmatprep.subr.mxu0 0.0
    %640 = vmatpush1.msra.mxu0 0.0
    %641 = vmatprep.subr.mxu0 0.0
    %642 = vmatpush1.msra.mxu0 0.0
    %643 = vmatprep.subr.mxu0 0.0
    %644 = vmatpush1.msra.mxu0 0.0
    %645 = vmatprep.subr.mxu0 0.0
    %646 = vmatpush1.msra.mxu0 0.0
    %647 = vmatprep.subr.mxu0 0.0
    %648 = vmatpush1.msra.mxu0 0.0
    %649 = vmatprep.subr.mxu0 0.0
    %650 = vmatpush1.msra.mxu0 0.0
    %651 = vmatprep.subr.mxu0 0.0
    %652 = vmatpush1.msra.mxu0 0.0
    %653 = vmatprep.subr.mxu0 0.0
    %654 = vmatpush1.msra.mxu0 0.0
    %655 = vmatprep.subr.mxu0 0.0
    %656 = vmatpush1.msra.mxu0 0.0
    %657 = vmatprep.subr.mxu0 0.0
    %658 = vmatpush1.msra.mxu0 0.0
    %659 = vmatprep.subr.mxu0 0.0
    %660 = vmatpush1.msra.mxu0 0.0
    %661 = vmatprep.subr.mxu0 0.0
    %662 = vmatpush1.msra.mxu0 0.0
    %663 = vmatprep.subr.mxu0 0.0
    %664 = vmatpush1.msra.mxu0 0.0
    %665 = vmatprep.subr.mxu0 0.0
    %666 = vmatpush1.msra.mxu0 0.0
    %667 = vmatprep.subr.mxu0 0.0
    %668 = vmatpush1.msra.mxu0 0.0
    %669 = vmatprep.subr.mxu0 0.0
    %670 = vmatpush1.msra.mxu0 0.0
    %671 = vmatprep.subr.mxu0 0.0
    %672 = vmatpush1.msra.mxu0 0.0
    %673 = vmatprep.subr.mxu0 0.0
    %674 = vmatpush1.msra.mxu0 0.0
    %675 = vmatprep.subr.mxu0 0.0
    %676 = vmatpush1.msra.mxu0 0.0
    %677 = vmatprep.subr.mxu0 0.0
    %678 = vmatpush1.msra.mxu0 0.0
    %679 = vmatprep.subr.mxu0 0.0
    %680 = vmatpush1.msra.mxu0 0.0
    %681 = vmatprep.subr.mxu0 0.0
    %682 = vmatpush1.msra.mxu0 0.0
    %683 = vmatprep.subr.mxu0 0.0
    %684 = vmatpush1.msra.mxu0 0.0
    %685 = vmatprep.subr.mxu0 0.0
    %686 = vmatpush1.msra.mxu0 0.0
    %687 = vmatprep.subr.mxu0 0.0
    %688 = vmatpush1.msra.mxu0 0.0
    %689 = vmatprep.subr.mxu0 0.0
    %690 = vmatpush1.msra.mxu0 0.0
    %691 = vmatprep.mubr.f32.mxu0 0.0
    %692 = vmatmul.mubr.f32.gmra.mrb[0].mxu0 %v392
    %v693 = vpop.f32.mrb[0].mxu0
    %v694 = vadd.f32 0.0, %v693
    %v695 = vpop.f32.mrb[0].mxu0
    %v696 = vadd.f32 0.0, %v695
    %697 = vdwg.mxu0
    %698 = vmatprep.subr.mxu0 %v412
    %699 = vmatpush1.msra.mxu0 %v410
    %700 = vmatprep.subr.mxu0 0.0
    %701 = vmatpush1.msra.mxu0 0.0
    %702 = vmatprep.subr.mxu0 0.0
    %703 = vmatpush1.msra.mxu0 0.0
    %704 = vmatprep.subr.mxu0 0.0
    %705 = vmatpush1.msra.mxu0 0.0
    %706 = vmatprep.subr.mxu0 0.0
    %707 = vmatpush1.msra.mxu0 0.0
    %708 = vmatprep.subr.mxu0 0.0
    %709 = vmatpush1.msra.mxu0 0.0
    %710 = vmatprep.subr.mxu0 0.0
    %711 = vmatpush1.msra.mxu0 0.0
    %712 = vmatprep.subr.mxu0 0.0
    %713 = vmatpush1.msra.mxu0 0.0
    %714 = vmatprep.subr.mxu0 0.0
    %715 = vmatpush1.msra.mxu0 0.0
    %716 = vmatprep.subr.mxu0 0.0
    %717 = vmatpush1.msra.mxu0 0.0
    %718 = vmatprep.subr.mxu0 0.0
    %719 = vmatpush1.msra.mxu0 0.0
    %720 = vmatprep.subr.mxu0 0.0
    %721 = vmatpush1.msra.mxu0 0.0
    %722 = vmatprep.subr.mxu0 0.0
    %723 = vmatpush1.msra.mxu0 0.0
    %724 = vmatprep.subr.mxu0 0.0
    %725 = vmatpush1.msra.mxu0 0.0
    %726 = vmatprep.subr.mxu0 0.0
    %727 = vmatpush1.msra.mxu0 0.0
    %728 = vmatprep.subr.mxu0 0.0
    %729 = vmatpush1.msra.mxu0 0.0
    %730 = vmatprep.subr.mxu0 0.0
    %731 = vmatpush1.msra.mxu0 0.0
    %732 = vmatprep.subr.mxu0 0.0
    %733 = vmatpush1.msra.mxu0 0.0
    %734 = vmatprep.subr.mxu0 0.0
    %735 = vmatpush1.msra.mxu0 0.0
    %736 = vmatprep.subr.mxu0 0.0
    %737 = vmatpush1.msra.mxu0 0.0
    %738 = vmatprep.subr.mxu0 0.0
    %739 = vmatpush1.msra.mxu0 0.0
    %740 = vmatprep.subr.mxu0 0.0
    %741 = vmatpush1.msra.mxu0 0.0
    %742 = vmatprep.subr.mxu0 0.0
    %743 = vmatpush1.msra.mxu0 0.0
    %744 = vmatprep.subr.mxu0 0.0
    %745 = vmatpush1.msra.mxu0 0.0
    %746 = vmatprep.subr.mxu0 0.0
    %747 = vmatpush1.msra.mxu0 0.0
    %748 = vmatprep.subr.mxu0 0.0
    %749 = vmatpush1.msra.mxu0 0.0
    %750 = vmatprep.subr.mxu0 0.0
    %751 = vmatpush1.msra.mxu0 0.0
    %752 = vmatprep.subr.mxu0 0.0
    %753 = vmatpush1.msra.mxu0 0.0
    %754 = vmatprep.subr.mxu0 0.0
    %755 = vmatpush1.msra.mxu0 0.0
    %756 = vmatprep.subr.mxu0 0.0
    %757 = vmatpush1.msra.mxu0 0.0
    %758 = vmatprep.subr.mxu0 0.0
    %759 = vmatpush1.msra.mxu0 0.0
    %760 = vmatprep.subr.mxu0 0.0
    %761 = vmatpush1.msra.mxu0 0.0
    %762 = vmatprep.mubr.f32.mxu0 0.0
    %763 = vmatmul.mubr.f32.gmra.mrb[0].mxu0 %v392
    %v764 = vpop.f32.mrb[0].mxu0
    %v765 = vadd.f32 0.0, %v764
    %v766 = vpop.f32.mrb[0].mxu0
    %v767 = vadd.f32 0.0, %v766
    %768 = vdwg.mxu0
    %v769 = vadd.f32 %v310, %v481
    %v770 = vadd.f32 %v311, %v483
    %v771 = vadd.f32 %v312, %v552
    %v772 = vadd.f32 %v313, %v554
    %v773 = vadd.f32 %v314, %v623
    %v774 = vadd.f32 %v315, %v625
    %v775 = vadd.f32 %v316, %v694
    %v776 = vadd.f32 %v317, %v696
    %v777 = vadd.f32 %v318, %v765
    %v778 = vadd.f32 %v319, %v767
    %779 = vst [vmem:[#allocation2] sm:$0xff] %v769
    %780 = vst [vmem:[#allocation2 + $0x8] sm:$0xff] %v770
    %781 = vst [vmem:[#allocation2 + $0x10] sm:$0xff] %v771
    %782 = vst [vmem:[#allocation2 + $0x18] sm:$0xff] %v772
    %783 = vst [vmem:[#allocation2 + $0x20] sm:$0xff] %v773
    %784 = vst [vmem:[#allocation2 + $0x28] sm:$0xff] %v774
    %785 = vst [vmem:[#allocation2 + $0x30] sm:$0xff] %v775
    %786 = vst [vmem:[#allocation2 + $0x38] sm:$0xff] %v776
    %787 = vst [vmem:[#allocation2 + $0x40] sm:$0xff] %v777
    %788 = vst [vmem:[#allocation2 + $0x48] sm:$0xff] %v778
    // Predicated region
    $region130: #{tpu_custom_call.1} parent=1 // pred_check
      %p789 = pneg %p223
    $region131: #{tpu_custom_call.1} parent=1 // pred_check_branch
      %791 = sbr.rel (%p789) target = $region133
    $region132: #{tpu_custom_call.1} parent=1 // pred_region
      %v792 = vld [vmem:[#allocation2] sm:$0xff]
      %v793 = vld [vmem:[#allocation2 + $0x8] sm:$0xff]
      %v794 = vld [vmem:[#allocation2 + $0x10] sm:$0xff]
      %v795 = vld [vmem:[#allocation2 + $0x18] sm:$0xff]
      %v796 = vld [vmem:[#allocation2 + $0x20] sm:$0xff]
      %v797 = vld [vmem:[#allocation2 + $0x28] sm:$0xff]
      %v798 = vld [vmem:[#allocation2 + $0x30] sm:$0xff]
      %v799 = vld [vmem:[#allocation2 + $0x38] sm:$0xff]
      %v800 = vld [vmem:[#allocation2 + $0x40] sm:$0xff]
      %v801 = vld [vmem:[#allocation2 + $0x48] sm:$0xff]
      %v802 = vld [vmem:[#allocation7] sm:$0xff]
      %v803 = vld [vmem:[#allocation7 + $0x8] sm:$0x3]
      %v806 = vlaneseq
      %v807 = vshrl.u32 %v806, 7
      %v808 = vsub.s32 0, %v807
      %v809 = vrot.slane %v802, %v808
      %v810 = vlaneseq
      %v811 = vshrl.u32 %v810, 7
      %v812 = vsub.s32 1, %v811
      %v813 = vrot.slane %v802, %v812
      %v814 = vlaneseq
      %v815 = vshrl.u32 %v814, 7
      %v816 = vsub.s32 2, %v815
      %v817 = vrot.slane %v802, %v816
      %v818 = vlaneseq
      %v819 = vshrl.u32 %v818, 7
      %v820 = vsub.s32 3, %v819
      %v821 = vrot.slane %v802, %v820
      %v822 = vlaneseq
      %v823 = vshrl.u32 %v822, 7
      %v824 = vsub.s32 4, %v823
      %v825 = vrot.slane %v802, %v824
      %v826 = vlaneseq
      %v827 = vshrl.u32 %v826, 7
      %v828 = vsub.s32 5, %v827
      %v829 = vrot.slane %v802, %v828
      %v830 = vlaneseq
      %v831 = vshrl.u32 %v830, 7
      %v832 = vsub.s32 6, %v831
      %v833 = vrot.slane %v802, %v832
      %v834 = vlaneseq
      %v835 = vshrl.u32 %v834, 7
      %v836 = vsub.s32 7, %v835
      %v837 = vrot.slane %v802, %v836
      %v838 = vlaneseq
      %v839 = vshrl.u32 %v838, 7
      %v840 = vsub.s32 0, %v839
      %v841 = vrot.slane %v803, %v840
      %v842 = vlaneseq
      %v843 = vshrl.u32 %v842, 7
      %v844 = vsub.s32 1, %v843
      %v845 = vrot.slane %v803, %v844
      %v856 = vadd.f32 %v792, %v809
      %v857 = vadd.f32 %v793, %v813
      %v858 = vadd.f32 %v794, %v817
      %v859 = vadd.f32 %v795, %v821
      %v860 = vadd.f32 %v796, %v825
      %v861 = vadd.f32 %v797, %v829
      %v862 = vadd.f32 %v798, %v833
      %v863 = vadd.f32 %v799, %v837
      %v864 = vadd.f32 %v800, %v841
      %v865 = vadd.f32 %v801, %v845
      %v866 = vld [vmem:[#allocation8] sm:$0xff]
      %v867 = vld [vmem:[#allocation8 + $0x8] sm:$0xff]
      %v868 = vld [vmem:[#allocation8 + $0x10] sm:$0xff]
      %v869 = vld [vmem:[#allocation8 + $0x18] sm:$0xff]
      %v870 = vld [vmem:[#allocation8 + $0x20] sm:$0xff]
      %v871 = vld [vmem:[#allocation8 + $0x28] sm:$0xff]
      %v872 = vld [vmem:[#allocation8 + $0x30] sm:$0xff]
      %v873 = vld [vmem:[#allocation8 + $0x38] sm:$0xff]
      %v874 = vld [vmem:[#allocation8 + $0x40] sm:$0xff]
      %v875 = vld [vmem:[#allocation8 + $0x48] sm:$0xff]
      %v876 = vld [vmem:[#allocation8 + $0x50] sm:$0xff]
      %v877 = vld [vmem:[#allocation8 + $0x58] sm:$0xff]
      %v878 = vld [vmem:[#allocation8 + $0x60] sm:$0xff]
      %v879 = vld [vmem:[#allocation8 + $0x68] sm:$0xff]
      %v880 = vld [vmem:[#allocation8 + $0x70] sm:$0xff]
      %v881 = vld [vmem:[#allocation8 + $0x78] sm:$0xff]
      %v882 = vld [vmem:[#allocation8 + $0x80] sm:$0xff]
      %v883 = vld [vmem:[#allocation8 + $0x88] sm:$0xff]
      %v884 = vld [vmem:[#allocation8 + $0x90] sm:$0xff]
      %v885 = vld [vmem:[#allocation8 + $0x98] sm:$0xff]
      %v886 = vld [vmem:[#allocation8 + $0xa0] sm:$0xff]
      %v887 = vld [vmem:[#allocation8 + $0xa8] sm:$0xff]
      %v888 = vld [vmem:[#allocation8 + $0xb0] sm:$0xff]
      %v889 = vld [vmem:[#allocation8 + $0xb8] sm:$0xff]
      %v890 = vld [vmem:[#allocation8 + $0xc0] sm:$0xff]
      %v891 = vld [vmem:[#allocation8 + $0xc8] sm:$0xff]
      %v892 = vld [vmem:[#allocation8 + $0xd0] sm:$0xff]
      %v893 = vld [vmem:[#allocation8 + $0xd8] sm:$0xff]
      %v894 = vld [vmem:[#allocation8 + $0xe0] sm:$0xff]
      %v895 = vld [vmem:[#allocation8 + $0xe8] sm:$0xff]
      %v896 = vld [vmem:[#allocation8 + $0xf0] sm:$0xff]
      %v897 = vld [vmem:[#allocation8 + $0xf8] sm:$0xff]
      %v898 = vld [vmem:[#allocation8 + $0x100] sm:$0xff]
      %v899 = vld [vmem:[#allocation8 + $0x108] sm:$0xff]
      %v900 = vld [vmem:[#allocation8 + $0x110] sm:$0xff]
      %v901 = vld [vmem:[#allocation8 + $0x118] sm:$0xff]
      %v902 = vld [vmem:[#allocation8 + $0x120] sm:$0xff]
      %v903 = vld [vmem:[#allocation8 + $0x128] sm:$0xff]
      %v904 = vld [vmem:[#allocation8 + $0x130] sm:$0xff]
      %v905 = vld [vmem:[#allocation8 + $0x138] sm:$0xff]
      %v906 = vld [vmem:[#allocation8 + $0x140] sm:$0xff]
      %v907 = vld [vmem:[#allocation8 + $0x148] sm:$0xff]
      %v908 = vld [vmem:[#allocation8 + $0x150] sm:$0xff]
      %v909 = vld [vmem:[#allocation8 + $0x158] sm:$0xff]
      %v910 = vld [vmem:[#allocation8 + $0x160] sm:$0xff]
      %v911 = vld [vmem:[#allocation8 + $0x168] sm:$0xff]
      %v912 = vld [vmem:[#allocation8 + $0x170] sm:$0xff]
      %v913 = vld [vmem:[#allocation8 + $0x178] sm:$0xff]
      %v914 = vld [vmem:[#allocation8 + $0x180] sm:$0xff]
      %v915 = vld [vmem:[#allocation8 + $0x188] sm:$0xff]
      %v916 = vld [vmem:[#allocation8 + $0x190] sm:$0xff]
      %v917 = vld [vmem:[#allocation8 + $0x198] sm:$0xff]
      %v918 = vld [vmem:[#allocation8 + $0x1a0] sm:$0xff]
      %v919 = vld [vmem:[#allocation8 + $0x1a8] sm:$0xff]
      %v920 = vld [vmem:[#allocation8 + $0x1b0] sm:$0xff]
      %v921 = vld [vmem:[#allocation8 + $0x1b8] sm:$0xff]
      %v922 = vld [vmem:[#allocation8 + $0x1c0] sm:$0xff]
      %v923 = vld [vmem:[#allocation8 + $0x1c8] sm:$0xff]
      %v924 = vld [vmem:[#allocation8 + $0x1d0] sm:$0xff]
      %v925 = vld [vmem:[#allocation8 + $0x1d8] sm:$0xff]
      %v926 = vld [vmem:[#allocation8 + $0x1e0] sm:$0xff]
      %v927 = vld [vmem:[#allocation8 + $0x1e8] sm:$0xff]
      %v928 = vld [vmem:[#allocation8 + $0x1f0] sm:$0xff]
      %v929 = vld [vmem:[#allocation8 + $0x1f8] sm:$0xff]
      %v930 = vld [vmem:[#allocation8 + $0x200] sm:$0xff]
      %v931 = vld [vmem:[#allocation8 + $0x208] sm:$0xff]
      %v932 = vld [vmem:[#allocation8 + $0x210] sm:$0xff]
      %v933 = vld [vmem:[#allocation8 + $0x218] sm:$0xff]
      %v934 = vld [vmem:[#allocation8 + $0x220] sm:$0xff]
      %v935 = vld [vmem:[#allocation8 + $0x228] sm:$0xff]
      %v936 = vld [vmem:[#allocation8 + $0x230] sm:$0xff]
      %v937 = vld [vmem:[#allocation8 + $0x238] sm:$0xff]
      %v938 = vld [vmem:[#allocation8 + $0x240] sm:$0xff]
      %v939 = vld [vmem:[#allocation8 + $0x248] sm:$0xff]
      %v940 = vld [vmem:[#allocation8 + $0x250] sm:$0xff]
      %v941 = vld [vmem:[#allocation8 + $0x258] sm:$0xff]
      %v942 = vld [vmem:[#allocation8 + $0x260] sm:$0xff]
      %v943 = vld [vmem:[#allocation8 + $0x268] sm:$0xff]
      %v944 = vld [vmem:[#allocation8 + $0x270] sm:$0xff]
      %v945 = vld [vmem:[#allocation8 + $0x278] sm:$0xff]
      %v946 = vld [vmem:[#allocation8 + $0x280] sm:$0xff]
      %v947 = vld [vmem:[#allocation8 + $0x288] sm:$0xff]
      %v948 = vld [vmem:[#allocation8 + $0x290] sm:$0xff]
      %v949 = vld [vmem:[#allocation8 + $0x298] sm:$0xff]
      %v950 = vld [vmem:[#allocation8 + $0x2a0] sm:$0xff]
      %v951 = vld [vmem:[#allocation8 + $0x2a8] sm:$0xff]
      %v952 = vld [vmem:[#allocation8 + $0x2b0] sm:$0xff]
      %v953 = vld [vmem:[#allocation8 + $0x2b8] sm:$0xff]
      %v954 = vld [vmem:[#allocation8 + $0x2c0] sm:$0xff]
      %v955 = vld [vmem:[#allocation8 + $0x2c8] sm:$0xff]
      %v956 = vld [vmem:[#allocation8 + $0x2d0] sm:$0xff]
      %v957 = vld [vmem:[#allocation8 + $0x2d8] sm:$0xff]
      %v958 = vld [vmem:[#allocation8 + $0x2e0] sm:$0xff]
      %v959 = vld [vmem:[#allocation8 + $0x2e8] sm:$0xff]
      %v960 = vld [vmem:[#allocation8 + $0x2f0] sm:$0xff]
      %v961 = vld [vmem:[#allocation8 + $0x2f8] sm:$0xff]
      %v962 = vld [vmem:[#allocation8 + $0x300] sm:$0xff]
      %v963 = vld [vmem:[#allocation8 + $0x308] sm:$0xff]
      %v964 = vld [vmem:[#allocation8 + $0x310] sm:$0xff]
      %v965 = vld [vmem:[#allocation8 + $0x318] sm:$0xff]
      %v966 = vld [vmem:[#allocation8 + $0x320] sm:$0xff]
      %v967 = vld [vmem:[#allocation8 + $0x328] sm:$0xff]
      %v968 = vld [vmem:[#allocation8 + $0x330] sm:$0xff]
      %v969 = vld [vmem:[#allocation8 + $0x338] sm:$0xff]
      %v970 = vld [vmem:[#allocation8 + $0x340] sm:$0xff]
      %v971 = vld [vmem:[#allocation8 + $0x348] sm:$0xff]
      %v972 = vld [vmem:[#allocation8 + $0x350] sm:$0xff]
      %v973 = vld [vmem:[#allocation8 + $0x358] sm:$0xff]
      %v974 = vld [vmem:[#allocation8 + $0x360] sm:$0xff]
      %v975 = vld [vmem:[#allocation8 + $0x368] sm:$0xff]
      %v976 = vld [vmem:[#allocation8 + $0x370] sm:$0xff]
      %v977 = vld [vmem:[#allocation8 + $0x378] sm:$0xff]
      %v978 = vld [vmem:[#allocation8 + $0x380] sm:$0xff]
      %v979 = vld [vmem:[#allocation8 + $0x388] sm:$0xff]
      %v980 = vld [vmem:[#allocation8 + $0x390] sm:$0xff]
      %v981 = vld [vmem:[#allocation8 + $0x398] sm:$0xff]
      %v982 = vld [vmem:[#allocation8 + $0x3a0] sm:$0xff]
      %v983 = vld [vmem:[#allocation8 + $0x3a8] sm:$0xff]
      %v984 = vld [vmem:[#allocation8 + $0x3b0] sm:$0xff]
      %v985 = vld [vmem:[#allocation8 + $0x3b8] sm:$0xff]
      %v986 = vld [vmem:[#allocation8 + $0x3c0] sm:$0xff]
      %v987 = vld [vmem:[#allocation8 + $0x3c8] sm:$0xff]
      %v988 = vld [vmem:[#allocation8 + $0x3d0] sm:$0xff]
      %v989 = vld [vmem:[#allocation8 + $0x3d8] sm:$0xff]
      %v990 = vld [vmem:[#allocation8 + $0x3e0] sm:$0xff]
      %v991 = vld [vmem:[#allocation8 + $0x3e8] sm:$0xff]
      %v992 = vld [vmem:[#allocation8 + $0x3f0] sm:$0xff]
      %v993 = vld [vmem:[#allocation8 + $0x3f8] sm:$0xff]
      %v994 = vld [vmem:[#allocation8 + $0x400] sm:$0xff]
      %v995 = vld [vmem:[#allocation8 + $0x408] sm:$0xff]
      %v996 = vld [vmem:[#allocation8 + $0x410] sm:$0xff]
      %v997 = vld [vmem:[#allocation8 + $0x418] sm:$0xff]
      %v998 = vld [vmem:[#allocation8 + $0x420] sm:$0xff]
      %v999 = vld [vmem:[#allocation8 + $0x428] sm:$0xff]
      %v1000 = vld [vmem:[#allocation8 + $0x430] sm:$0xff]
      %v1001 = vld [vmem:[#allocation8 + $0x438] sm:$0xff]
      %v1002 = vld [vmem:[#allocation8 + $0x440] sm:$0xff]
      %v1003 = vld [vmem:[#allocation8 + $0x448] sm:$0xff]
      %v1004 = vld [vmem:[#allocation8 + $0x450] sm:$0xff]
      %v1005 = vld [vmem:[#allocation8 + $0x458] sm:$0xff]
      %v1006 = vld [vmem:[#allocation8 + $0x460] sm:$0xff]
      %v1007 = vld [vmem:[#allocation8 + $0x468] sm:$0xff]
      %v1008 = vld [vmem:[#allocation8 + $0x470] sm:$0xff]
      %v1009 = vld [vmem:[#allocation8 + $0x478] sm:$0xff]
      %v1010 = vld [vmem:[#allocation8 + $0x480] sm:$0xff]
      %v1011 = vld [vmem:[#allocation8 + $0x488] sm:$0xff]
      %v1012 = vld [vmem:[#allocation8 + $0x490] sm:$0xff]
      %v1013 = vld [vmem:[#allocation8 + $0x498] sm:$0xff]
      %v1014 = vld [vmem:[#allocation8 + $0x4a0] sm:$0xff]
      %v1015 = vld [vmem:[#allocation8 + $0x4a8] sm:$0xff]
      %v1016 = vld [vmem:[#allocation8 + $0x4b0] sm:$0xff]
      %v1017 = vld [vmem:[#allocation8 + $0x4b8] sm:$0xff]
      %v1018 = vld [vmem:[#allocation8 + $0x4c0] sm:$0xff]
      %v1019 = vld [vmem:[#allocation8 + $0x4c8] sm:$0xff]
      %v1020 = vld [vmem:[#allocation8 + $0x4d0] sm:$0xff]
      %v1021 = vld [vmem:[#allocation8 + $0x4d8] sm:$0xff]
      %v1022 = vld [vmem:[#allocation8 + $0x4e0] sm:$0xff]
      %v1023 = vld [vmem:[#allocation8 + $0x4e8] sm:$0xff]
      %v1024 = vld [vmem:[#allocation8 + $0x4f0] sm:$0xff]
      %v1025 = vld [vmem:[#allocation8 + $0x4f8] sm:$0xff]
      %v1026 = vld [vmem:[#allocation8 + $0x500] sm:$0xff]
      %v1027 = vld [vmem:[#allocation8 + $0x508] sm:$0xff]
      %v1028 = vld [vmem:[#allocation8 + $0x510] sm:$0xff]
      %v1029 = vld [vmem:[#allocation8 + $0x518] sm:$0xff]
      %v1030 = vld [vmem:[#allocation8 + $0x520] sm:$0xff]
      %v1031 = vld [vmem:[#allocation8 + $0x528] sm:$0xff]
      %v1032 = vld [vmem:[#allocation8 + $0x530] sm:$0xff]
      %v1033 = vld [vmem:[#allocation8 + $0x538] sm:$0xff]
      %v1034 = vld [vmem:[#allocation8 + $0x540] sm:$0xff]
      %v1035 = vld [vmem:[#allocation8 + $0x548] sm:$0xff]
      %v1036 = vld [vmem:[#allocation8 + $0x550] sm:$0xff]
      %v1037 = vld [vmem:[#allocation8 + $0x558] sm:$0xff]
      %v1038 = vld [vmem:[#allocation8 + $0x560] sm:$0xff]
      %v1039 = vld [vmem:[#allocation8 + $0x568] sm:$0xff]
      %v1040 = vld [vmem:[#allocation8 + $0x570] sm:$0xff]
      %v1041 = vld [vmem:[#allocation8 + $0x578] sm:$0xff]
      %v1042 = vld [vmem:[#allocation8 + $0x580] sm:$0xff]
      %v1043 = vld [vmem:[#allocation8 + $0x588] sm:$0xff]
      %v1044 = vld [vmem:[#allocation8 + $0x590] sm:$0xff]
      %v1045 = vld [vmem:[#allocation8 + $0x598] sm:$0xff]
      %v1046 = vld [vmem:[#allocation8 + $0x5a0] sm:$0xff]
      %v1047 = vld [vmem:[#allocation8 + $0x5a8] sm:$0xff]
      %v1048 = vld [vmem:[#allocation8 + $0x5b0] sm:$0xff]
      %v1049 = vld [vmem:[#allocation8 + $0x5b8] sm:$0xff]
      %v1050 = vld [vmem:[#allocation8 + $0x5c0] sm:$0xff]
      %v1051 = vld [vmem:[#allocation8 + $0x5c8] sm:$0xff]
      %v1052 = vld [vmem:[#allocation8 + $0x5d0] sm:$0xff]
      %v1053 = vld [vmem:[#allocation8 + $0x5d8] sm:$0xff]
      %v1054 = vld [vmem:[#allocation8 + $0x5e0] sm:$0xff]
      %v1055 = vld [vmem:[#allocation8 + $0x5e8] sm:$0xff]
      %v1056 = vld [vmem:[#allocation8 + $0x5f0] sm:$0xff]
      %v1057 = vld [vmem:[#allocation8 + $0x5f8] sm:$0xff]
      %v1058 = vld [vmem:[#allocation8 + $0x600] sm:$0xff]
      %v1059 = vld [vmem:[#allocation8 + $0x608] sm:$0xff]
      %v1060 = vld [vmem:[#allocation8 + $0x610] sm:$0xff]
      %v1061 = vld [vmem:[#allocation8 + $0x618] sm:$0xff]
      %v1062 = vld [vmem:[#allocation8 + $0x620] sm:$0xff]
      %v1063 = vld [vmem:[#allocation8 + $0x628] sm:$0xff]
      %v1064 = vld [vmem:[#allocation8 + $0x630] sm:$0xff]
      %v1065 = vld [vmem:[#allocation8 + $0x638] sm:$0xff]
      %v1066 = vld [vmem:[#allocation8 + $0x640] sm:$0xff]
      %v1067 = vld [vmem:[#allocation8 + $0x648] sm:$0xff]
      %v1068 = vld [vmem:[#allocation8 + $0x650] sm:$0xff]
      %v1069 = vld [vmem:[#allocation8 + $0x658] sm:$0xff]
      %v1070 = vld [vmem:[#allocation8 + $0x660] sm:$0xff]
      %v1071 = vld [vmem:[#allocation8 + $0x668] sm:$0xff]
      %v1072 = vld [vmem:[#allocation8 + $0x670] sm:$0xff]
      %v1073 = vld [vmem:[#allocation8 + $0x678] sm:$0xff]
      %v1074 = vld [vmem:[#allocation8 + $0x680] sm:$0xff]
      %v1075 = vld [vmem:[#allocation8 + $0x688] sm:$0xff]
      %v1076 = vld [vmem:[#allocation8 + $0x690] sm:$0xff]
      %v1077 = vld [vmem:[#allocation8 + $0x698] sm:$0xff]
      %v1078 = vld [vmem:[#allocation8 + $0x6a0] sm:$0xff]
      %v1079 = vld [vmem:[#allocation8 + $0x6a8] sm:$0xff]
      %v1080 = vld [vmem:[#allocation8 + $0x6b0] sm:$0xff]
      %v1081 = vld [vmem:[#allocation8 + $0x6b8] sm:$0xff]
      %v1082 = vld [vmem:[#allocation8 + $0x6c0] sm:$0xff]
      %v1083 = vld [vmem:[#allocation8 + $0x6c8] sm:$0xff]
      %v1084 = vld [vmem:[#allocation8 + $0x6d0] sm:$0xff]
      %v1085 = vld [vmem:[#allocation8 + $0x6d8] sm:$0xff]
      %v1086 = vld [vmem:[#allocation8 + $0x6e0] sm:$0xff]
      %v1087 = vld [vmem:[#allocation8 + $0x6e8] sm:$0xff]
      %v1088 = vld [vmem:[#allocation8 + $0x6f0] sm:$0xff]
      %v1089 = vld [vmem:[#allocation8 + $0x6f8] sm:$0xff]
      %v1090 = vld [vmem:[#allocation8 + $0x700] sm:$0xff]
      %v1091 = vld [vmem:[#allocation8 + $0x708] sm:$0xff]
      %v1092 = vld [vmem:[#allocation8 + $0x710] sm:$0xff]
      %v1093 = vld [vmem:[#allocation8 + $0x718] sm:$0xff]
      %v1094 = vld [vmem:[#allocation8 + $0x720] sm:$0xff]
      %v1095 = vld [vmem:[#allocation8 + $0x728] sm:$0xff]
      %v1096 = vld [vmem:[#allocation8 + $0x730] sm:$0xff]
      %v1097 = vld [vmem:[#allocation8 + $0x738] sm:$0xff]
      %v1098 = vld [vmem:[#allocation8 + $0x740] sm:$0xff]
      %v1099 = vld [vmem:[#allocation8 + $0x748] sm:$0xff]
      %v1100 = vld [vmem:[#allocation8 + $0x750] sm:$0xff]
      %v1101 = vld [vmem:[#allocation8 + $0x758] sm:$0xff]
      %v1102 = vld [vmem:[#allocation8 + $0x760] sm:$0xff]
      %v1103 = vld [vmem:[#allocation8 + $0x768] sm:$0xff]
      %v1104 = vld [vmem:[#allocation8 + $0x770] sm:$0xff]
      %v1105 = vld [vmem:[#allocation8 + $0x778] sm:$0xff]
      %v1106 = vld [vmem:[#allocation8 + $0x780] sm:$0xff]
      %v1107 = vld [vmem:[#allocation8 + $0x788] sm:$0xff]
      %v1108 = vld [vmem:[#allocation8 + $0x790] sm:$0xff]
      %v1109 = vld [vmem:[#allocation8 + $0x798] sm:$0xff]
      %v1110 = vld [vmem:[#allocation8 + $0x7a0] sm:$0xff]
      %v1111 = vld [vmem:[#allocation8 + $0x7a8] sm:$0xff]
      %v1112 = vld [vmem:[#allocation8 + $0x7b0] sm:$0xff]
      %v1113 = vld [vmem:[#allocation8 + $0x7b8] sm:$0xff]
      %v1114 = vld [vmem:[#allocation8 + $0x7c0] sm:$0xff]
      %v1115 = vld [vmem:[#allocation8 + $0x7c8] sm:$0xff]
      %v1116 = vld [vmem:[#allocation8 + $0x7d0] sm:$0xff]
      %v1117 = vld [vmem:[#allocation8 + $0x7d8] sm:$0xff]
      %v1118 = vld [vmem:[#allocation8 + $0x7e0] sm:$0xff]
      %v1119 = vld [vmem:[#allocation8 + $0x7e8] sm:$0xff]
      %v1120 = vld [vmem:[#allocation8 + $0x7f0] sm:$0xff]
      %v1121 = vld [vmem:[#allocation8 + $0x7f8] sm:$0xff]
      %v1122 = vld [vmem:[#allocation8 + $0x800] sm:$0xff]
      %v1123 = vld [vmem:[#allocation8 + $0x808] sm:$0xff]
      %v1124 = vld [vmem:[#allocation8 + $0x810] sm:$0xff]
      %v1125 = vld [vmem:[#allocation8 + $0x818] sm:$0xff]
      %v1126 = vld [vmem:[#allocation8 + $0x820] sm:$0xff]
      %v1127 = vld [vmem:[#allocation8 + $0x828] sm:$0xff]
      %v1128 = vld [vmem:[#allocation8 + $0x830] sm:$0xff]
      %v1129 = vld [vmem:[#allocation8 + $0x838] sm:$0xff]
      %v1130 = vld [vmem:[#allocation8 + $0x840] sm:$0xff]
      %v1131 = vld [vmem:[#allocation8 + $0x848] sm:$0xff]
      %v1132 = vld [vmem:[#allocation8 + $0x850] sm:$0xff]
      %v1133 = vld [vmem:[#allocation8 + $0x858] sm:$0xff]
      %v1134 = vld [vmem:[#allocation8 + $0x860] sm:$0xff]
      %v1135 = vld [vmem:[#allocation8 + $0x868] sm:$0xff]
      %v1136 = vld [vmem:[#allocation8 + $0x870] sm:$0xff]
      %v1137 = vld [vmem:[#allocation8 + $0x878] sm:$0xff]
      %v1138 = vld [vmem:[#allocation8 + $0x880] sm:$0xff]
      %v1139 = vld [vmem:[#allocation8 + $0x888] sm:$0xff]
      %v1140 = vld [vmem:[#allocation8 + $0x890] sm:$0xff]
      %v1141 = vld [vmem:[#allocation8 + $0x898] sm:$0xff]
      %v1142 = vld [vmem:[#allocation8 + $0x8a0] sm:$0xff]
      %v1143 = vld [vmem:[#allocation8 + $0x8a8] sm:$0xff]
      %v1144 = vld [vmem:[#allocation8 + $0x8b0] sm:$0xff]
      %v1145 = vld [vmem:[#allocation8 + $0x8b8] sm:$0xff]
      %v1146 = vld [vmem:[#allocation8 + $0x8c0] sm:$0xff]
      %v1147 = vld [vmem:[#allocation8 + $0x8c8] sm:$0xff]
      %v1148 = vld [vmem:[#allocation8 + $0x8d0] sm:$0xff]
      %v1149 = vld [vmem:[#allocation8 + $0x8d8] sm:$0xff]
      %v1150 = vld [vmem:[#allocation8 + $0x8e0] sm:$0xff]
      %v1151 = vld [vmem:[#allocation8 + $0x8e8] sm:$0xff]
      %v1152 = vld [vmem:[#allocation8 + $0x8f0] sm:$0xff]
      %v1153 = vld [vmem:[#allocation8 + $0x8f8] sm:$0xff]
      %v1154 = vld [vmem:[#allocation8 + $0x900] sm:$0xff]
      %v1155 = vld [vmem:[#allocation8 + $0x908] sm:$0xff]
      %v1156 = vld [vmem:[#allocation8 + $0x910] sm:$0xff]
      %v1157 = vld [vmem:[#allocation8 + $0x918] sm:$0xff]
      %v1158 = vld [vmem:[#allocation8 + $0x920] sm:$0xff]
      %v1159 = vld [vmem:[#allocation8 + $0x928] sm:$0xff]
      %v1160 = vld [vmem:[#allocation8 + $0x930] sm:$0xff]
      %v1161 = vld [vmem:[#allocation8 + $0x938] sm:$0xff]
      %v1162 = vld [vmem:[#allocation8 + $0x940] sm:$0xff]
      %v1163 = vld [vmem:[#allocation8 + $0x948] sm:$0xff]
      %v1164 = vld [vmem:[#allocation8 + $0x950] sm:$0xff]
      %v1165 = vld [vmem:[#allocation8 + $0x958] sm:$0xff]
      %v1166 = vld [vmem:[#allocation8 + $0x960] sm:$0xff]
      %v1167 = vld [vmem:[#allocation8 + $0x968] sm:$0xff]
      %v1168 = vld [vmem:[#allocation8 + $0x970] sm:$0xff]
      %v1169 = vld [vmem:[#allocation8 + $0x978] sm:$0xff]
      %v1170 = vld [vmem:[#allocation8 + $0x980] sm:$0xff]
      %v1171 = vld [vmem:[#allocation8 + $0x988] sm:$0xff]
      %v1172 = vld [vmem:[#allocation8 + $0x990] sm:$0xff]
      %v1173 = vld [vmem:[#allocation8 + $0x998] sm:$0xff]
      %v1174 = vld [vmem:[#allocation8 + $0x9a0] sm:$0xff]
      %v1175 = vld [vmem:[#allocation8 + $0x9a8] sm:$0xff]
      %v1176 = vld [vmem:[#allocation8 + $0x9b0] sm:$0xff]
      %v1177 = vld [vmem:[#allocation8 + $0x9b8] sm:$0xff]
      %v1178 = vld [vmem:[#allocation8 + $0x9c0] sm:$0xff]
      %v1179 = vld [vmem:[#allocation8 + $0x9c8] sm:$0xff]
      %v1180 = vld [vmem:[#allocation8 + $0x9d0] sm:$0xff]
      %v1181 = vld [vmem:[#allocation8 + $0x9d8] sm:$0xff]
      %v1182 = vld [vmem:[#allocation8 + $0x9e0] sm:$0xff]
      %v1183 = vld [vmem:[#allocation8 + $0x9e8] sm:$0xff]
      %v1184 = vld [vmem:[#allocation8 + $0x9f0] sm:$0xff]
      %v1185 = vld [vmem:[#allocation8 + $0x9f8] sm:$0xff]
      %v1186 = vld [vmem:[#allocation8 + $0xa00] sm:$0xff]
      %v1187 = vld [vmem:[#allocation8 + $0xa08] sm:$0xff]
      %v1188 = vld [vmem:[#allocation8 + $0xa10] sm:$0xff]
      %v1189 = vld [vmem:[#allocation8 + $0xa18] sm:$0xff]
      %v1190 = vld [vmem:[#allocation8 + $0xa20] sm:$0xff]
      %v1191 = vld [vmem:[#allocation8 + $0xa28] sm:$0xff]
      %v1192 = vld [vmem:[#allocation8 + $0xa30] sm:$0xff]
      %v1193 = vld [vmem:[#allocation8 + $0xa38] sm:$0xff]
      %v1194 = vld [vmem:[#allocation8 + $0xa40] sm:$0xff]
      %v1195 = vld [vmem:[#allocation8 + $0xa48] sm:$0xff]
      %v1196 = vld [vmem:[#allocation8 + $0xa50] sm:$0xff]
      %v1197 = vld [vmem:[#allocation8 + $0xa58] sm:$0xff]
      %v1198 = vld [vmem:[#allocation8 + $0xa60] sm:$0xff]
      %v1199 = vld [vmem:[#allocation8 + $0xa68] sm:$0xff]
      %v1200 = vld [vmem:[#allocation8 + $0xa70] sm:$0xff]
      %v1201 = vld [vmem:[#allocation8 + $0xa78] sm:$0xff]
      %v1202 = vld [vmem:[#allocation8 + $0xa80] sm:$0xff]
      %v1203 = vld [vmem:[#allocation8 + $0xa88] sm:$0xff]
      %v1204 = vld [vmem:[#allocation8 + $0xa90] sm:$0xff]
      %v1205 = vld [vmem:[#allocation8 + $0xa98] sm:$0xff]
      %v1206 = vld [vmem:[#allocation8 + $0xaa0] sm:$0xff]
      %v1207 = vld [vmem:[#allocation8 + $0xaa8] sm:$0xff]
      %v1208 = vld [vmem:[#allocation8 + $0xab0] sm:$0xff]
      %v1209 = vld [vmem:[#allocation8 + $0xab8] sm:$0xff]
      %v1210 = vld [vmem:[#allocation8 + $0xac0] sm:$0xff]
      %v1211 = vld [vmem:[#allocation8 + $0xac8] sm:$0xff]
      %v1212 = vld [vmem:[#allocation8 + $0xad0] sm:$0xff]
      %v1213 = vld [vmem:[#allocation8 + $0xad8] sm:$0xff]
      %v1214 = vld [vmem:[#allocation8 + $0xae0] sm:$0xff]
      %v1215 = vld [vmem:[#allocation8 + $0xae8] sm:$0xff]
      %v1216 = vld [vmem:[#allocation8 + $0xaf0] sm:$0xff]
      %v1217 = vld [vmem:[#allocation8 + $0xaf8] sm:$0xff]
      %v1218 = vld [vmem:[#allocation8 + $0xb00] sm:$0xff]
      %v1219 = vld [vmem:[#allocation8 + $0xb08] sm:$0xff]
      %v1220 = vld [vmem:[#allocation8 + $0xb10] sm:$0xff]
      %v1221 = vld [vmem:[#allocation8 + $0xb18] sm:$0xff]
      %v1222 = vld [vmem:[#allocation8 + $0xb20] sm:$0xff]
      %v1223 = vld [vmem:[#allocation8 + $0xb28] sm:$0xff]
      %v1224 = vld [vmem:[#allocation8 + $0xb30] sm:$0xff]
      %v1225 = vld [vmem:[#allocation8 + $0xb38] sm:$0xff]
      %v1226 = vld [vmem:[#allocation8 + $0xb40] sm:$0xff]
      %v1227 = vld [vmem:[#allocation8 + $0xb48] sm:$0xff]
      %v1228 = vld [vmem:[#allocation8 + $0xb50] sm:$0xff]
      %v1229 = vld [vmem:[#allocation8 + $0xb58] sm:$0xff]
      %v1230 = vld [vmem:[#allocation8 + $0xb60] sm:$0xff]
      %v1231 = vld [vmem:[#allocation8 + $0xb68] sm:$0xff]
      %v1232 = vld [vmem:[#allocation8 + $0xb70] sm:$0xff]
      %v1233 = vld [vmem:[#allocation8 + $0xb78] sm:$0xff]
      %v1234 = vld [vmem:[#allocation8 + $0xb80] sm:$0xff]
      %v1235 = vld [vmem:[#allocation8 + $0xb88] sm:$0xff]
      %v1236 = vld [vmem:[#allocation8 + $0xb90] sm:$0xff]
      %v1237 = vld [vmem:[#allocation8 + $0xb98] sm:$0xff]
      %v1238 = vld [vmem:[#allocation8 + $0xba0] sm:$0xff]
      %v1239 = vld [vmem:[#allocation8 + $0xba8] sm:$0xff]
      %v1240 = vld [vmem:[#allocation8 + $0xbb0] sm:$0xff]
      %v1241 = vld [vmem:[#allocation8 + $0xbb8] sm:$0xff]
      %v1242 = vld [vmem:[#allocation8 + $0xbc0] sm:$0xff]
      %v1243 = vld [vmem:[#allocation8 + $0xbc8] sm:$0xff]
      %v1244 = vld [vmem:[#allocation8 + $0xbd0] sm:$0xff]
      %v1245 = vld [vmem:[#allocation8 + $0xbd8] sm:$0xff]
      %v1246 = vld [vmem:[#allocation8 + $0xbe0] sm:$0xff]
      %v1247 = vld [vmem:[#allocation8 + $0xbe8] sm:$0xff]
      %v1248 = vld [vmem:[#allocation8 + $0xbf0] sm:$0xff]
      %v1249 = vld [vmem:[#allocation8 + $0xbf8] sm:$0xff]
      %v1250 = vld [vmem:[#allocation8 + $0xc00] sm:$0xff]
      %v1251 = vld [vmem:[#allocation8 + $0xc08] sm:$0xff]
      %v1252 = vld [vmem:[#allocation8 + $0xc10] sm:$0xff]
      %v1253 = vld [vmem:[#allocation8 + $0xc18] sm:$0xff]
      %v1254 = vld [vmem:[#allocation8 + $0xc20] sm:$0xff]
      %v1255 = vld [vmem:[#allocation8 + $0xc28] sm:$0xff]
      %v1256 = vld [vmem:[#allocation8 + $0xc30] sm:$0xff]
      %v1257 = vld [vmem:[#allocation8 + $0xc38] sm:$0xff]
      %v1258 = vld [vmem:[#allocation8 + $0xc40] sm:$0xff]
      %v1259 = vld [vmem:[#allocation8 + $0xc48] sm:$0xff]
      %v1260 = vld [vmem:[#allocation8 + $0xc50] sm:$0xff]
      %v1261 = vld [vmem:[#allocation8 + $0xc58] sm:$0xff]
      %v1262 = vld [vmem:[#allocation8 + $0xc60] sm:$0xff]
      %v1263 = vld [vmem:[#allocation8 + $0xc68] sm:$0xff]
      %v1264 = vld [vmem:[#allocation8 + $0xc70] sm:$0xff]
      %v1265 = vld [vmem:[#allocation8 + $0xc78] sm:$0xff]
      %v1266 = vld [vmem:[#allocation8 + $0xc80] sm:$0xff]
      %v1267 = vld [vmem:[#allocation8 + $0xc88] sm:$0xff]
      %v1268 = vld [vmem:[#allocation8 + $0xc90] sm:$0xff]
      %v1269 = vld [vmem:[#allocation8 + $0xc98] sm:$0xff]
      %v1270 = vld [vmem:[#allocation8 + $0xca0] sm:$0xff]
      %v1271 = vld [vmem:[#allocation8 + $0xca8] sm:$0xff]
      %v1272 = vld [vmem:[#allocation8 + $0xcb0] sm:$0xff]
      %v1273 = vld [vmem:[#allocation8 + $0xcb8] sm:$0xff]
      %v1274 = vld [vmem:[#allocation8 + $0xcc0] sm:$0xff]
      %v1275 = vld [vmem:[#allocation8 + $0xcc8] sm:$0xff]
      %v1276 = vld [vmem:[#allocation8 + $0xcd0] sm:$0xff]
      %v1277 = vld [vmem:[#allocation8 + $0xcd8] sm:$0xff]
      %v1278 = vld [vmem:[#allocation8 + $0xce0] sm:$0xff]
      %v1279 = vld [vmem:[#allocation8 + $0xce8] sm:$0xff]
      %v1280 = vld [vmem:[#allocation8 + $0xcf0] sm:$0xff]
      %v1281 = vld [vmem:[#allocation8 + $0xcf8] sm:$0xff]
      %v1282 = vld [vmem:[#allocation8 + $0xd00] sm:$0xff]
      %v1283 = vld [vmem:[#allocation8 + $0xd08] sm:$0xff]
      %v1284 = vld [vmem:[#allocation8 + $0xd10] sm:$0xff]
      %v1285 = vld [vmem:[#allocation8 + $0xd18] sm:$0xff]
      %v1286 = vld [vmem:[#allocation8 + $0xd20] sm:$0xff]
      %v1287 = vld [vmem:[#allocation8 + $0xd28] sm:$0xff]
      %v1288 = vld [vmem:[#allocation8 + $0xd30] sm:$0xff]
      %v1289 = vld [vmem:[#allocation8 + $0xd38] sm:$0xff]
      %v1290 = vld [vmem:[#allocation8 + $0xd40] sm:$0xff]
      %v1291 = vld [vmem:[#allocation8 + $0xd48] sm:$0xff]
      %v1292 = vld [vmem:[#allocation8 + $0xd50] sm:$0xff]
      %v1293 = vld [vmem:[#allocation8 + $0xd58] sm:$0xff]
      %v1294 = vld [vmem:[#allocation8 + $0xd60] sm:$0xff]
      %v1295 = vld [vmem:[#allocation8 + $0xd68] sm:$0xff]
      %v1296 = vld [vmem:[#allocation8 + $0xd70] sm:$0xff]
      %v1297 = vld [vmem:[#allocation8 + $0xd78] sm:$0xff]
      %v1298 = vld [vmem:[#allocation8 + $0xd80] sm:$0xff]
      %v1299 = vld [vmem:[#allocation8 + $0xd88] sm:$0xff]
      %v1300 = vld [vmem:[#allocation8 + $0xd90] sm:$0xff]
      %v1301 = vld [vmem:[#allocation8 + $0xd98] sm:$0xff]
      %v1302 = vld [vmem:[#allocation8 + $0xda0] sm:$0xff]
      %v1303 = vld [vmem:[#allocation8 + $0xda8] sm:$0xff]
      %v1304 = vld [vmem:[#allocation8 + $0xdb0] sm:$0xff]
      %v1305 = vld [vmem:[#allocation8 + $0xdb8] sm:$0xff]
      %v1306 = vld [vmem:[#allocation8 + $0xdc0] sm:$0xff]
      %v1307 = vld [vmem:[#allocation8 + $0xdc8] sm:$0xff]
      %v1308 = vld [vmem:[#allocation8 + $0xdd0] sm:$0xff]
      %v1309 = vld [vmem:[#allocation8 + $0xdd8] sm:$0xff]
      %v1310 = vld [vmem:[#allocation8 + $0xde0] sm:$0xff]
      %v1311 = vld [vmem:[#allocation8 + $0xde8] sm:$0xff]
      %v1312 = vld [vmem:[#allocation8 + $0xdf0] sm:$0xff]
      %v1313 = vld [vmem:[#allocation8 + $0xdf8] sm:$0xff]
      %v1314 = vld [vmem:[#allocation8 + $0xe00] sm:$0xff]
      %v1315 = vld [vmem:[#allocation8 + $0xe08] sm:$0xff]
      %v1316 = vld [vmem:[#allocation8 + $0xe10] sm:$0xff]
      %v1317 = vld [vmem:[#allocation8 + $0xe18] sm:$0xff]
      %v1318 = vld [vmem:[#allocation8 + $0xe20] sm:$0xff]
      %v1319 = vld [vmem:[#allocation8 + $0xe28] sm:$0xff]
      %v1320 = vld [vmem:[#allocation8 + $0xe30] sm:$0xff]
      %v1321 = vld [vmem:[#allocation8 + $0xe38] sm:$0xff]
      %v1322 = vld [vmem:[#allocation8 + $0xe40] sm:$0xff]
      %v1323 = vld [vmem:[#allocation8 + $0xe48] sm:$0xff]
      %v1324 = vld [vmem:[#allocation8 + $0xe50] sm:$0xff]
      %v1325 = vld [vmem:[#allocation8 + $0xe58] sm:$0xff]
      %v1326 = vld [vmem:[#allocation8 + $0xe60] sm:$0xff]
      %v1327 = vld [vmem:[#allocation8 + $0xe68] sm:$0xff]
      %v1328 = vld [vmem:[#allocation8 + $0xe70] sm:$0xff]
      %v1329 = vld [vmem:[#allocation8 + $0xe78] sm:$0xff]
      %v1330 = vld [vmem:[#allocation8 + $0xe80] sm:$0xff]
      %v1331 = vld [vmem:[#allocation8 + $0xe88] sm:$0xff]
      %v1332 = vld [vmem:[#allocation8 + $0xe90] sm:$0xff]
      %v1333 = vld [vmem:[#allocation8 + $0xe98] sm:$0xff]
      %v1334 = vld [vmem:[#allocation8 + $0xea0] sm:$0xff]
      %v1335 = vld [vmem:[#allocation8 + $0xea8] sm:$0xff]
      %v1336 = vld [vmem:[#allocation8 + $0xeb0] sm:$0xff]
      %v1337 = vld [vmem:[#allocation8 + $0xeb8] sm:$0xff]
      %v1338 = vld [vmem:[#allocation8 + $0xec0] sm:$0xff]
      %v1339 = vld [vmem:[#allocation8 + $0xec8] sm:$0xff]
      %v1340 = vld [vmem:[#allocation8 + $0xed0] sm:$0xff]
      %v1341 = vld [vmem:[#allocation8 + $0xed8] sm:$0xff]
      %v1342 = vld [vmem:[#allocation8 + $0xee0] sm:$0xff]
      %v1343 = vld [vmem:[#allocation8 + $0xee8] sm:$0xff]
      %v1344 = vld [vmem:[#allocation8 + $0xef0] sm:$0xff]
      %v1345 = vld [vmem:[#allocation8 + $0xef8] sm:$0xff]
      %v1346 = vld [vmem:[#allocation8 + $0xf00] sm:$0xff]
      %v1347 = vld [vmem:[#allocation8 + $0xf08] sm:$0xff]
      %v1348 = vld [vmem:[#allocation8 + $0xf10] sm:$0xff]
      %v1349 = vld [vmem:[#allocation8 + $0xf18] sm:$0xff]
      %v1350 = vld [vmem:[#allocation8 + $0xf20] sm:$0xff]
      %v1351 = vld [vmem:[#allocation8 + $0xf28] sm:$0xff]
      %v1352 = vld [vmem:[#allocation8 + $0xf30] sm:$0xff]
      %v1353 = vld [vmem:[#allocation8 + $0xf38] sm:$0xff]
      %v1354 = vld [vmem:[#allocation8 + $0xf40] sm:$0xff]
      %v1355 = vld [vmem:[#allocation8 + $0xf48] sm:$0xff]
      %v1356 = vld [vmem:[#allocation8 + $0xf50] sm:$0xff]
      %v1357 = vld [vmem:[#allocation8 + $0xf58] sm:$0xff]
      %v1358 = vld [vmem:[#allocation8 + $0xf60] sm:$0xff]
      %v1359 = vld [vmem:[#allocation8 + $0xf68] sm:$0xff]
      %v1360 = vld [vmem:[#allocation8 + $0xf70] sm:$0xff]
      %v1361 = vld [vmem:[#allocation8 + $0xf78] sm:$0xff]
      %v1362 = vld [vmem:[#allocation8 + $0xf80] sm:$0xff]
      %v1363 = vld [vmem:[#allocation8 + $0xf88] sm:$0xff]
      %v1364 = vld [vmem:[#allocation8 + $0xf90] sm:$0xff]
      %v1365 = vld [vmem:[#allocation8 + $0xf98] sm:$0xff]
      %v1366 = vld [vmem:[#allocation8 + $0xfa0] sm:$0xff]
      %v1367 = vld [vmem:[#allocation8 + $0xfa8] sm:$0xff]
      %v1368 = vld [vmem:[#allocation8 + $0xfb0] sm:$0xff]
      %v1369 = vld [vmem:[#allocation8 + $0xfb8] sm:$0xff]
      %v1370 = vld [vmem:[#allocation8 + $0xfc0] sm:$0xff]
      %v1371 = vld [vmem:[#allocation8 + $0xfc8] sm:$0xff]
      %v1372 = vld [vmem:[#allocation8 + $0xfd0] sm:$0xff]
      %v1373 = vld [vmem:[#allocation8 + $0xfd8] sm:$0xff]
      %v1374 = vld [vmem:[#allocation8 + $0xfe0] sm:$0xff]
      %v1375 = vld [vmem:[#allocation8 + $0xfe8] sm:$0xff]
      %v1376 = vld [vmem:[#allocation8 + $0xff0] sm:$0xff]
      %v1377 = vld [vmem:[#allocation8 + $0xff8] sm:$0xff]
      %v1378 = vld [vmem:[#allocation8 + $0x1000] sm:$0xff]
      %v1379 = vld [vmem:[#allocation8 + $0x1008] sm:$0xff]
      %v1380 = vld [vmem:[#allocation8 + $0x1010] sm:$0xff]
      %v1381 = vld [vmem:[#allocation8 + $0x1018] sm:$0xff]
      %v1382 = vld [vmem:[#allocation8 + $0x1020] sm:$0xff]
      %v1383 = vld [vmem:[#allocation8 + $0x1028] sm:$0xff]
      %v1384 = vld [vmem:[#allocation8 + $0x1030] sm:$0xff]
      %v1385 = vld [vmem:[#allocation8 + $0x1038] sm:$0xff]
      %v1386 = vld [vmem:[#allocation8 + $0x1040] sm:$0xff]
      %v1387 = vld [vmem:[#allocation8 + $0x1048] sm:$0xff]
      %v1388 = vld [vmem:[#allocation8 + $0x1050] sm:$0xff]
      %v1389 = vld [vmem:[#allocation8 + $0x1058] sm:$0xff]
      %v1390 = vld [vmem:[#allocation8 + $0x1060] sm:$0xff]
      %v1391 = vld [vmem:[#allocation8 + $0x1068] sm:$0xff]
      %v1392 = vld [vmem:[#allocation8 + $0x1070] sm:$0xff]
      %v1393 = vld [vmem:[#allocation8 + $0x1078] sm:$0xff]
      %v1394 = vld [vmem:[#allocation8 + $0x1080] sm:$0xff]
      %v1395 = vld [vmem:[#allocation8 + $0x1088] sm:$0xff]
      %v1396 = vld [vmem:[#allocation8 + $0x1090] sm:$0xff]
      %v1397 = vld [vmem:[#allocation8 + $0x1098] sm:$0xff]
      %v1398 = vld [vmem:[#allocation8 + $0x10a0] sm:$0xff]
      %v1399 = vld [vmem:[#allocation8 + $0x10a8] sm:$0xff]
      %v1400 = vld [vmem:[#allocation8 + $0x10b0] sm:$0xff]
      %v1401 = vld [vmem:[#allocation8 + $0x10b8] sm:$0xff]
      %v1402 = vld [vmem:[#allocation8 + $0x10c0] sm:$0xff]
      %v1403 = vld [vmem:[#allocation8 + $0x10c8] sm:$0xff]
      %v1404 = vld [vmem:[#allocation8 + $0x10d0] sm:$0xff]
      %v1405 = vld [vmem:[#allocation8 + $0x10d8] sm:$0xff]
      %v1406 = vld [vmem:[#allocation8 + $0x10e0] sm:$0xff]
      %v1407 = vld [vmem:[#allocation8 + $0x10e8] sm:$0xff]
      %v1408 = vld [vmem:[#allocation8 + $0x10f0] sm:$0xff]
      %v1409 = vld [vmem:[#allocation8 + $0x10f8] sm:$0xff]
      %v1410 = vld [vmem:[#allocation8 + $0x1100] sm:$0xff]
      %v1411 = vld [vmem:[#allocation8 + $0x1108] sm:$0xff]
      %v1412 = vld [vmem:[#allocation8 + $0x1110] sm:$0xff]
      %v1413 = vld [vmem:[#allocation8 + $0x1118] sm:$0xff]
      %v1414 = vld [vmem:[#allocation8 + $0x1120] sm:$0xff]
      %v1415 = vld [vmem:[#allocation8 + $0x1128] sm:$0xff]
      %v1416 = vld [vmem:[#allocation8 + $0x1130] sm:$0xff]
      %v1417 = vld [vmem:[#allocation8 + $0x1138] sm:$0xff]
      %v1418 = vld [vmem:[#allocation8 + $0x1140] sm:$0xff]
      %v1419 = vld [vmem:[#allocation8 + $0x1148] sm:$0xff]
      %v1420 = vld [vmem:[#allocation8 + $0x1150] sm:$0xff]
      %v1421 = vld [vmem:[#allocation8 + $0x1158] sm:$0xff]
      %v1422 = vld [vmem:[#allocation8 + $0x1160] sm:$0xff]
      %v1423 = vld [vmem:[#allocation8 + $0x1168] sm:$0xff]
      %v1424 = vld [vmem:[#allocation8 + $0x1170] sm:$0xff]
      %v1425 = vld [vmem:[#allocation8 + $0x1178] sm:$0xff]
      %v1426 = vld [vmem:[#allocation8 + $0x1180] sm:$0xff]
      %v1427 = vld [vmem:[#allocation8 + $0x1188] sm:$0xff]
      %v1428 = vld [vmem:[#allocation8 + $0x1190] sm:$0xff]
      %v1429 = vld [vmem:[#allocation8 + $0x1198] sm:$0xff]
      %v1430 = vld [vmem:[#allocation8 + $0x11a0] sm:$0xff]
      %v1431 = vld [vmem:[#allocation8 + $0x11a8] sm:$0xff]
      %v1432 = vld [vmem:[#allocation8 + $0x11b0] sm:$0xff]
      %v1433 = vld [vmem:[#allocation8 + $0x11b8] sm:$0xff]
      %v1434 = vld [vmem:[#allocation8 + $0x11c0] sm:$0xff]
      %v1435 = vld [vmem:[#allocation8 + $0x11c8] sm:$0xff]
      %v1436 = vld [vmem:[#allocation8 + $0x11d0] sm:$0xff]
      %v1437 = vld [vmem:[#allocation8 + $0x11d8] sm:$0xff]
      %v1438 = vld [vmem:[#allocation8 + $0x11e0] sm:$0xff]
      %v1439 = vld [vmem:[#allocation8 + $0x11e8] sm:$0xff]
      %v1440 = vld [vmem:[#allocation8 + $0x11f0] sm:$0xff]
      %v1441 = vld [vmem:[#allocation8 + $0x11f8] sm:$0xff]
      %v1442 = vld [vmem:[#allocation8 + $0x1200] sm:$0xff]
      %v1443 = vld [vmem:[#allocation8 + $0x1208] sm:$0xff]
      %v1444 = vld [vmem:[#allocation8 + $0x1210] sm:$0xff]
      %v1445 = vld [vmem:[#allocation8 + $0x1218] sm:$0xff]
      %v1446 = vld [vmem:[#allocation8 + $0x1220] sm:$0xff]
      %v1447 = vld [vmem:[#allocation8 + $0x1228] sm:$0xff]
      %v1448 = vld [vmem:[#allocation8 + $0x1230] sm:$0xff]
      %v1449 = vld [vmem:[#allocation8 + $0x1238] sm:$0xff]
      %v1450 = vld [vmem:[#allocation8 + $0x1240] sm:$0xff]
      %v1451 = vld [vmem:[#allocation8 + $0x1248] sm:$0xff]
      %v1452 = vld [vmem:[#allocation8 + $0x1250] sm:$0xff]
      %v1453 = vld [vmem:[#allocation8 + $0x1258] sm:$0xff]
      %v1454 = vld [vmem:[#allocation8 + $0x1260] sm:$0xff]
      %v1455 = vld [vmem:[#allocation8 + $0x1268] sm:$0xff]
      %v1456 = vld [vmem:[#allocation8 + $0x1270] sm:$0xff]
      %v1457 = vld [vmem:[#allocation8 + $0x1278] sm:$0xff]
      %v1458 = vld [vmem:[#allocation8 + $0x1280] sm:$0xff]
      %v1459 = vld [vmem:[#allocation8 + $0x1288] sm:$0xff]
      %v1460 = vld [vmem:[#allocation8 + $0x1290] sm:$0xff]
      %v1461 = vld [vmem:[#allocation8 + $0x1298] sm:$0xff]
      %v1462 = vld [vmem:[#allocation8 + $0x12a0] sm:$0xff]
      %v1463 = vld [vmem:[#allocation8 + $0x12a8] sm:$0xff]
      %v1464 = vld [vmem:[#allocation8 + $0x12b0] sm:$0xff]
      %v1465 = vld [vmem:[#allocation8 + $0x12b8] sm:$0xff]
      %v1466 = vld [vmem:[#allocation8 + $0x12c0] sm:$0xff]
      %v1467 = vld [vmem:[#allocation8 + $0x12c8] sm:$0xff]
      %v1468 = vld [vmem:[#allocation8 + $0x12d0] sm:$0xff]
      %v1469 = vld [vmem:[#allocation8 + $0x12d8] sm:$0xff]
      %v1470 = vld [vmem:[#allocation8 + $0x12e0] sm:$0xff]
      %v1471 = vld [vmem:[#allocation8 + $0x12e8] sm:$0xff]
      %v1472 = vld [vmem:[#allocation8 + $0x12f0] sm:$0xff]
      %v1473 = vld [vmem:[#allocation8 + $0x12f8] sm:$0xff]
      %v1474 = vld [vmem:[#allocation8 + $0x1300] sm:$0xff]
      %v1475 = vld [vmem:[#allocation8 + $0x1308] sm:$0xff]
      %v1476 = vld [vmem:[#allocation8 + $0x1310] sm:$0xff]
      %v1477 = vld [vmem:[#allocation8 + $0x1318] sm:$0xff]
      %v1478 = vld [vmem:[#allocation8 + $0x1320] sm:$0xff]
      %v1479 = vld [vmem:[#allocation8 + $0x1328] sm:$0xff]
      %v1480 = vld [vmem:[#allocation8 + $0x1330] sm:$0xff]
      %v1481 = vld [vmem:[#allocation8 + $0x1338] sm:$0xff]
      %v1482 = vld [vmem:[#allocation8 + $0x1340] sm:$0xff]
      %v1483 = vld [vmem:[#allocation8 + $0x1348] sm:$0xff]
      %v1484 = vld [vmem:[#allocation8 + $0x1350] sm:$0xff]
      %v1485 = vld [vmem:[#allocation8 + $0x1358] sm:$0xff]
      %v1486 = vld [vmem:[#allocation8 + $0x1360] sm:$0xff]
      %v1487 = vld [vmem:[#allocation8 + $0x1368] sm:$0xff]
      %v1488 = vld [vmem:[#allocation8 + $0x1370] sm:$0xff]
      %v1489 = vld [vmem:[#allocation8 + $0x1378] sm:$0xff]
      %v1490 = vld [vmem:[#allocation8 + $0x1380] sm:$0xff]
      %v1491 = vld [vmem:[#allocation8 + $0x1388] sm:$0xff]
      %v1492 = vld [vmem:[#allocation8 + $0x1390] sm:$0xff]
      %v1493 = vld [vmem:[#allocation8 + $0x1398] sm:$0xff]
      %v1494 = vld [vmem:[#allocation8 + $0x13a0] sm:$0xff]
      %v1495 = vld [vmem:[#allocation8 + $0x13a8] sm:$0xff]
      %v1496 = vld [vmem:[#allocation8 + $0x13b0] sm:$0xff]
      %v1497 = vld [vmem:[#allocation8 + $0x13b8] sm:$0xff]
      %v1498 = vld [vmem:[#allocation8 + $0x13c0] sm:$0xff]
      %v1499 = vld [vmem:[#allocation8 + $0x13c8] sm:$0xff]
      %v1500 = vld [vmem:[#allocation8 + $0x13d0] sm:$0xff]
      %v1501 = vld [vmem:[#allocation8 + $0x13d8] sm:$0xff]
      %v1502 = vld [vmem:[#allocation8 + $0x13e0] sm:$0xff]
      %v1503 = vld [vmem:[#allocation8 + $0x13e8] sm:$0xff]
      %v1504 = vld [vmem:[#allocation8 + $0x13f0] sm:$0xff]
      %v1505 = vld [vmem:[#allocation8 + $0x13f8] sm:$0xff]
      %v1506 = vld [vmem:[#allocation10] sm:$0xf]
      %v1508 = vlaneseq
      %v1509 = vshrl.u32 %v1508, 7
      %v1510 = vsub.s32 0, %v1509
      %v1511 = vrot.slane %v1506, %v1510
      %v1512 = vlaneseq
      %v1513 = vshrl.u32 %v1512, 7
      %v1514 = vsub.s32 1, %v1513
      %v1515 = vrot.slane %v1506, %v1514
      %v1516 = vlaneseq
      %v1517 = vshrl.u32 %v1516, 7
      %v1518 = vsub.s32 2, %v1517
      %v1519 = vrot.slane %v1506, %v1518
      %v1520 = vlaneseq
      %v1521 = vshrl.u32 %v1520, 7
      %v1522 = vsub.s32 3, %v1521
      %v1523 = vrot.slane %v1506, %v1522
      %1528 = vmatprep.subr.mxu0 %v867
      %1529 = vmatpush1.msra.mxu0 %v866
      %1530 = vmatprep.subr.mxu0 %v871
      %1531 = vmatpush1.msra.mxu0 %v870
      %1532 = vmatprep.subr.mxu0 %v875
      %1533 = vmatpush1.msra.mxu0 %v874
      %1534 = vmatprep.subr.mxu0 %v879
      %1535 = vmatpush1.msra.mxu0 %v878
      %1536 = vmatprep.subr.mxu0 %v883
      %1537 = vmatpush1.msra.mxu0 %v882
      %1538 = vmatprep.subr.mxu0 %v887
      %1539 = vmatpush1.msra.mxu0 %v886
      %1540 = vmatprep.subr.mxu0 %v891
      %1541 = vmatpush1.msra.mxu0 %v890
      %1542 = vmatprep.subr.mxu0 %v895
      %1543 = vmatpush1.msra.mxu0 %v894
      %1544 = vmatprep.subr.mxu0 %v899
      %1545 = vmatpush1.msra.mxu0 %v898
      %1546 = vmatprep.subr.mxu0 %v903
      %1547 = vmatpush1.msra.mxu0 %v902
      %1548 = vmatprep.subr.mxu0 %v907
      %1549 = vmatpush1.msra.mxu0 %v906
      %1550 = vmatprep.subr.mxu0 %v911
      %1551 = vmatpush1.msra.mxu0 %v910
      %1552 = vmatprep.subr.mxu0 %v915
      %1553 = vmatpush1.msra.mxu0 %v914
      %1554 = vmatprep.subr.mxu0 %v919
      %1555 = vmatpush1.msra.mxu0 %v918
      %1556 = vmatprep.subr.mxu0 %v923
      %1557 = vmatpush1.msra.mxu0 %v922
      %1558 = vmatprep.subr.mxu0 %v927
      %1559 = vmatpush1.msra.mxu0 %v926
      %1560 = vmatprep.subr.mxu0 %v931
      %1561 = vmatpush1.msra.mxu0 %v930
      %1562 = vmatprep.subr.mxu0 %v935
      %1563 = vmatpush1.msra.mxu0 %v934
      %1564 = vmatprep.subr.mxu0 %v939
      %1565 = vmatpush1.msra.mxu0 %v938
      %1566 = vmatprep.subr.mxu0 %v943
      %1567 = vmatpush1.msra.mxu0 %v942
      %1568 = vmatprep.subr.mxu0 %v947
      %1569 = vmatpush1.msra.mxu0 %v946
      %1570 = vmatprep.subr.mxu0 %v951
      %1571 = vmatpush1.msra.mxu0 %v950
      %1572 = vmatprep.subr.mxu0 %v955
      %1573 = vmatpush1.msra.mxu0 %v954
      %1574 = vmatprep.subr.mxu0 %v959
      %1575 = vmatpush1.msra.mxu0 %v958
      %1576 = vmatprep.subr.mxu0 %v963
      %1577 = vmatpush1.msra.mxu0 %v962
      %1578 = vmatprep.subr.mxu0 %v967
      %1579 = vmatpush1.msra.mxu0 %v966
      %1580 = vmatprep.subr.mxu0 %v971
      %1581 = vmatpush1.msra.mxu0 %v970
      %1582 = vmatprep.subr.mxu0 %v975
      %1583 = vmatpush1.msra.mxu0 %v974
      %1584 = vmatprep.subr.mxu0 %v979
      %1585 = vmatpush1.msra.mxu0 %v978
      %1586 = vmatprep.subr.mxu0 %v983
      %1587 = vmatpush1.msra.mxu0 %v982
      %1588 = vmatprep.subr.mxu0 %v987
      %1589 = vmatpush1.msra.mxu0 %v986
      %1590 = vmatprep.subr.mxu0 %v991
      %1591 = vmatpush1.msra.mxu0 %v990
      %1592 = vmatprep.mubr.f32.mxu0 %v857
      %1593 = vmatmul.mubr.f32.gmra.mrb[0].mxu0 %v856
      %v1594 = vpop.f32.mrb[0].mxu0
      %v1595 = vadd.f32 %v1511, %v1594
      %v1596 = vpop.f32.mrb[0].mxu0
      %v1597 = vadd.f32 %v1515, %v1596
      %1598 = vdwg.mxu0
      %1599 = vmatprep.subr.mxu0 %v995
      %1600 = vmatpush1.msra.mxu0 %v994
      %1601 = vmatprep.subr.mxu0 %v999
      %1602 = vmatpush1.msra.mxu0 %v998
      %1603 = vmatprep.subr.mxu0 %v1003
      %1604 = vmatpush1.msra.mxu0 %v1002
      %1605 = vmatprep.subr.mxu0 %v1007
      %1606 = vmatpush1.msra.mxu0 %v1006
      %1607 = vmatprep.subr.mxu0 %v1011
      %1608 = vmatpush1.msra.mxu0 %v1010
      %1609 = vmatprep.subr.mxu0 %v1015
      %1610 = vmatpush1.msra.mxu0 %v1014
      %1611 = vmatprep.subr.mxu0 %v1019
      %1612 = vmatpush1.msra.mxu0 %v1018
      %1613 = vmatprep.subr.mxu0 %v1023
      %1614 = vmatpush1.msra.mxu0 %v1022
      %1615 = vmatprep.subr.mxu0 %v1027
      %1616 = vmatpush1.msra.mxu0 %v1026
      %1617 = vmatprep.subr.mxu0 %v1031
      %1618 = vmatpush1.msra.mxu0 %v1030
      %1619 = vmatprep.subr.mxu0 %v1035
      %1620 = vmatpush1.msra.mxu0 %v1034
      %1621 = vmatprep.subr.mxu0 %v1039
      %1622 = vmatpush1.msra.mxu0 %v1038
      %1623 = vmatprep.subr.mxu0 %v1043
      %1624 = vmatpush1.msra.mxu0 %v1042
      %1625 = vmatprep.subr.mxu0 %v1047
      %1626 = vmatpush1.msra.mxu0 %v1046
      %1627 = vmatprep.subr.mxu0 %v1051
      %1628 = vmatpush1.msra.mxu0 %v1050
      %1629 = vmatprep.subr.mxu0 %v1055
      %1630 = vmatpush1.msra.mxu0 %v1054
      %1631 = vmatprep.subr.mxu0 %v1059
      %1632 = vmatpush1.msra.mxu0 %v1058
      %1633 = vmatprep.subr.mxu0 %v1063
      %1634 = vmatpush1.msra.mxu0 %v1062
      %1635 = vmatprep.subr.mxu0 %v1067
      %1636 = vmatpush1.msra.mxu0 %v1066
      %1637 = vmatprep.subr.mxu0 %v1071
      %1638 = vmatpush1.msra.mxu0 %v1070
      %1639 = vmatprep.subr.mxu0 %v1075
      %1640 = vmatpush1.msra.mxu0 %v1074
      %1641 = vmatprep.subr.mxu0 %v1079
      %1642 = vmatpush1.msra.mxu0 %v1078
      %1643 = vmatprep.subr.mxu0 %v1083
      %1644 = vmatpush1.msra.mxu0 %v1082
      %1645 = vmatprep.subr.mxu0 %v1087
      %1646 = vmatpush1.msra.mxu0 %v1086
      %1647 = vmatprep.subr.mxu0 %v1091
      %1648 = vmatpush1.msra.mxu0 %v1090
      %1649 = vmatprep.subr.mxu0 %v1095
      %1650 = vmatpush1.msra.mxu0 %v1094
      %1651 = vmatprep.subr.mxu0 %v1099
      %1652 = vmatpush1.msra.mxu0 %v1098
      %1653 = vmatprep.subr.mxu0 %v1103
      %1654 = vmatpush1.msra.mxu0 %v1102
      %1655 = vmatprep.subr.mxu0 %v1107
      %1656 = vmatpush1.msra.mxu0 %v1106
      %1657 = vmatprep.subr.mxu0 %v1111
      %1658 = vmatpush1.msra.mxu0 %v1110
      %1659 = vmatprep.subr.mxu0 %v1115
      %1660 = vmatpush1.msra.mxu0 %v1114
      %1661 = vmatprep.subr.mxu0 %v1119
      %1662 = vmatpush1.msra.mxu0 %v1118
      %1663 = vmatprep.mubr.f32.mxu0 %v859
      %1664 = vmatmul.mubr.f32.gmra.mrb[0].mxu0 %v858
      %v1665 = vpop.f32.mrb[0].mxu0
      %v1666 = vadd.f32 %v1595, %v1665
      %v1667 = vpop.f32.mrb[0].mxu0
      %v1668 = vadd.f32 %v1597, %v1667
      %1669 = vdwg.mxu0
      %1670 = vmatprep.subr.mxu0 %v1123
      %1671 = vmatpush1.msra.mxu0 %v1122
      %1672 = vmatprep.subr.mxu0 %v1127
      %1673 = vmatpush1.msra.mxu0 %v1126
      %1674 = vmatprep.subr.mxu0 %v1131
      %1675 = vmatpush1.msra.mxu0 %v1130
      %1676 = vmatprep.subr.mxu0 %v1135
      %1677 = vmatpush1.msra.mxu0 %v1134
      %1678 = vmatprep.subr.mxu0 %v1139
      %1679 = vmatpush1.msra.mxu0 %v1138
      %1680 = vmatprep.subr.mxu0 %v1143
      %1681 = vmatpush1.msra.mxu0 %v1142
      %1682 = vmatprep.subr.mxu0 %v1147
      %1683 = vmatpush1.msra.mxu0 %v1146
      %1684 = vmatprep.subr.mxu0 %v1151
      %1685 = vmatpush1.msra.mxu0 %v1150
      %1686 = vmatprep.subr.mxu0 %v1155
      %1687 = vmatpush1.msra.mxu0 %v1154
      %1688 = vmatprep.subr.mxu0 %v1159
      %1689 = vmatpush1.msra.mxu0 %v1158
      %1690 = vmatprep.subr.mxu0 %v1163
      %1691 = vmatpush1.msra.mxu0 %v1162
      %1692 = vmatprep.subr.mxu0 %v1167
      %1693 = vmatpush1.msra.mxu0 %v1166
      %1694 = vmatprep.subr.mxu0 %v1171
      %1695 = vmatpush1.msra.mxu0 %v1170
      %1696 = vmatprep.subr.mxu0 %v1175
      %1697 = vmatpush1.msra.mxu0 %v1174
      %1698 = vmatprep.subr.mxu0 %v1179
      %1699 = vmatpush1.msra.mxu0 %v1178
      %1700 = vmatprep.subr.mxu0 %v1183
      %1701 = vmatpush1.msra.mxu0 %v1182
      %1702 = vmatprep.subr.mxu0 %v1187
      %1703 = vmatpush1.msra.mxu0 %v1186
      %1704 = vmatprep.subr.mxu0 %v1191
      %1705 = vmatpush1.msra.mxu0 %v1190
      %1706 = vmatprep.subr.mxu0 %v1195
      %1707 = vmatpush1.msra.mxu0 %v1194
      %1708 = vmatprep.subr.mxu0 %v1199
      %1709 = vmatpush1.msra.mxu0 %v1198
      %1710 = vmatprep.subr.mxu0 %v1203
      %1711 = vmatpush1.msra.mxu0 %v1202
      %1712 = vmatprep.subr.mxu0 %v1207
      %1713 = vmatpush1.msra.mxu0 %v1206
      %1714 = vmatprep.subr.mxu0 %v1211
      %1715 = vmatpush1.msra.mxu0 %v1210
      %1716 = vmatprep.subr.mxu0 %v1215
      %1717 = vmatpush1.msra.mxu0 %v1214
      %1718 = vmatprep.subr.mxu0 %v1219
      %1719 = vmatpush1.msra.mxu0 %v1218
      %1720 = vmatprep.subr.mxu0 %v1223
      %1721 = vmatpush1.msra.mxu0 %v1222
      %1722 = vmatprep.subr.mxu0 %v1227
      %1723 = vmatpush1.msra.mxu0 %v1226
      %1724 = vmatprep.subr.mxu0 %v1231
      %1725 = vmatpush1.msra.mxu0 %v1230
      %1726 = vmatprep.subr.mxu0 %v1235
      %1727 = vmatpush1.msra.mxu0 %v1234
      %1728 = vmatprep.subr.mxu0 %v1239
      %1729 = vmatpush1.msra.mxu0 %v1238
      %1730 = vmatprep.subr.mxu0 %v1243
      %1731 = vmatpush1.msra.mxu0 %v1242
      %1732 = vmatprep.subr.mxu0 %v1247
      %1733 = vmatpush1.msra.mxu0 %v1246
      %1734 = vmatprep.mubr.f32.mxu0 %v861
      %1735 = vmatmul.mubr.f32.gmra.mrb[0].mxu0 %v860
      %v1736 = vpop.f32.mrb[0].mxu0
      %v1737 = vadd.f32 %v1666, %v1736
      %v1738 = vpop.f32.mrb[0].mxu0
      %v1739 = vadd.f32 %v1668, %v1738
      %1740 = vdwg.mxu0
      %1741 = vmatprep.subr.mxu0 %v1251
      %1742 = vmatpush1.msra.mxu0 %v1250
      %1743 = vmatprep.subr.mxu0 %v1255
      %1744 = vmatpush1.msra.mxu0 %v1254
      %1745 = vmatprep.subr.mxu0 %v1259
      %1746 = vmatpush1.msra.mxu0 %v1258
      %1747 = vmatprep.subr.mxu0 %v1263
      %1748 = vmatpush1.msra.mxu0 %v1262
      %1749 = vmatprep.subr.mxu0 %v1267
      %1750 = vmatpush1.msra.mxu0 %v1266
      %1751 = vmatprep.subr.mxu0 %v1271
      %1752 = vmatpush1.msra.mxu0 %v1270
      %1753 = vmatprep.subr.mxu0 %v1275
      %1754 = vmatpush1.msra.mxu0 %v1274
      %1755 = vmatprep.subr.mxu0 %v1279
      %1756 = vmatpush1.msra.mxu0 %v1278
      %1757 = vmatprep.subr.mxu0 %v1283
      %1758 = vmatpush1.msra.mxu0 %v1282
      %1759 = vmatprep.subr.mxu0 %v1287
      %1760 = vmatpush1.msra.mxu0 %v1286
      %1761 = vmatprep.subr.mxu0 %v1291
      %1762 = vmatpush1.msra.mxu0 %v1290
      %1763 = vmatprep.subr.mxu0 %v1295
      %1764 = vmatpush1.msra.mxu0 %v1294
      %1765 = vmatprep.subr.mxu0 %v1299
      %1766 = vmatpush1.msra.mxu0 %v1298
      %1767 = vmatprep.subr.mxu0 %v1303
      %1768 = vmatpush1.msra.mxu0 %v1302
      %1769 = vmatprep.subr.mxu0 %v1307
      %1770 = vmatpush1.msra.mxu0 %v1306
      %1771 = vmatprep.subr.mxu0 %v1311
      %1772 = vmatpush1.msra.mxu0 %v1310
      %1773 = vmatprep.subr.mxu0 %v1315
      %1774 = vmatpush1.msra.mxu0 %v1314
      %1775 = vmatprep.subr.mxu0 %v1319
      %1776 = vmatpush1.msra.mxu0 %v1318
      %1777 = vmatprep.subr.mxu0 %v1323
      %1778 = vmatpush1.msra.mxu0 %v1322
      %1779 = vmatprep.subr.mxu0 %v1327
      %1780 = vmatpush1.msra.mxu0 %v1326
      %1781 = vmatprep.subr.mxu0 %v1331
      %1782 = vmatpush1.msra.mxu0 %v1330
      %1783 = vmatprep.subr.mxu0 %v1335
      %1784 = vmatpush1.msra.mxu0 %v1334
      %1785 = vmatprep.subr.mxu0 %v1339
      %1786 = vmatpush1.msra.mxu0 %v1338
      %1787 = vmatprep.subr.mxu0 %v1343
      %1788 = vmatpush1.msra.mxu0 %v1342
      %1789 = vmatprep.subr.mxu0 %v1347
      %1790 = vmatpush1.msra.mxu0 %v1346
      %1791 = vmatprep.subr.mxu0 %v1351
      %1792 = vmatpush1.msra.mxu0 %v1350
      %1793 = vmatprep.subr.mxu0 %v1355
      %1794 = vmatpush1.msra.mxu0 %v1354
      %1795 = vmatprep.subr.mxu0 %v1359
      %1796 = vmatpush1.msra.mxu0 %v1358
      %1797 = vmatprep.subr.mxu0 %v1363
      %1798 = vmatpush1.msra.mxu0 %v1362
      %1799 = vmatprep.subr.mxu0 %v1367
      %1800 = vmatpush1.msra.mxu0 %v1366
      %1801 = vmatprep.subr.mxu0 %v1371
      %1802 = vmatpush1.msra.mxu0 %v1370
      %1803 = vmatprep.subr.mxu0 %v1375
      %1804 = vmatpush1.msra.mxu0 %v1374
      %1805 = vmatprep.mubr.f32.mxu0 %v863
      %1806 = vmatmul.mubr.f32.gmra.mrb[0].mxu0 %v862
      %v1807 = vpop.f32.mrb[0].mxu0
      %v1808 = vadd.f32 %v1737, %v1807
      %v1809 = vpop.f32.mrb[0].mxu0
      %v1810 = vadd.f32 %v1739, %v1809
      %1811 = vdwg.mxu0
      %1812 = vmatprep.subr.mxu0 %v1379
      %1813 = vmatpush1.msra.mxu0 %v1378
      %1814 = vmatprep.subr.mxu0 %v1383
      %1815 = vmatpush1.msra.mxu0 %v1382
      %1816 = vmatprep.subr.mxu0 %v1387
      %1817 = vmatpush1.msra.mxu0 %v1386
      %1818 = vmatprep.subr.mxu0 %v1391
      %1819 = vmatpush1.msra.mxu0 %v1390
      %1820 = vmatprep.subr.mxu0 %v1395
      %1821 = vmatpush1.msra.mxu0 %v1394
      %1822 = vmatprep.subr.mxu0 %v1399
      %1823 = vmatpush1.msra.mxu0 %v1398
      %1824 = vmatprep.subr.mxu0 %v1403
      %1825 = vmatpush1.msra.mxu0 %v1402
      %1826 = vmatprep.subr.mxu0 %v1407
      %1827 = vmatpush1.msra.mxu0 %v1406
      %1828 = vmatprep.subr.mxu0 %v1411
      %1829 = vmatpush1.msra.mxu0 %v1410
      %1830 = vmatprep.subr.mxu0 %v1415
      %1831 = vmatpush1.msra.mxu0 %v1414
      %1832 = vmatprep.subr.mxu0 %v1419
      %1833 = vmatpush1.msra.mxu0 %v1418
      %1834 = vmatprep.subr.mxu0 %v1423
      %1835 = vmatpush1.msra.mxu0 %v1422
      %1836 = vmatprep.subr.mxu0 %v1427
      %1837 = vmatpush1.msra.mxu0 %v1426
      %1838 = vmatprep.subr.mxu0 %v1431
      %1839 = vmatpush1.msra.mxu0 %v1430
      %1840 = vmatprep.subr.mxu0 %v1435
      %1841 = vmatpush1.msra.mxu0 %v1434
      %1842 = vmatprep.subr.mxu0 %v1439
      %1843 = vmatpush1.msra.mxu0 %v1438
      %1844 = vmatprep.subr.mxu0 %v1443
      %1845 = vmatpush1.msra.mxu0 %v1442
      %1846 = vmatprep.subr.mxu0 %v1447
      %1847 = vmatpush1.msra.mxu0 %v1446
      %1848 = vmatprep.subr.mxu0 %v1451
      %1849 = vmatpush1.msra.mxu0 %v1450
      %1850 = vmatprep.subr.mxu0 %v1455
      %1851 = vmatpush1.msra.mxu0 %v1454
      %1852 = vmatprep.subr.mxu0 %v1459
      %1853 = vmatpush1.msra.mxu0 %v1458
      %1854 = vmatprep.subr.mxu0 %v1463
      %1855 = vmatpush1.msra.mxu0 %v1462
      %1856 = vmatprep.subr.mxu0 %v1467
      %1857 = vmatpush1.msra.mxu0 %v1466
      %1858 = vmatprep.subr.mxu0 %v1471
      %1859 = vmatpush1.msra.mxu0 %v1470
      %1860 = vmatprep.subr.mxu0 %v1475
      %1861 = vmatpush1.msra.mxu0 %v1474
      %1862 = vmatprep.subr.mxu0 %v1479
      %1863 = vmatpush1.msra.mxu0 %v1478
      %1864 = vmatprep.subr.mxu0 %v1483
      %1865 = vmatpush1.msra.mxu0 %v1482
      %1866 = vmatprep.subr.mxu0 %v1487
      %1867 = vmatpush1.msra.mxu0 %v1486
      %1868 = vmatprep.subr.mxu0 %v1491
      %1869 = vmatpush1.msra.mxu0 %v1490
      %1870 = vmatprep.subr.mxu0 %v1495
      %1871 = vmatpush1.msra.mxu0 %v1494
      %1872 = vmatprep.subr.mxu0 %v1499
      %1873 = vmatpush1.msra.mxu0 %v1498
      %1874 = vmatprep.subr.mxu0 %v1503
      %1875 = vmatpush1.msra.mxu0 %v1502
      %1876 = vmatprep.mubr.f32.mxu0 %v865
      %1877 = vmatmul.mubr.f32.gmra.mrb[0].mxu0 %v864
      %v1878 = vpop.f32.mrb[0].mxu0
      %v1879 = vadd.f32 %v1808, %v1878
      %v1880 = vpop.f32.mrb[0].mxu0
      %v1881 = vadd.f32 %v1810, %v1880
      %1882 = vdwg.mxu0
      %1883 = vmatprep.subr.mxu0 %v869
      %1884 = vmatpush1.msra.mxu0 %v868
      %1885 = vmatprep.subr.mxu0 %v873
      %1886 = vmatpush1.msra.mxu0 %v872
      %1887 = vmatprep.subr.mxu0 %v877
      %1888 = vmatpush1.msra.mxu0 %v876
      %1889 = vmatprep.subr.mxu0 %v881
      %1890 = vmatpush1.msra.mxu0 %v880
      %1891 = vmatprep.subr.mxu0 %v885
      %1892 = vmatpush1.msra.mxu0 %v884
      %1893 = vmatprep.subr.mxu0 %v889
      %1894 = vmatpush1.msra.mxu0 %v888
      %1895 = vmatprep.subr.mxu0 %v893
      %1896 = vmatpush1.msra.mxu0 %v892
      %1897 = vmatprep.subr.mxu0 %v897
      %1898 = vmatpush1.msra.mxu0 %v896
      %1899 = vmatprep.subr.mxu0 %v901
      %1900 = vmatpush1.msra.mxu0 %v900
      %1901 = vmatprep.subr.mxu0 %v905
      %1902 = vmatpush1.msra.mxu0 %v904
      %1903 = vmatprep.subr.mxu0 %v909
      %1904 = vmatpush1.msra.mxu0 %v908
      %1905 = vmatprep.subr.mxu0 %v913
      %1906 = vmatpush1.msra.mxu0 %v912
      %1907 = vmatprep.subr.mxu0 %v917
      %1908 = vmatpush1.msra.mxu0 %v916
      %1909 = vmatprep.subr.mxu0 %v921
      %1910 = vmatpush1.msra.mxu0 %v920
      %1911 = vmatprep.subr.mxu0 %v925
      %1912 = vmatpush1.msra.mxu0 %v924
      %1913 = vmatprep.subr.mxu0 %v929
      %1914 = vmatpush1.msra.mxu0 %v928
      %1915 = vmatprep.subr.mxu0 %v933
      %1916 = vmatpush1.msra.mxu0 %v932
      %1917 = vmatprep.subr.mxu0 %v937
      %1918 = vmatpush1.msra.mxu0 %v936
      %1919 = vmatprep.subr.mxu0 %v941
      %1920 = vmatpush1.msra.mxu0 %v940
      %1921 = vmatprep.subr.mxu0 %v945
      %1922 = vmatpush1.msra.mxu0 %v944
      %1923 = vmatprep.subr.mxu0 %v949
      %1924 = vmatpush1.msra.mxu0 %v948
      %1925 = vmatprep.subr.mxu0 %v953
      %1926 = vmatpush1.msra.mxu0 %v952
      %1927 = vmatprep.subr.mxu0 %v957
      %1928 = vmatpush1.msra.mxu0 %v956
      %1929 = vmatprep.subr.mxu0 %v961
      %1930 = vmatpush1.msra.mxu0 %v960
      %1931 = vmatprep.subr.mxu0 %v965
      %1932 = vmatpush1.msra.mxu0 %v964
      %1933 = vmatprep.subr.mxu0 %v969
      %1934 = vmatpush1.msra.mxu0 %v968
      %1935 = vmatprep.subr.mxu0 %v973
      %1936 = vmatpush1.msra.mxu0 %v972
      %1937 = vmatprep.subr.mxu0 %v977
      %1938 = vmatpush1.msra.mxu0 %v976
      %1939 = vmatprep.subr.mxu0 %v981
      %1940 = vmatpush1.msra.mxu0 %v980
      %1941 = vmatprep.subr.mxu0 %v985
      %1942 = vmatpush1.msra.mxu0 %v984
      %1943 = vmatprep.subr.mxu0 %v989
      %1944 = vmatpush1.msra.mxu0 %v988
      %1945 = vmatprep.subr.mxu0 %v993
      %1946 = vmatpush1.msra.mxu0 %v992
      %1947 = vmatprep.mubr.f32.mxu0 %v857
      %1948 = vmatmul.mubr.f32.gmra.mrb[0].mxu0 %v856
      %v1949 = vpop.f32.mrb[0].mxu0
      %v1950 = vadd.f32 %v1519, %v1949
      %v1951 = vpop.f32.mrb[0].mxu0
      %v1952 = vadd.f32 %v1523, %v1951
      %1953 = vdwg.mxu0
      %1954 = vmatprep.subr.mxu0 %v997
      %1955 = vmatpush1.msra.mxu0 %v996
      %1956 = vmatprep.subr.mxu0 %v1001
      %1957 = vmatpush1.msra.mxu0 %v1000
      %1958 = vmatprep.subr.mxu0 %v1005
      %1959 = vmatpush1.msra.mxu0 %v1004
      %1960 = vmatprep.subr.mxu0 %v1009
      %1961 = vmatpush1.msra.mxu0 %v1008
      %1962 = vmatprep.subr.mxu0 %v1013
      %1963 = vmatpush1.msra.mxu0 %v1012
      %1964 = vmatprep.subr.mxu0 %v1017
      %1965 = vmatpush1.msra.mxu0 %v1016
      %1966 = vmatprep.subr.mxu0 %v1021
      %1967 = vmatpush1.msra.mxu0 %v1020
      %1968 = vmatprep.subr.mxu0 %v1025
      %1969 = vmatpush1.msra.mxu0 %v1024
      %1970 = vmatprep.subr.mxu0 %v1029
      %1971 = vmatpush1.msra.mxu0 %v1028
      %1972 = vmatprep.subr.mxu0 %v1033
      %1973 = vmatpush1.msra.mxu0 %v1032
      %1974 = vmatprep.subr.mxu0 %v1037
      %1975 = vmatpush1.msra.mxu0 %v1036
      %1976 = vmatprep.subr.mxu0 %v1041
      %1977 = vmatpush1.msra.mxu0 %v1040
      %1978 = vmatprep.subr.mxu0 %v1045
      %1979 = vmatpush1.msra.mxu0 %v1044
      %1980 = vmatprep.subr.mxu0 %v1049
      %1981 = vmatpush1.msra.mxu0 %v1048
      %1982 = vmatprep.subr.mxu0 %v1053
      %1983 = vmatpush1.msra.mxu0 %v1052
      %1984 = vmatprep.subr.mxu0 %v1057
      %1985 = vmatpush1.msra.mxu0 %v1056
      %1986 = vmatprep.subr.mxu0 %v1061
      %1987 = vmatpush1.msra.mxu0 %v1060
      %1988 = vmatprep.subr.mxu0 %v1065
      %1989 = vmatpush1.msra.mxu0 %v1064
      %1990 = vmatprep.subr.mxu0 %v1069
      %1991 = vmatpush1.msra.mxu0 %v1068
      %1992 = vmatprep.subr.mxu0 %v1073
      %1993 = vmatpush1.msra.mxu0 %v1072
      %1994 = vmatprep.subr.mxu0 %v1077
      %1995 = vmatpush1.msra.mxu0 %v1076
      %1996 = vmatprep.subr.mxu0 %v1081
      %1997 = vmatpush1.msra.mxu0 %v1080
      %1998 = vmatprep.subr.mxu0 %v1085
      %1999 = vmatpush1.msra.mxu0 %v1084
      %2000 = vmatprep.subr.mxu0 %v1089
      %2001 = vmatpush1.msra.mxu0 %v1088
      %2002 = vmatprep.subr.mxu0 %v1093
      %2003 = vmatpush1.msra.mxu0 %v1092
      %2004 = vmatprep.subr.mxu0 %v1097
      %2005 = vmatpush1.msra.mxu0 %v1096
      %2006 = vmatprep.subr.mxu0 %v1101
      %2007 = vmatpush1.msra.mxu0 %v1100
      %2008 = vmatprep.subr.mxu0 %v1105
      %2009 = vmatpush1.msra.mxu0 %v1104
      %2010 = vmatprep.subr.mxu0 %v1109
      %2011 = vmatpush1.msra.mxu0 %v1108
      %2012 = vmatprep.subr.mxu0 %v1113
      %2013 = vmatpush1.msra.mxu0 %v1112
      %2014 = vmatprep.subr.mxu0 %v1117
      %2015 = vmatpush1.msra.mxu0 %v1116
      %2016 = vmatprep.subr.mxu0 %v1121
      %2017 = vmatpush1.msra.mxu0 %v1120
      %2018 = vmatprep.mubr.f32.mxu0 %v859
      %2019 = vmatmul.mubr.f32.gmra.mrb[0].mxu0 %v858
      %v2020 = vpop.f32.mrb[0].mxu0
      %v2021 = vadd.f32 %v1950, %v2020
      %v2022 = vpop.f32.mrb[0].mxu0
      %v2023 = vadd.f32 %v1952, %v2022
      %2024 = vdwg.mxu0
      %2025 = vmatprep.subr.mxu0 %v1125
      %2026 = vmatpush1.msra.mxu0 %v1124
      %2027 = vmatprep.subr.mxu0 %v1129
      %2028 = vmatpush1.msra.mxu0 %v1128
      %2029 = vmatprep.subr.mxu0 %v1133
      %2030 = vmatpush1.msra.mxu0 %v1132
      %2031 = vmatprep.subr.mxu0 %v1137
      %2032 = vmatpush1.msra.mxu0 %v1136
      %2033 = vmatprep.subr.mxu0 %v1141
      %2034 = vmatpush1.msra.mxu0 %v1140
      %2035 = vmatprep.subr.mxu0 %v1145
      %2036 = vmatpush1.msra.mxu0 %v1144
      %2037 = vmatprep.subr.mxu0 %v1149
      %2038 = vmatpush1.msra.mxu0 %v1148
      %2039 = vmatprep.subr.mxu0 %v1153
      %2040 = vmatpush1.msra.mxu0 %v1152
      %2041 = vmatprep.subr.mxu0 %v1157
      %2042 = vmatpush1.msra.mxu0 %v1156
      %2043 = vmatprep.subr.mxu0 %v1161
      %2044 = vmatpush1.msra.mxu0 %v1160
      %2045 = vmatprep.subr.mxu0 %v1165
      %2046 = vmatpush1.msra.mxu0 %v1164
      %2047 = vmatprep.subr.mxu0 %v1169
      %2048 = vmatpush1.msra.mxu0 %v1168
      %2049 = vmatprep.subr.mxu0 %v1173
      %2050 = vmatpush1.msra.mxu0 %v1172
      %2051 = vmatprep.subr.mxu0 %v1177
      %2052 = vmatpush1.msra.mxu0 %v1176
      %2053 = vmatprep.subr.mxu0 %v1181
      %2054 = vmatpush1.msra.mxu0 %v1180
      %2055 = vmatprep.subr.mxu0 %v1185
      %2056 = vmatpush1.msra.mxu0 %v1184
      %2057 = vmatprep.subr.mxu0 %v1189
      %2058 = vmatpush1.msra.mxu0 %v1188
      %2059 = vmatprep.subr.mxu0 %v1193
      %2060 = vmatpush1.msra.mxu0 %v1192
      %2061 = vmatprep.subr.mxu0 %v1197
      %2062 = vmatpush1.msra.mxu0 %v1196
      %2063 = vmatprep.subr.mxu0 %v1201
      %2064 = vmatpush1.msra.mxu0 %v1200
      %2065 = vmatprep.subr.mxu0 %v1205
      %2066 = vmatpush1.msra.mxu0 %v1204
      %2067 = vmatprep.subr.mxu0 %v1209
      %2068 = vmatpush1.msra.mxu0 %v1208
      %2069 = vmatprep.subr.mxu0 %v1213
      %2070 = vmatpush1.msra.mxu0 %v1212
      %2071 = vmatprep.subr.mxu0 %v1217
      %2072 = vmatpush1.msra.mxu0 %v1216
      %2073 = vmatprep.subr.mxu0 %v1221
      %2074 = vmatpush1.msra.mxu0 %v1220
      %2075 = vmatprep.subr.mxu0 %v1225
      %2076 = vmatpush1.msra.mxu0 %v1224
      %2077 = vmatprep.subr.mxu0 %v1229
      %2078 = vmatpush1.msra.mxu0 %v1228
      %2079 = vmatprep.subr.mxu0 %v1233
      %2080 = vmatpush1.msra.mxu0 %v1232
      %2081 = vmatprep.subr.mxu0 %v1237
      %2082 = vmatpush1.msra.mxu0 %v1236
      %2083 = vmatprep.subr.mxu0 %v1241
      %2084 = vmatpush1.msra.mxu0 %v1240
      %2085 = vmatprep.subr.mxu0 %v1245
      %2086 = vmatpush1.msra.mxu0 %v1244
      %2087 = vmatprep.subr.mxu0 %v1249
      %2088 = vmatpush1.msra.mxu0 %v1248
      %2089 = vmatprep.mubr.f32.mxu0 %v861
      %2090 = vmatmul.mubr.f32.gmra.mrb[0].mxu0 %v860
      %v2091 = vpop.f32.mrb[0].mxu0
      %v2092 = vadd.f32 %v2021, %v2091
      %v2093 = vpop.f32.mrb[0].mxu0
      %v2094 = vadd.f32 %v2023, %v2093
      %2095 = vdwg.mxu0
      %2096 = vmatprep.subr.mxu0 %v1253
      %2097 = vmatpush1.msra.mxu0 %v1252
      %2098 = vmatprep.subr.mxu0 %v1257
      %2099 = vmatpush1.msra.mxu0 %v1256
      %2100 = vmatprep.subr.mxu0 %v1261
      %2101 = vmatpush1.msra.mxu0 %v1260
      %2102 = vmatprep.subr.mxu0 %v1265
      %2103 = vmatpush1.msra.mxu0 %v1264
      %2104 = vmatprep.subr.mxu0 %v1269
      %2105 = vmatpush1.msra.mxu0 %v1268
      %2106 = vmatprep.subr.mxu0 %v1273
      %2107 = vmatpush1.msra.mxu0 %v1272
      %2108 = vmatprep.subr.mxu0 %v1277
      %2109 = vmatpush1.msra.mxu0 %v1276
      %2110 = vmatprep.subr.mxu0 %v1281
      %2111 = vmatpush1.msra.mxu0 %v1280
      %2112 = vmatprep.subr.mxu0 %v1285
      %2113 = vmatpush1.msra.mxu0 %v1284
      %2114 = vmatprep.subr.mxu0 %v1289
      %2115 = vmatpush1.msra.mxu0 %v1288
      %2116 = vmatprep.subr.mxu0 %v1293
      %2117 = vmatpush1.msra.mxu0 %v1292
      %2118 = vmatprep.subr.mxu0 %v1297
      %2119 = vmatpush1.msra.mxu0 %v1296
      %2120 = vmatprep.subr.mxu0 %v1301
      %2121 = vmatpush1.msra.mxu0 %v1300
      %2122 = vmatprep.subr.mxu0 %v1305
      %2123 = vmatpush1.msra.mxu0 %v1304
      %2124 = vmatprep.subr.mxu0 %v1309
      %2125 = vmatpush1.msra.mxu0 %v1308
      %2126 = vmatprep.subr.mxu0 %v1313
      %2127 = vmatpush1.msra.mxu0 %v1312
      %2128 = vmatprep.subr.mxu0 %v1317
      %2129 = vmatpush1.msra.mxu0 %v1316
      %2130 = vmatprep.subr.mxu0 %v1321
      %2131 = vmatpush1.msra.mxu0 %v1320
      %2132 = vmatprep.subr.mxu0 %v1325
      %2133 = vmatpush1.msra.mxu0 %v1324
      %2134 = vmatprep.subr.mxu0 %v1329
      %2135 = vmatpush1.msra.mxu0 %v1328
      %2136 = vmatprep.subr.mxu0 %v1333
      %2137 = vmatpush1.msra.mxu0 %v1332
      %2138 = vmatprep.subr.mxu0 %v1337
      %2139 = vmatpush1.msra.mxu0 %v1336
      %2140 = vmatprep.subr.mxu0 %v1341
      %2141 = vmatpush1.msra.mxu0 %v1340
      %2142 = vmatprep.subr.mxu0 %v1345
      %2143 = vmatpush1.msra.mxu0 %v1344
      %2144 = vmatprep.subr.mxu0 %v1349
      %2145 = vmatpush1.msra.mxu0 %v1348
      %2146 = vmatprep.subr.mxu0 %v1353
      %2147 = vmatpush1.msra.mxu0 %v1352
      %2148 = vmatprep.subr.mxu0 %v1357
      %2149 = vmatpush1.msra.mxu0 %v1356
      %2150 = vmatprep.subr.mxu0 %v1361
      %2151 = vmatpush1.msra.mxu0 %v1360
      %2152 = vmatprep.subr.mxu0 %v1365
      %2153 = vmatpush1.msra.mxu0 %v1364
      %2154 = vmatprep.subr.mxu0 %v1369
      %2155 = vmatpush1.msra.mxu0 %v1368
      %2156 = vmatprep.subr.mxu0 %v1373
      %2157 = vmatpush1.msra.mxu0 %v1372
      %2158 = vmatprep.subr.mxu0 %v1377
      %2159 = vmatpush1.msra.mxu0 %v1376
      %2160 = vmatprep.mubr.f32.mxu0 %v863
      %2161 = vmatmul.mubr.f32.gmra.mrb[0].mxu0 %v862
      %v2162 = vpop.f32.mrb[0].mxu0
      %v2163 = vadd.f32 %v2092, %v2162
      %v2164 = vpop.f32.mrb[0].mxu0
      %v2165 = vadd.f32 %v2094, %v2164
      %2166 = vdwg.mxu0
      %2167 = vmatprep.subr.mxu0 %v1381
      %2168 = vmatpush1.msra.mxu0 %v1380
      %2169 = vmatprep.subr.mxu0 %v1385
      %2170 = vmatpush1.msra.mxu0 %v1384
      %2171 = vmatprep.subr.mxu0 %v1389
      %2172 = vmatpush1.msra.mxu0 %v1388
      %2173 = vmatprep.subr.mxu0 %v1393
      %2174 = vmatpush1.msra.mxu0 %v1392
      %2175 = vmatprep.subr.mxu0 %v1397
      %2176 = vmatpush1.msra.mxu0 %v1396
      %2177 = vmatprep.subr.mxu0 %v1401
      %2178 = vmatpush1.msra.mxu0 %v1400
      %2179 = vmatprep.subr.mxu0 %v1405
      %2180 = vmatpush1.msra.mxu0 %v1404
      %2181 = vmatprep.subr.mxu0 %v1409
      %2182 = vmatpush1.msra.mxu0 %v1408
      %2183 = vmatprep.subr.mxu0 %v1413
      %2184 = vmatpush1.msra.mxu0 %v1412
      %2185 = vmatprep.subr.mxu0 %v1417
      %2186 = vmatpush1.msra.mxu0 %v1416
      %2187 = vmatprep.subr.mxu0 %v1421
      %2188 = vmatpush1.msra.mxu0 %v1420
      %2189 = vmatprep.subr.mxu0 %v1425
      %2190 = vmatpush1.msra.mxu0 %v1424
      %2191 = vmatprep.subr.mxu0 %v1429
      %2192 = vmatpush1.msra.mxu0 %v1428
      %2193 = vmatprep.subr.mxu0 %v1433
      %2194 = vmatpush1.msra.mxu0 %v1432
      %2195 = vmatprep.subr.mxu0 %v1437
      %2196 = vmatpush1.msra.mxu0 %v1436
      %2197 = vmatprep.subr.mxu0 %v1441
      %2198 = vmatpush1.msra.mxu0 %v1440
      %2199 = vmatprep.subr.mxu0 %v1445
      %2200 = vmatpush1.msra.mxu0 %v1444
      %2201 = vmatprep.subr.mxu0 %v1449
      %2202 = vmatpush1.msra.mxu0 %v1448
      %2203 = vmatprep.subr.mxu0 %v1453
      %2204 = vmatpush1.msra.mxu0 %v1452
      %2205 = vmatprep.subr.mxu0 %v1457
      %2206 = vmatpush1.msra.mxu0 %v1456
      %2207 = vmatprep.subr.mxu0 %v1461
      %2208 = vmatpush1.msra.mxu0 %v1460
      %2209 = vmatprep.subr.mxu0 %v1465
      %2210 = vmatpush1.msra.mxu0 %v1464
      %2211 = vmatprep.subr.mxu0 %v1469
      %2212 = vmatpush1.msra.mxu0 %v1468
      %2213 = vmatprep.subr.mxu0 %v1473
      %2214 = vmatpush1.msra.mxu0 %v1472
      %2215 = vmatprep.subr.mxu0 %v1477
      %2216 = vmatpush1.msra.mxu0 %v1476
      %2217 = vmatprep.subr.mxu0 %v1481
      %2218 = vmatpush1.msra.mxu0 %v1480
      %2219 = vmatprep.subr.mxu0 %v1485
      %2220 = vmatpush1.msra.mxu0 %v1484
      %2221 = vmatprep.subr.mxu0 %v1489
      %2222 = vmatpush1.msra.mxu0 %v1488
      %2223 = vmatprep.subr.mxu0 %v1493
      %2224 = vmatpush1.msra.mxu0 %v1492
      %2225 = vmatprep.subr.mxu0 %v1497
      %2226 = vmatpush1.msra.mxu0 %v1496
      %2227 = vmatprep.subr.mxu0 %v1501
      %2228 = vmatpush1.msra.mxu0 %v1500
      %2229 = vmatprep.subr.mxu0 %v1505
      %2230 = vmatpush1.msra.mxu0 %v1504
      %2231 = vmatprep.mubr.f32.mxu0 %v865
      %2232 = vmatmul.mubr.f32.gmra.mrb[0].mxu0 %v864
      %v2233 = vpop.f32.mrb[0].mxu0
      %v2234 = vadd.f32 %v2163, %v2233
      %v2235 = vpop.f32.mrb[0].mxu0
      %v2236 = vadd.f32 %v2165, %v2235
      %2237 = vdwg.mxu0
      %v2238 = vmax.f32 %v1879, 0.0
      %v2239 = vmax.f32 %v1881, 0.0
      %v2240 = vmax.f32 %v2234, 0.0
      %v2241 = vmax.f32 %v2236, 0.0
      %v2242 = vld [vmem:[#allocation11] sm:$0xff]
      %v2243 = vld [vmem:[#allocation11 + $0x8] sm:$0xff]
      %v2244 = vld [vmem:[#allocation11 + $0x10] sm:$0xff]
      %v2245 = vld [vmem:[#allocation11 + $0x18] sm:$0xff]
      %v2246 = vld [vmem:[#allocation11 + $0x20] sm:$0xff]
      %v2247 = vld [vmem:[#allocation11 + $0x28] sm:$0xff]
      %v2248 = vld [vmem:[#allocation11 + $0x30] sm:$0xff]
      %v2249 = vld [vmem:[#allocation11 + $0x38] sm:$0xff]
      %v2250 = vld [vmem:[#allocation11 + $0x40] sm:$0xff]
      %v2251 = vld [vmem:[#allocation11 + $0x48] sm:$0xff]
      %v2252 = vld [vmem:[#allocation11 + $0x50] sm:$0xff]
      %v2253 = vld [vmem:[#allocation11 + $0x58] sm:$0xff]
      %v2254 = vld [vmem:[#allocation11 + $0x60] sm:$0xff]
      %v2255 = vld [vmem:[#allocation11 + $0x68] sm:$0xff]
      %v2256 = vld [vmem:[#allocation11 + $0x70] sm:$0xff]
      %v2257 = vld [vmem:[#allocation11 + $0x78] sm:$0xff]
      %v2258 = vld [vmem:[#allocation11 + $0x80] sm:$0xff]
      %v2259 = vld [vmem:[#allocation11 + $0x88] sm:$0xff]
      %v2260 = vld [vmem:[#allocation11 + $0x90] sm:$0xff]
      %v2261 = vld [vmem:[#allocation11 + $0x98] sm:$0xff]
      %v2262 = vld [vmem:[#allocation11 + $0xa0] sm:$0xff]
      %v2263 = vld [vmem:[#allocation11 + $0xa8] sm:$0xff]
      %v2264 = vld [vmem:[#allocation11 + $0xb0] sm:$0xff]
      %v2265 = vld [vmem:[#allocation11 + $0xb8] sm:$0xff]
      %v2266 = vld [vmem:[#allocation11 + $0xc0] sm:$0xff]
      %v2267 = vld [vmem:[#allocation11 + $0xc8] sm:$0xff]
      %v2268 = vld [vmem:[#allocation11 + $0xd0] sm:$0xff]
      %v2269 = vld [vmem:[#allocation11 + $0xd8] sm:$0xff]
      %v2270 = vld [vmem:[#allocation11 + $0xe0] sm:$0xff]
      %v2271 = vld [vmem:[#allocation11 + $0xe8] sm:$0xff]
      %v2272 = vld [vmem:[#allocation11 + $0xf0] sm:$0xff]
      %v2273 = vld [vmem:[#allocation11 + $0xf8] sm:$0xff]
      %v2274 = vld [vmem:[#allocation11 + $0x100] sm:$0xff]
      %v2275 = vld [vmem:[#allocation11 + $0x108] sm:$0xff]
      %v2276 = vld [vmem:[#allocation11 + $0x110] sm:$0xff]
      %v2277 = vld [vmem:[#allocation11 + $0x118] sm:$0xff]
      %v2278 = vld [vmem:[#allocation11 + $0x120] sm:$0xff]
      %v2279 = vld [vmem:[#allocation11 + $0x128] sm:$0xff]
      %v2280 = vld [vmem:[#allocation11 + $0x130] sm:$0xff]
      %v2281 = vld [vmem:[#allocation11 + $0x138] sm:$0xff]
      %v2282 = vld [vmem:[#allocation11 + $0x140] sm:$0xff]
      %v2283 = vld [vmem:[#allocation11 + $0x148] sm:$0xff]
      %v2284 = vld [vmem:[#allocation11 + $0x150] sm:$0xff]
      %v2285 = vld [vmem:[#allocation11 + $0x158] sm:$0xff]
      %v2286 = vld [vmem:[#allocation11 + $0x160] sm:$0xff]
      %v2287 = vld [vmem:[#allocation11 + $0x168] sm:$0xff]
      %v2288 = vld [vmem:[#allocation11 + $0x170] sm:$0xff]
      %v2289 = vld [vmem:[#allocation11 + $0x178] sm:$0xff]
      %v2290 = vld [vmem:[#allocation11 + $0x180] sm:$0xff]
      %v2291 = vld [vmem:[#allocation11 + $0x188] sm:$0xff]
      %v2292 = vld [vmem:[#allocation11 + $0x190] sm:$0xff]
      %v2293 = vld [vmem:[#allocation11 + $0x198] sm:$0xff]
      %v2294 = vld [vmem:[#allocation11 + $0x1a0] sm:$0xff]
      %v2295 = vld [vmem:[#allocation11 + $0x1a8] sm:$0xff]
      %v2296 = vld [vmem:[#allocation11 + $0x1b0] sm:$0xff]
      %v2297 = vld [vmem:[#allocation11 + $0x1b8] sm:$0xff]
      %v2298 = vld [vmem:[#allocation11 + $0x1c0] sm:$0xff]
      %v2299 = vld [vmem:[#allocation11 + $0x1c8] sm:$0xff]
      %v2300 = vld [vmem:[#allocation11 + $0x1d0] sm:$0xff]
      %v2301 = vld [vmem:[#allocation11 + $0x1d8] sm:$0xff]
      %v2302 = vld [vmem:[#allocation11 + $0x1e0] sm:$0xff]
      %v2303 = vld [vmem:[#allocation11 + $0x1e8] sm:$0xff]
      %v2304 = vld [vmem:[#allocation11 + $0x1f0] sm:$0xff]
      %v2305 = vld [vmem:[#allocation11 + $0x1f8] sm:$0xff]
      %v2306 = vld [vmem:[#allocation11 + $0x200] sm:$0xff]
      %v2307 = vld [vmem:[#allocation11 + $0x208] sm:$0xff]
      %v2308 = vld [vmem:[#allocation11 + $0x210] sm:$0xff]
      %v2309 = vld [vmem:[#allocation11 + $0x218] sm:$0xff]
      %v2310 = vld [vmem:[#allocation11 + $0x220] sm:$0xff]
      %v2311 = vld [vmem:[#allocation11 + $0x228] sm:$0xff]
      %v2312 = vld [vmem:[#allocation11 + $0x230] sm:$0xff]
      %v2313 = vld [vmem:[#allocation11 + $0x238] sm:$0xff]
      %v2314 = vld [vmem:[#allocation11 + $0x240] sm:$0xff]
      %v2315 = vld [vmem:[#allocation11 + $0x248] sm:$0xff]
      %v2316 = vld [vmem:[#allocation11 + $0x250] sm:$0xff]
      %v2317 = vld [vmem:[#allocation11 + $0x258] sm:$0xff]
      %v2318 = vld [vmem:[#allocation11 + $0x260] sm:$0xff]
      %v2319 = vld [vmem:[#allocation11 + $0x268] sm:$0xff]
      %v2320 = vld [vmem:[#allocation11 + $0x270] sm:$0xff]
      %v2321 = vld [vmem:[#allocation11 + $0x278] sm:$0xff]
      %v2322 = vld [vmem:[#allocation11 + $0x280] sm:$0xff]
      %v2323 = vld [vmem:[#allocation11 + $0x288] sm:$0xff]
      %v2324 = vld [vmem:[#allocation11 + $0x290] sm:$0xff]
      %v2325 = vld [vmem:[#allocation11 + $0x298] sm:$0xff]
      %v2326 = vld [vmem:[#allocation11 + $0x2a0] sm:$0xff]
      %v2327 = vld [vmem:[#allocation11 + $0x2a8] sm:$0xff]
      %v2328 = vld [vmem:[#allocation11 + $0x2b0] sm:$0xff]
      %v2329 = vld [vmem:[#allocation11 + $0x2b8] sm:$0xff]
      %v2330 = vld [vmem:[#allocation11 + $0x2c0] sm:$0xff]
      %v2331 = vld [vmem:[#allocation11 + $0x2c8] sm:$0xff]
      %v2332 = vld [vmem:[#allocation11 + $0x2d0] sm:$0xff]
      %v2333 = vld [vmem:[#allocation11 + $0x2d8] sm:$0xff]
      %v2334 = vld [vmem:[#allocation11 + $0x2e0] sm:$0xff]
      %v2335 = vld [vmem:[#allocation11 + $0x2e8] sm:$0xff]
      %v2336 = vld [vmem:[#allocation11 + $0x2f0] sm:$0xff]
      %v2337 = vld [vmem:[#allocation11 + $0x2f8] sm:$0xff]
      %v2338 = vld [vmem:[#allocation11 + $0x300] sm:$0xff]
      %v2339 = vld [vmem:[#allocation11 + $0x308] sm:$0xff]
      %v2340 = vld [vmem:[#allocation11 + $0x310] sm:$0xff]
      %v2341 = vld [vmem:[#allocation11 + $0x318] sm:$0xff]
      %v2342 = vld [vmem:[#allocation11 + $0x320] sm:$0xff]
      %v2343 = vld [vmem:[#allocation11 + $0x328] sm:$0xff]
      %v2344 = vld [vmem:[#allocation11 + $0x330] sm:$0xff]
      %v2345 = vld [vmem:[#allocation11 + $0x338] sm:$0xff]
      %v2346 = vld [vmem:[#allocation11 + $0x340] sm:$0xff]
      %v2347 = vld [vmem:[#allocation11 + $0x348] sm:$0xff]
      %v2348 = vld [vmem:[#allocation11 + $0x350] sm:$0xff]
      %v2349 = vld [vmem:[#allocation11 + $0x358] sm:$0xff]
      %v2350 = vld [vmem:[#allocation11 + $0x360] sm:$0xff]
      %v2351 = vld [vmem:[#allocation11 + $0x368] sm:$0xff]
      %v2352 = vld [vmem:[#allocation11 + $0x370] sm:$0xff]
      %v2353 = vld [vmem:[#allocation11 + $0x378] sm:$0xff]
      %v2354 = vld [vmem:[#allocation11 + $0x380] sm:$0xff]
      %v2355 = vld [vmem:[#allocation11 + $0x388] sm:$0xff]
      %v2356 = vld [vmem:[#allocation11 + $0x390] sm:$0xff]
      %v2357 = vld [vmem:[#allocation11 + $0x398] sm:$0xff]
      %v2358 = vld [vmem:[#allocation11 + $0x3a0] sm:$0xff]
      %v2359 = vld [vmem:[#allocation11 + $0x3a8] sm:$0xff]
      %v2360 = vld [vmem:[#allocation11 + $0x3b0] sm:$0xff]
      %v2361 = vld [vmem:[#allocation11 + $0x3b8] sm:$0xff]
      %v2362 = vld [vmem:[#allocation11 + $0x3c0] sm:$0xff]
      %v2363 = vld [vmem:[#allocation11 + $0x3c8] sm:$0xff]
      %v2364 = vld [vmem:[#allocation11 + $0x3d0] sm:$0xff]
      %v2365 = vld [vmem:[#allocation11 + $0x3d8] sm:$0xff]
      %v2366 = vld [vmem:[#allocation11 + $0x3e0] sm:$0xff]
      %v2367 = vld [vmem:[#allocation11 + $0x3e8] sm:$0xff]
      %v2368 = vld [vmem:[#allocation11 + $0x3f0] sm:$0xff]
      %v2369 = vld [vmem:[#allocation11 + $0x3f8] sm:$0xff]
      %v2370 = vld [vmem:[#allocation13] sm:$0x3]
      %v2372 = vlaneseq
      %v2373 = vshrl.u32 %v2372, 7
      %v2374 = vsub.s32 0, %v2373
      %v2375 = vrot.slane %v2370, %v2374
      %v2376 = vlaneseq
      %v2377 = vshrl.u32 %v2376, 7
      %v2378 = vsub.s32 1, %v2377
      %v2379 = vrot.slane %v2370, %v2378
      %2382 = vmatprep.subr.mxu0 %v2243
      %2383 = vmatpush1.msra.mxu0 %v2242
      %2384 = vmatprep.subr.mxu0 %v2245
      %2385 = vmatpush1.msra.mxu0 %v2244
      %2386 = vmatprep.subr.mxu0 %v2247
      %2387 = vmatpush1.msra.mxu0 %v2246
      %2388 = vmatprep.subr.mxu0 %v2249
      %2389 = vmatpush1.msra.mxu0 %v2248
      %2390 = vmatprep.subr.mxu0 %v2251
      %2391 = vmatpush1.msra.mxu0 %v2250
      %2392 = vmatprep.subr.mxu0 %v2253
      %2393 = vmatpush1.msra.mxu0 %v2252
      %2394 = vmatprep.subr.mxu0 %v2255
      %2395 = vmatpush1.msra.mxu0 %v2254
      %2396 = vmatprep.subr.mxu0 %v2257
      %2397 = vmatpush1.msra.mxu0 %v2256
      %2398 = vmatprep.subr.mxu0 %v2259
      %2399 = vmatpush1.msra.mxu0 %v2258
      %2400 = vmatprep.subr.mxu0 %v2261
      %2401 = vmatpush1.msra.mxu0 %v2260
      %2402 = vmatprep.subr.mxu0 %v2263
      %2403 = vmatpush1.msra.mxu0 %v2262
      %2404 = vmatprep.subr.mxu0 %v2265
      %2405 = vmatpush1.msra.mxu0 %v2264
      %2406 = vmatprep.subr.mxu0 %v2267
      %2407 = vmatpush1.msra.mxu0 %v2266
      %2408 = vmatprep.subr.mxu0 %v2269
      %2409 = vmatpush1.msra.mxu0 %v2268
      %2410 = vmatprep.subr.mxu0 %v2271
      %2411 = vmatpush1.msra.mxu0 %v2270
      %2412 = vmatprep.subr.mxu0 %v2273
      %2413 = vmatpush1.msra.mxu0 %v2272
      %2414 = vmatprep.subr.mxu0 %v2275
      %2415 = vmatpush1.msra.mxu0 %v2274
      %2416 = vmatprep.subr.mxu0 %v2277
      %2417 = vmatpush1.msra.mxu0 %v2276
      %2418 = vmatprep.subr.mxu0 %v2279
      %2419 = vmatpush1.msra.mxu0 %v2278
      %2420 = vmatprep.subr.mxu0 %v2281
      %2421 = vmatpush1.msra.mxu0 %v2280
      %2422 = vmatprep.subr.mxu0 %v2283
      %2423 = vmatpush1.msra.mxu0 %v2282
      %2424 = vmatprep.subr.mxu0 %v2285
      %2425 = vmatpush1.msra.mxu0 %v2284
      %2426 = vmatprep.subr.mxu0 %v2287
      %2427 = vmatpush1.msra.mxu0 %v2286
      %2428 = vmatprep.subr.mxu0 %v2289
      %2429 = vmatpush1.msra.mxu0 %v2288
      %2430 = vmatprep.subr.mxu0 %v2291
      %2431 = vmatpush1.msra.mxu0 %v2290
      %2432 = vmatprep.subr.mxu0 %v2293
      %2433 = vmatpush1.msra.mxu0 %v2292
      %2434 = vmatprep.subr.mxu0 %v2295
      %2435 = vmatpush1.msra.mxu0 %v2294
      %2436 = vmatprep.subr.mxu0 %v2297
      %2437 = vmatpush1.msra.mxu0 %v2296
      %2438 = vmatprep.subr.mxu0 %v2299
      %2439 = vmatpush1.msra.mxu0 %v2298
      %2440 = vmatprep.subr.mxu0 %v2301
      %2441 = vmatpush1.msra.mxu0 %v2300
      %2442 = vmatprep.subr.mxu0 %v2303
      %2443 = vmatpush1.msra.mxu0 %v2302
      %2444 = vmatprep.subr.mxu0 %v2305
      %2445 = vmatpush1.msra.mxu0 %v2304
      %2446 = vmatprep.mubr.f32.mxu0 %v2239
      %2447 = vmatmul.mubr.f32.gmra.mrb[0].mxu0 %v2238
      %v2448 = vpop.f32.mrb[0].mxu0
      %v2449 = vadd.f32 %v2375, %v2448
      %v2450 = vpop.f32.mrb[0].mxu0
      %v2451 = vadd.f32 %v2379, %v2450
      %2452 = vdwg.mxu0
      %2453 = vmatprep.subr.mxu0 %v2307
      %2454 = vmatpush1.msra.mxu0 %v2306
      %2455 = vmatprep.subr.mxu0 %v2309
      %2456 = vmatpush1.msra.mxu0 %v2308
      %2457 = vmatprep.subr.mxu0 %v2311
      %2458 = vmatpush1.msra.mxu0 %v2310
      %2459 = vmatprep.subr.mxu0 %v2313
      %2460 = vmatpush1.msra.mxu0 %v2312
      %2461 = vmatprep.subr.mxu0 %v2315
      %2462 = vmatpush1.msra.mxu0 %v2314
      %2463 = vmatprep.subr.mxu0 %v2317
      %2464 = vmatpush1.msra.mxu0 %v2316
      %2465 = vmatprep.subr.mxu0 %v2319
      %2466 = vmatpush1.msra.mxu0 %v2318
      %2467 = vmatprep.subr.mxu0 %v2321
      %2468 = vmatpush1.msra.mxu0 %v2320
      %2469 = vmatprep.subr.mxu0 %v2323
      %2470 = vmatpush1.msra.mxu0 %v2322
      %2471 = vmatprep.subr.mxu0 %v2325
      %2472 = vmatpush1.msra.mxu0 %v2324
      %2473 = vmatprep.subr.mxu0 %v2327
      %2474 = vmatpush1.msra.mxu0 %v2326
      %2475 = vmatprep.subr.mxu0 %v2329
      %2476 = vmatpush1.msra.mxu0 %v2328
      %2477 = vmatprep.subr.mxu0 %v2331
      %2478 = vmatpush1.msra.mxu0 %v2330
      %2479 = vmatprep.subr.mxu0 %v2333
      %2480 = vmatpush1.msra.mxu0 %v2332
      %2481 = vmatprep.subr.mxu0 %v2335
      %2482 = vmatpush1.msra.mxu0 %v2334
      %2483 = vmatprep.subr.mxu0 %v2337
      %2484 = vmatpush1.msra.mxu0 %v2336
      %2485 = vmatprep.subr.mxu0 %v2339
      %2486 = vmatpush1.msra.mxu0 %v2338
      %2487 = vmatprep.subr.mxu0 %v2341
      %2488 = vmatpush1.msra.mxu0 %v2340
      %2489 = vmatprep.subr.mxu0 %v2343
      %2490 = vmatpush1.msra.mxu0 %v2342
      %2491 = vmatprep.subr.mxu0 %v2345
      %2492 = vmatpush1.msra.mxu0 %v2344
      %2493 = vmatprep.subr.mxu0 %v2347
      %2494 = vmatpush1.msra.mxu0 %v2346
      %2495 = vmatprep.subr.mxu0 %v2349
      %2496 = vmatpush1.msra.mxu0 %v2348
      %2497 = vmatprep.subr.mxu0 %v2351
      %2498 = vmatpush1.msra.mxu0 %v2350
      %2499 = vmatprep.subr.mxu0 %v2353
      %2500 = vmatpush1.msra.mxu0 %v2352
      %2501 = vmatprep.subr.mxu0 %v2355
      %2502 = vmatpush1.msra.mxu0 %v2354
      %2503 = vmatprep.subr.mxu0 %v2357
      %2504 = vmatpush1.msra.mxu0 %v2356
      %2505 = vmatprep.subr.mxu0 %v2359
      %2506 = vmatpush1.msra.mxu0 %v2358
      %2507 = vmatprep.subr.mxu0 %v2361
      %2508 = vmatpush1.msra.mxu0 %v2360
      %2509 = vmatprep.subr.mxu0 %v2363
      %2510 = vmatpush1.msra.mxu0 %v2362
      %2511 = vmatprep.subr.mxu0 %v2365
      %2512 = vmatpush1.msra.mxu0 %v2364
      %2513 = vmatprep.subr.mxu0 %v2367
      %2514 = vmatpush1.msra.mxu0 %v2366
      %2515 = vmatprep.subr.mxu0 %v2369
      %2516 = vmatpush1.msra.mxu0 %v2368
      %2517 = vmatprep.mubr.f32.mxu0 %v2241
      %2518 = vmatmul.mubr.f32.gmra.mrb[0].mxu0 %v2240
      %v2519 = vpop.f32.mrb[0].mxu0
      %v2520 = vadd.f32 %v2449, %v2519
      %v2521 = vpop.f32.mrb[0].mxu0
      %v2522 = vadd.f32 %v2451, %v2521
      %2523 = vdwg.mxu0
      %v2524 = vmax.f32 %v2520, 0.0
      %v2525 = vmax.f32 %v2522, 0.0
      %v2526 = vld [vmem:[%s1] sm:$0xff]
      %v2527 = vld [vmem:[#allocation14] sm:$0xff]
      %v2528 = vld [vmem:[#allocation14 + $0x8] sm:$0xff]
      %v2529 = vld [vmem:[#allocation14 + $0x10] sm:$0xff]
      %v2530 = vld [vmem:[#allocation14 + $0x18] sm:$0xff]
      %v2531 = vld [vmem:[#allocation14 + $0x20] sm:$0xff]
      %v2532 = vld [vmem:[#allocation14 + $0x28] sm:$0xff]
      %v2533 = vld [vmem:[#allocation14 + $0x30] sm:$0xff]
      %v2534 = vld [vmem:[#allocation14 + $0x38] sm:$0xff]
      %v2535 = vld [vmem:[#allocation14 + $0x40] sm:$0xff]
      %v2536 = vld [vmem:[#allocation14 + $0x48] sm:$0xff]
      %v2537 = vld [vmem:[#allocation14 + $0x50] sm:$0xff]
      %v2538 = vld [vmem:[#allocation14 + $0x58] sm:$0xff]
      %v2539 = vld [vmem:[#allocation14 + $0x60] sm:$0xff]
      %v2540 = vld [vmem:[#allocation14 + $0x68] sm:$0xff]
      %v2541 = vld [vmem:[#allocation14 + $0x70] sm:$0xff]
      %v2542 = vld [vmem:[#allocation14 + $0x78] sm:$0xff]
      %v2543 = vld [vmem:[#allocation14 + $0x80] sm:$0xff]
      %v2544 = vld [vmem:[#allocation14 + $0x88] sm:$0xff]
      %v2545 = vld [vmem:[#allocation14 + $0x90] sm:$0xff]
      %v2546 = vld [vmem:[#allocation14 + $0x98] sm:$0xff]
      %v2547 = vld [vmem:[#allocation14 + $0xa0] sm:$0xff]
      %v2548 = vld [vmem:[#allocation14 + $0xa8] sm:$0xff]
      %v2549 = vld [vmem:[#allocation14 + $0xb0] sm:$0xff]
      %v2550 = vld [vmem:[#allocation14 + $0xb8] sm:$0xff]
      %v2551 = vld [vmem:[#allocation14 + $0xc0] sm:$0xff]
      %v2552 = vld [vmem:[#allocation14 + $0xc8] sm:$0xff]
      %v2553 = vld [vmem:[#allocation14 + $0xd0] sm:$0xff]
      %v2554 = vld [vmem:[#allocation14 + $0xd8] sm:$0xff]
      %v2555 = vld [vmem:[#allocation14 + $0xe0] sm:$0xff]
      %v2556 = vld [vmem:[#allocation14 + $0xe8] sm:$0xff]
      %v2557 = vld [vmem:[#allocation14 + $0xf0] sm:$0xff]
      %v2558 = vld [vmem:[#allocation14 + $0xf8] sm:$0xff]
      %v2559 = vld [vmem:[#allocation16] sm:$0x1]
      %v2561 = vlaneseq
      %v2562 = vshrl.u32 %v2561, 7
      %v2563 = vsub.s32 0, %v2562
      %v2564 = vrot.slane %v2559, %v2563
      %2566 = vmatprep.subr.mxu0 0.0
      %2567 = vmatpush1.msra.mxu0 %v2527
      %2568 = vmatprep.subr.mxu0 0.0
      %2569 = vmatpush1.msra.mxu0 %v2528
      %2570 = vmatprep.subr.mxu0 0.0
      %2571 = vmatpush1.msra.mxu0 %v2529
      %2572 = vmatprep.subr.mxu0 0.0
      %2573 = vmatpush1.msra.mxu0 %v2530
      %2574 = vmatprep.subr.mxu0 0.0
      %2575 = vmatpush1.msra.mxu0 %v2531
      %2576 = vmatprep.subr.mxu0 0.0
      %2577 = vmatpush1.msra.mxu0 %v2532
      %2578 = vmatprep.subr.mxu0 0.0
      %2579 = vmatpush1.msra.mxu0 %v2533
      %2580 = vmatprep.subr.mxu0 0.0
      %2581 = vmatpush1.msra.mxu0 %v2534
      %2582 = vmatprep.subr.mxu0 0.0
      %2583 = vmatpush1.msra.mxu0 %v2535
      %2584 = vmatprep.subr.mxu0 0.0
      %2585 = vmatpush1.msra.mxu0 %v2536
      %2586 = vmatprep.subr.mxu0 0.0
      %2587 = vmatpush1.msra.mxu0 %v2537
      %2588 = vmatprep.subr.mxu0 0.0
      %2589 = vmatpush1.msra.mxu0 %v2538
      %2590 = vmatprep.subr.mxu0 0.0
      %2591 = vmatpush1.msra.mxu0 %v2539
      %2592 = vmatprep.subr.mxu0 0.0
      %2593 = vmatpush1.msra.mxu0 %v2540
      %2594 = vmatprep.subr.mxu0 0.0
      %2595 = vmatpush1.msra.mxu0 %v2541
      %2596 = vmatprep.subr.mxu0 0.0
      %2597 = vmatpush1.msra.mxu0 %v2542
      %2598 = vmatprep.subr.mxu0 0.0
      %2599 = vmatpush1.msra.mxu0 %v2543
      %2600 = vmatprep.subr.mxu0 0.0
      %2601 = vmatpush1.msra.mxu0 %v2544
      %2602 = vmatprep.subr.mxu0 0.0
      %2603 = vmatpush1.msra.mxu0 %v2545
      %2604 = vmatprep.subr.mxu0 0.0
      %2605 = vmatpush1.msra.mxu0 %v2546
      %2606 = vmatprep.subr.mxu0 0.0
      %2607 = vmatpush1.msra.mxu0 %v2547
      %2608 = vmatprep.subr.mxu0 0.0
      %2609 = vmatpush1.msra.mxu0 %v2548
      %2610 = vmatprep.subr.mxu0 0.0
      %2611 = vmatpush1.msra.mxu0 %v2549
      %2612 = vmatprep.subr.mxu0 0.0
      %2613 = vmatpush1.msra.mxu0 %v2550
      %2614 = vmatprep.subr.mxu0 0.0
      %2615 = vmatpush1.msra.mxu0 %v2551
      %2616 = vmatprep.subr.mxu0 0.0
      %2617 = vmatpush1.msra.mxu0 %v2552
      %2618 = vmatprep.subr.mxu0 0.0
      %2619 = vmatpush1.msra.mxu0 %v2553
      %2620 = vmatprep.subr.mxu0 0.0
      %2621 = vmatpush1.msra.mxu0 %v2554
      %2622 = vmatprep.subr.mxu0 0.0
      %2623 = vmatpush1.msra.mxu0 %v2555
      %2624 = vmatprep.subr.mxu0 0.0
      %2625 = vmatpush1.msra.mxu0 %v2556
      %2626 = vmatprep.subr.mxu0 0.0
      %2627 = vmatpush1.msra.mxu0 %v2557
      %2628 = vmatprep.subr.mxu0 0.0
      %2629 = vmatpush1.msra.mxu0 %v2558
      %2630 = vmatprep.mubr.f32.mxu0 %v2525
      %2631 = vmatmul.mubr.f32.gmra.mrb[0].mxu0 %v2524
      %v2632 = vpop.f32.mrb[0].mxu0
      %v2633 = vadd.f32 %v2564, %v2632
      %v2634 = vpop.f32.mrb[0].mxu0
      %2635 = vdwg.mxu0
      %v2636 = vmax.f32 %v2633, 0.0
      %v2637 = vld [vmem:[%s10] sm:$0xff]
      %v2638 = vld [vmem:[%s10 + $0x8] sm:$0xff]
      %v2639 = vld [vmem:[%s10 + $0x10] sm:$0xff]
      %v2640 = vld [vmem:[%s10 + $0x18] sm:$0xff]
      %v2641 = vld [vmem:[%s10 + $0x20] sm:$0xff]
      %v2642 = vld [vmem:[%s10 + $0x28] sm:$0xff]
      %v2643 = vld [vmem:[%s10 + $0x30] sm:$0xff]
      %v2644 = vld [vmem:[%s10 + $0x38] sm:$0xff]
      %v2645 = vld [vmem:[%s10 + $0x40] sm:$0xff]
      %v2646 = vld [vmem:[%s10 + $0x48] sm:$0xff]
      %v2647 = vld [vmem:[%s10 + $0x50] sm:$0xff]
      %v2648 = vld [vmem:[%s10 + $0x58] sm:$0xff]
      %v2649 = vld [vmem:[%s10 + $0x60] sm:$0xff]
      %v2650 = vld [vmem:[%s10 + $0x68] sm:$0xff]
      %v2651 = vld [vmem:[%s10 + $0x70] sm:$0xff]
      %v2652 = vld [vmem:[%s10 + $0x78] sm:$0xff]
      %v2653 = vld [vmem:[#allocation17] sm:$0x1]
      %v2655 = vlaneseq
      %v2656 = vshrl.u32 %v2655, 7
      %v2657 = vsub.s32 0, %v2656
      %v2658 = vrot.slane %v2653, %v2657
      %2660 = vmatprep.subr.mxu0 0.0
      %2661 = vmatpush1.msra.mxu0 %v2637
      %2662 = vmatprep.subr.mxu0 0.0
      %2663 = vmatpush1.msra.mxu0 %v2638
      %2664 = vmatprep.subr.mxu0 0.0
      %2665 = vmatpush1.msra.mxu0 %v2639
      %2666 = vmatprep.subr.mxu0 0.0
      %2667 = vmatpush1.msra.mxu0 %v2640
      %2668 = vmatprep.subr.mxu0 0.0
      %2669 = vmatpush1.msra.mxu0 %v2641
      %2670 = vmatprep.subr.mxu0 0.0
      %2671 = vmatpush1.msra.mxu0 %v2642
      %2672 = vmatprep.subr.mxu0 0.0
      %2673 = vmatpush1.msra.mxu0 %v2643
      %2674 = vmatprep.subr.mxu0 0.0
      %2675 = vmatpush1.msra.mxu0 %v2644
      %2676 = vmatprep.subr.mxu0 0.0
      %2677 = vmatpush1.msra.mxu0 %v2645
      %2678 = vmatprep.subr.mxu0 0.0
      %2679 = vmatpush1.msra.mxu0 %v2646
      %2680 = vmatprep.subr.mxu0 0.0
      %2681 = vmatpush1.msra.mxu0 %v2647
      %2682 = vmatprep.subr.mxu0 0.0
      %2683 = vmatpush1.msra.mxu0 %v2648
      %2684 = vmatprep.subr.mxu0 0.0
      %2685 = vmatpush1.msra.mxu0 %v2649
      %2686 = vmatprep.subr.mxu0 0.0
      %2687 = vmatpush1.msra.mxu0 %v2650
      %2688 = vmatprep.subr.mxu0 0.0
      %2689 = vmatpush1.msra.mxu0 %v2651
      %2690 = vmatprep.subr.mxu0 0.0
      %2691 = vmatpush1.msra.mxu0 %v2652
      %2692 = vmatprep.subr.mxu0 0.0
      %2693 = vmatpush1.msra.mxu0 0.0
      %2694 = vmatprep.subr.mxu0 0.0
      %2695 = vmatpush1.msra.mxu0 0.0
      %2696 = vmatprep.subr.mxu0 0.0
      %2697 = vmatpush1.msra.mxu0 0.0
      %2698 = vmatprep.subr.mxu0 0.0
      %2699 = vmatpush1.msra.mxu0 0.0
      %2700 = vmatprep.subr.mxu0 0.0
      %2701 = vmatpush1.msra.mxu0 0.0
      %2702 = vmatprep.subr.mxu0 0.0
      %2703 = vmatpush1.msra.mxu0 0.0
      %2704 = vmatprep.subr.mxu0 0.0
      %2705 = vmatpush1.msra.mxu0 0.0
      %2706 = vmatprep.subr.mxu0 0.0
      %2707 = vmatpush1.msra.mxu0 0.0
      %2708 = vmatprep.subr.mxu0 0.0
      %2709 = vmatpush1.msra.mxu0 0.0
      %2710 = vmatprep.subr.mxu0 0.0
      %2711 = vmatpush1.msra.mxu0 0.0
      %2712 = vmatprep.subr.mxu0 0.0
      %2713 = vmatpush1.msra.mxu0 0.0
      %2714 = vmatprep.subr.mxu0 0.0
      %2715 = vmatpush1.msra.mxu0 0.0
      %2716 = vmatprep.subr.mxu0 0.0
      %2717 = vmatpush1.msra.mxu0 0.0
      %2718 = vmatprep.subr.mxu0 0.0
      %2719 = vmatpush1.msra.mxu0 0.0
      %2720 = vmatprep.subr.mxu0 0.0
      %2721 = vmatpush1.msra.mxu0 0.0
      %2722 = vmatprep.subr.mxu0 0.0
      %2723 = vmatpush1.msra.mxu0 0.0
      %2724 = vmatprep.mubr.f32.mxu0 0.0
      %2725 = vmatmul.mubr.f32.gmra.mrb[0].mxu0 %v2636
      %v2726 = vpop.f32.mrb[0].mxu0
      %v2727 = vadd.f32 %v2658, %v2726
      %v2728 = vpop.f32.mrb[0].mxu0
      %2729 = vdwg.mxu0
      %v2730 = vmax.f32 %v2727, 0.0
      %v2731 = vld [vmem:[%s12] sm:$0xff]
      %v2732 = vld [vmem:[%s12 + $0x8] sm:$0xff]
      %v2733 = vld [vmem:[%s12 + $0x10] sm:$0xff]
      %v2734 = vld [vmem:[%s12 + $0x18] sm:$0xff]
      %v2735 = vld [vmem:[%s12 + $0x20] sm:$0xff]
      %v2736 = vld [vmem:[%s12 + $0x28] sm:$0xff]
      %v2737 = vld [vmem:[%s12 + $0x30] sm:$0xff]
      %v2738 = vld [vmem:[%s12 + $0x38] sm:$0xff]
      %v2739 = vld [vmem:[%s13] sm:$0x1]
      %v2741 = vlaneseq
      %v2742 = vshrl.u32 %v2741, 7
      %v2743 = vsub.s32 0, %v2742
      %v2744 = vrot.slane %v2739, %v2743
      %vm2746 = vcmask 523264
      %v2748 = vsel %vm2746, %v2730, 0
      %2750 = vmatprep.subr.mxu0 0.0
      %2751 = vmatpush1.msra.mxu0 %v2731
      %2752 = vmatprep.subr.mxu0 0.0
      %2753 = vmatpush1.msra.mxu0 %v2732
      %2754 = vmatprep.subr.mxu0 0.0
      %2755 = vmatpush1.msra.mxu0 %v2733
      %2756 = vmatprep.subr.mxu0 0.0
      %2757 = vmatpush1.msra.mxu0 %v2734
      %2758 = vmatprep.subr.mxu0 0.0
      %2759 = vmatpush1.msra.mxu0 %v2735
      %2760 = vmatprep.subr.mxu0 0.0
      %2761 = vmatpush1.msra.mxu0 %v2736
      %2762 = vmatprep.subr.mxu0 0.0
      %2763 = vmatpush1.msra.mxu0 %v2737
      %2764 = vmatprep.subr.mxu0 0.0
      %2765 = vmatpush1.msra.mxu0 %v2738
      %2766 = vmatprep.subr.mxu0 0.0
      %2767 = vmatpush1.msra.mxu0 0.0
      %2768 = vmatprep.subr.mxu0 0.0
      %2769 = vmatpush1.msra.mxu0 0.0
      %2770 = vmatprep.subr.mxu0 0.0
      %2771 = vmatpush1.msra.mxu0 0.0
      %2772 = vmatprep.subr.mxu0 0.0
      %2773 = vmatpush1.msra.mxu0 0.0
      %2774 = vmatprep.subr.mxu0 0.0
      %2775 = vmatpush1.msra.mxu0 0.0
      %2776 = vmatprep.subr.mxu0 0.0
      %2777 = vmatpush1.msra.mxu0 0.0
      %2778 = vmatprep.subr.mxu0 0.0
      %2779 = vmatpush1.msra.mxu0 0.0
      %2780 = vmatprep.subr.mxu0 0.0
      %2781 = vmatpush1.msra.mxu0 0.0
      %2782 = vmatprep.subr.mxu0 0.0
      %2783 = vmatpush1.msra.mxu0 0.0
      %2784 = vmatprep.subr.mxu0 0.0
      %2785 = vmatpush1.msra.mxu0 0.0
      %2786 = vmatprep.subr.mxu0 0.0
      %2787 = vmatpush1.msra.mxu0 0.0
      %2788 = vmatprep.subr.mxu0 0.0
      %2789 = vmatpush1.msra.mxu0 0.0
      %2790 = vmatprep.subr.mxu0 0.0
      %2791 = vmatpush1.msra.mxu0 0.0
      %2792 = vmatprep.subr.mxu0 0.0
      %2793 = vmatpush1.msra.mxu0 0.0
      %2794 = vmatprep.subr.mxu0 0.0
      %2795 = vmatpush1.msra.mxu0 0.0
      %2796 = vmatprep.subr.mxu0 0.0
      %2797 = vmatpush1.msra.mxu0 0.0
      %2798 = vmatprep.subr.mxu0 0.0
      %2799 = vmatpush1.msra.mxu0 0.0
      %2800 = vmatprep.subr.mxu0 0.0
      %2801 = vmatpush1.msra.mxu0 0.0
      %2802 = vmatprep.subr.mxu0 0.0
      %2803 = vmatpush1.msra.mxu0 0.0
      %2804 = vmatprep.subr.mxu0 0.0
      %2805 = vmatpush1.msra.mxu0 0.0
      %2806 = vmatprep.subr.mxu0 0.0
      %2807 = vmatpush1.msra.mxu0 0.0
      %2808 = vmatprep.subr.mxu0 0.0
      %2809 = vmatpush1.msra.mxu0 0.0
      %2810 = vmatprep.subr.mxu0 0.0
      %2811 = vmatpush1.msra.mxu0 0.0
      %2812 = vmatprep.subr.mxu0 0.0
      %2813 = vmatpush1.msra.mxu0 0.0
      %2814 = vmatprep.mubr.f32.mxu0 0.0
      %2815 = vmatmul.mubr.f32.gmra.mrb[0].mxu0 %v2748
      %v2816 = vpop.f32.mrb[0].mxu0
      %v2817 = vadd.f32 %v2744, %v2816
      %v2818 = vpop.f32.mrb[0].mxu0
      %2819 = vdwg.mxu0
      %v2820 = vtanh.pop %v2817
      %vm2821 = vcmp.eq.s32.totalorder %v2526, 0
      %v2822 = vsel %vm2821, 1, 0
      %v2823 = vcvt.s32.f32 %v2822
      %2825 = vset.pattern.permute.xlu0 0
      %2826 = vperm.xlu0 %2825, %v2823
      %v2827 = vpop.permute.xlu0 %2826
      %v2829 = vmul.f32 %v2827, %v2820
      %v2830 = vadd.f32 %v2829, 0.0
      %s2831 = scalar_lea.vmem [#allocation14], 256
      %v2832 = vld [vmem:[%s2831] sm:$0xff]
      %v2833 = vld [vmem:[%s2831 + $0x8] sm:$0xff]
      %v2834 = vld [vmem:[%s2831 + $0x10] sm:$0xff]
      %v2835 = vld [vmem:[%s2831 + $0x18] sm:$0xff]
      %v2836 = vld [vmem:[%s2831 + $0x20] sm:$0xff]
      %v2837 = vld [vmem:[%s2831 + $0x28] sm:$0xff]
      %v2838 = vld [vmem:[%s2831 + $0x30] sm:$0xff]
      %v2839 = vld [vmem:[%s2831 + $0x38] sm:$0xff]
      %v2840 = vld [vmem:[%s2831 + $0x40] sm:$0xff]
      %v2841 = vld [vmem:[%s2831 + $0x48] sm:$0xff]
      %v2842 = vld [vmem:[%s2831 + $0x50] sm:$0xff]
      %v2843 = vld [vmem:[%s2831 + $0x58] sm:$0xff]
      %v2844 = vld [vmem:[%s2831 + $0x60] sm:$0xff]
      %v2845 = vld [vmem:[%s2831 + $0x68] sm:$0xff]
      %v2846 = vld [vmem:[%s2831 + $0x70] sm:$0xff]
      %v2847 = vld [vmem:[%s2831 + $0x78] sm:$0xff]
      %v2848 = vld [vmem:[%s2831 + $0x80] sm:$0xff]
      %v2849 = vld [vmem:[%s2831 + $0x88] sm:$0xff]
      %v2850 = vld [vmem:[%s2831 + $0x90] sm:$0xff]
      %v2851 = vld [vmem:[%s2831 + $0x98] sm:$0xff]
      %v2852 = vld [vmem:[%s2831 + $0xa0] sm:$0xff]
      %v2853 = vld [vmem:[%s2831 + $0xa8] sm:$0xff]
      %v2854 = vld [vmem:[%s2831 + $0xb0] sm:$0xff]
      %v2855 = vld [vmem:[%s2831 + $0xb8] sm:$0xff]
      %v2856 = vld [vmem:[%s2831 + $0xc0] sm:$0xff]
      %v2857 = vld [vmem:[%s2831 + $0xc8] sm:$0xff]
      %v2858 = vld [vmem:[%s2831 + $0xd0] sm:$0xff]
      %v2859 = vld [vmem:[%s2831 + $0xd8] sm:$0xff]
      %v2860 = vld [vmem:[%s2831 + $0xe0] sm:$0xff]
      %v2861 = vld [vmem:[%s2831 + $0xe8] sm:$0xff]
      %v2862 = vld [vmem:[%s2831 + $0xf0] sm:$0xff]
      %v2863 = vld [vmem:[%s2831 + $0xf8] sm:$0xff]
      %s2864 = scalar_lea.vmem [#allocation16], 1
      %v2865 = vld [vmem:[%s2864] sm:$0x1]
      %v2867 = vlaneseq
      %v2868 = vshrl.u32 %v2867, 7
      %v2869 = vsub.s32 0, %v2868
      %v2870 = vrot.slane %v2865, %v2869
      %2872 = vmatprep.subr.mxu0 0.0
      %2873 = vmatpush1.msra.mxu0 %v2832
      %2874 = vmatprep.subr.mxu0 0.0
      %2875 = vmatpush1.msra.mxu0 %v2833
      %2876 = vmatprep.subr.mxu0 0.0
      %2877 = vmatpush1.msra.mxu0 %v2834
      %2878 = vmatprep.subr.mxu0 0.0
      %2879 = vmatpush1.msra.mxu0 %v2835
      %2880 = vmatprep.subr.mxu0 0.0
      %2881 = vmatpush1.msra.mxu0 %v2836
      %2882 = vmatprep.subr.mxu0 0.0
      %2883 = vmatpush1.msra.mxu0 %v2837
      %2884 = vmatprep.subr.mxu0 0.0
      %2885 = vmatpush1.msra.mxu0 %v2838
      %2886 = vmatprep.subr.mxu0 0.0
      %2887 = vmatpush1.msra.mxu0 %v2839
      %2888 = vmatprep.subr.mxu0 0.0
      %2889 = vmatpush1.msra.mxu0 %v2840
      %2890 = vmatprep.subr.mxu0 0.0
      %2891 = vmatpush1.msra.mxu0 %v2841
      %2892 = vmatprep.subr.mxu0 0.0
      %2893 = vmatpush1.msra.mxu0 %v2842
      %2894 = vmatprep.subr.mxu0 0.0
      %2895 = vmatpush1.msra.mxu0 %v2843
      %2896 = vmatprep.subr.mxu0 0.0
      %2897 = vmatpush1.msra.mxu0 %v2844
      %2898 = vmatprep.subr.mxu0 0.0
      %2899 = vmatpush1.msra.mxu0 %v2845
      %2900 = vmatprep.subr.mxu0 0.0
      %2901 = vmatpush1.msra.mxu0 %v2846
      %2902 = vmatprep.subr.mxu0 0.0
      %2903 = vmatpush1.msra.mxu0 %v2847
      %2904 = vmatprep.subr.mxu0 0.0
      %2905 = vmatpush1.msra.mxu0 %v2848
      %2906 = vmatprep.subr.mxu0 0.0
      %2907 = vmatpush1.msra.mxu0 %v2849
      %2908 = vmatprep.subr.mxu0 0.0
      %2909 = vmatpush1.msra.mxu0 %v2850
      %2910 = vmatprep.subr.mxu0 0.0
      %2911 = vmatpush1.msra.mxu0 %v2851
      %2912 = vmatprep.subr.mxu0 0.0
      %2913 = vmatpush1.msra.mxu0 %v2852
      %2914 = vmatprep.subr.mxu0 0.0
      %2915 = vmatpush1.msra.mxu0 %v2853
      %2916 = vmatprep.subr.mxu0 0.0
      %2917 = vmatpush1.msra.mxu0 %v2854
      %2918 = vmatprep.subr.mxu0 0.0
      %2919 = vmatpush1.msra.mxu0 %v2855
      %2920 = vmatprep.subr.mxu0 0.0
      %2921 = vmatpush1.msra.mxu0 %v2856
      %2922 = vmatprep.subr.mxu0 0.0
      %2923 = vmatpush1.msra.mxu0 %v2857
      %2924 = vmatprep.subr.mxu0 0.0
      %2925 = vmatpush1.msra.mxu0 %v2858
      %2926 = vmatprep.subr.mxu0 0.0
      %2927 = vmatpush1.msra.mxu0 %v2859
      %2928 = vmatprep.subr.mxu0 0.0
      %2929 = vmatpush1.msra.mxu0 %v2860
      %2930 = vmatprep.subr.mxu0 0.0
      %2931 = vmatpush1.msra.mxu0 %v2861
      %2932 = vmatprep.subr.mxu0 0.0
      %2933 = vmatpush1.msra.mxu0 %v2862
      %2934 = vmatprep.subr.mxu0 0.0
      %2935 = vmatpush1.msra.mxu0 %v2863
      %2936 = vmatprep.mubr.f32.mxu0 %v2525
      %2937 = vmatmul.mubr.f32.gmra.mrb[0].mxu0 %v2524
      %v2938 = vpop.f32.mrb[0].mxu0
      %v2939 = vadd.f32 %v2870, %v2938
      %v2940 = vpop.f32.mrb[0].mxu0
      %2941 = vdwg.mxu0
      %v2942 = vmax.f32 %v2939, 0.0
      %s2943 = scalar_lea.vmem %s10, 128
      %v2944 = vld [vmem:[%s2943] sm:$0xff]
      %v2945 = vld [vmem:[%s2943 + $0x8] sm:$0xff]
      %v2946 = vld [vmem:[%s2943 + $0x10] sm:$0xff]
      %v2947 = vld [vmem:[%s2943 + $0x18] sm:$0xff]
      %v2948 = vld [vmem:[%s2943 + $0x20] sm:$0xff]
      %v2949 = vld [vmem:[%s2943 + $0x28] sm:$0xff]
      %v2950 = vld [vmem:[%s2943 + $0x30] sm:$0xff]
      %v2951 = vld [vmem:[%s2943 + $0x38] sm:$0xff]
      %v2952 = vld [vmem:[%s2943 + $0x40] sm:$0xff]
      %v2953 = vld [vmem:[%s2943 + $0x48] sm:$0xff]
      %v2954 = vld [vmem:[%s2943 + $0x50] sm:$0xff]
      %v2955 = vld [vmem:[%s2943 + $0x58] sm:$0xff]
      %v2956 = vld [vmem:[%s2943 + $0x60] sm:$0xff]
      %v2957 = vld [vmem:[%s2943 + $0x68] sm:$0xff]
      %v2958 = vld [vmem:[%s2943 + $0x70] sm:$0xff]
      %v2959 = vld [vmem:[%s2943 + $0x78] sm:$0xff]
      %s2960 = scalar_lea.vmem [#allocation17], 1
      %v2961 = vld [vmem:[%s2960] sm:$0x1]
      %v2963 = vlaneseq
      %v2964 = vshrl.u32 %v2963, 7
      %v2965 = vsub.s32 0, %v2964
      %v2966 = vrot.slane %v2961, %v2965
      %2968 = vmatprep.subr.mxu0 0.0
      %2969 = vmatpush1.msra.mxu0 %v2944
      %2970 = vmatprep.subr.mxu0 0.0
      %2971 = vmatpush1.msra.mxu0 %v2945
      %2972 = vmatprep.subr.mxu0 0.0
      %2973 = vmatpush1.msra.mxu0 %v2946
      %2974 = vmatprep.subr.mxu0 0.0
      %2975 = vmatpush1.msra.mxu0 %v2947
      %2976 = vmatprep.subr.mxu0 0.0
      %2977 = vmatpush1.msra.mxu0 %v2948
      %2978 = vmatprep.subr.mxu0 0.0
      %2979 = vmatpush1.msra.mxu0 %v2949
      %2980 = vmatprep.subr.mxu0 0.0
      %2981 = vmatpush1.msra.mxu0 %v2950
      %2982 = vmatprep.subr.mxu0 0.0
      %2983 = vmatpush1.msra.mxu0 %v2951
      %2984 = vmatprep.subr.mxu0 0.0
      %2985 = vmatpush1.msra.mxu0 %v2952
      %2986 = vmatprep.subr.mxu0 0.0
      %2987 = vmatpush1.msra.mxu0 %v2953
      %2988 = vmatprep.subr.mxu0 0.0
      %2989 = vmatpush1.msra.mxu0 %v2954
      %2990 = vmatprep.subr.mxu0 0.0
      %2991 = vmatpush1.msra.mxu0 %v2955
      %2992 = vmatprep.subr.mxu0 0.0
      %2993 = vmatpush1.msra.mxu0 %v2956
      %2994 = vmatprep.subr.mxu0 0.0
      %2995 = vmatpush1.msra.mxu0 %v2957
      %2996 = vmatprep.subr.mxu0 0.0
      %2997 = vmatpush1.msra.mxu0 %v2958
      %2998 = vmatprep.subr.mxu0 0.0
      %2999 = vmatpush1.msra.mxu0 %v2959
      %3000 = vmatprep.subr.mxu0 0.0
      %3001 = vmatpush1.msra.mxu0 0.0
      %3002 = vmatprep.subr.mxu0 0.0
      %3003 = vmatpush1.msra.mxu0 0.0
      %3004 = vmatprep.subr.mxu0 0.0
      %3005 = vmatpush1.msra.mxu0 0.0
      %3006 = vmatprep.subr.mxu0 0.0
      %3007 = vmatpush1.msra.mxu0 0.0
      %3008 = vmatprep.subr.mxu0 0.0
      %3009 = vmatpush1.msra.mxu0 0.0
      %3010 = vmatprep.subr.mxu0 0.0
      %3011 = vmatpush1.msra.mxu0 0.0
      %3012 = vmatprep.subr.mxu0 0.0
      %3013 = vmatpush1.msra.mxu0 0.0
      %3014 = vmatprep.subr.mxu0 0.0
      %3015 = vmatpush1.msra.mxu0 0.0
      %3016 = vmatprep.subr.mxu0 0.0
      %3017 = vmatpush1.msra.mxu0 0.0
      %3018 = vmatprep.subr.mxu0 0.0
      %3019 = vmatpush1.msra.mxu0 0.0
      %3020 = vmatprep.subr.mxu0 0.0
      %3021 = vmatpush1.msra.mxu0 0.0
      %3022 = vmatprep.subr.mxu0 0.0
      %3023 = vmatpush1.msra.mxu0 0.0
      %3024 = vmatprep.subr.mxu0 0.0
      %3025 = vmatpush1.msra.mxu0 0.0
      %3026 = vmatprep.subr.mxu0 0.0
      %3027 = vmatpush1.msra.mxu0 0.0
      %3028 = vmatprep.subr.mxu0 0.0
      %3029 = vmatpush1.msra.mxu0 0.0
      %3030 = vmatprep.subr.mxu0 0.0
      %3031 = vmatpush1.msra.mxu0 0.0
      %3032 = vmatprep.mubr.f32.mxu0 0.0
      %3033 = vmatmul.mubr.f32.gmra.mrb[0].mxu0 %v2942
      %v3034 = vpop.f32.mrb[0].mxu0
      %v3035 = vadd.f32 %v2966, %v3034
      %v3036 = vpop.f32.mrb[0].mxu0
      %3037 = vdwg.mxu0
      %v3038 = vmax.f32 %v3035, 0.0
      %s3039 = scalar_lea.vmem %s12, 64
      %v3040 = vld [vmem:[%s3039] sm:$0xff]
      %v3041 = vld [vmem:[%s3039 + $0x8] sm:$0xff]
      %v3042 = vld [vmem:[%s3039 + $0x10] sm:$0xff]
      %v3043 = vld [vmem:[%s3039 + $0x18] sm:$0xff]
      %v3044 = vld [vmem:[%s3039 + $0x20] sm:$0xff]
      %v3045 = vld [vmem:[%s3039 + $0x28] sm:$0xff]
      %v3046 = vld [vmem:[%s3039 + $0x30] sm:$0xff]
      %v3047 = vld [vmem:[%s3039 + $0x38] sm:$0xff]
      %s3048 = scalar_lea.vmem %s13, 1
      %v3049 = vld [vmem:[%s3048] sm:$0x1]
      %v3051 = vlaneseq
      %v3052 = vshrl.u32 %v3051, 7
      %v3053 = vsub.s32 0, %v3052
      %v3054 = vrot.slane %v3049, %v3053
      %v3057 = vsel %vm2746, %v3038, 0
      %3059 = vmatprep.subr.mxu0 0.0
      %3060 = vmatpush1.msra.mxu0 %v3040
      %3061 = vmatprep.subr.mxu0 0.0
      %3062 = vmatpush1.msra.mxu0 %v3041
      %3063 = vmatprep.subr.mxu0 0.0
      %3064 = vmatpush1.msra.mxu0 %v3042
      %3065 = vmatprep.subr.mxu0 0.0
      %3066 = vmatpush1.msra.mxu0 %v3043
      %3067 = vmatprep.subr.mxu0 0.0
      %3068 = vmatpush1.msra.mxu0 %v3044
      %3069 = vmatprep.subr.mxu0 0.0
      %3070 = vmatpush1.msra.mxu0 %v3045
      %3071 = vmatprep.subr.mxu0 0.0
      %3072 = vmatpush1.msra.mxu0 %v3046
      %3073 = vmatprep.subr.mxu0 0.0
      %3074 = vmatpush1.msra.mxu0 %v3047
      %3075 = vmatprep.subr.mxu0 0.0
      %3076 = vmatpush1.msra.mxu0 0.0
      %3077 = vmatprep.subr.mxu0 0.0
      %3078 = vmatpush1.msra.mxu0 0.0
      %3079 = vmatprep.subr.mxu0 0.0
      %3080 = vmatpush1.msra.mxu0 0.0
      %3081 = vmatprep.subr.mxu0 0.0
      %3082 = vmatpush1.msra.mxu0 0.0
      %3083 = vmatprep.subr.mxu0 0.0
      %3084 = vmatpush1.msra.mxu0 0.0
      %3085 = vmatprep.subr.mxu0 0.0
      %3086 = vmatpush1.msra.mxu0 0.0
      %3087 = vmatprep.subr.mxu0 0.0
      %3088 = vmatpush1.msra.mxu0 0.0
      %3089 = vmatprep.subr.mxu0 0.0
      %3090 = vmatpush1.msra.mxu0 0.0
      %3091 = vmatprep.subr.mxu0 0.0
      %3092 = vmatpush1.msra.mxu0 0.0
      %3093 = vmatprep.subr.mxu0 0.0
      %3094 = vmatpush1.msra.mxu0 0.0
      %3095 = vmatprep.subr.mxu0 0.0
      %3096 = vmatpush1.msra.mxu0 0.0
      %3097 = vmatprep.subr.mxu0 0.0
      %3098 = vmatpush1.msra.mxu0 0.0
      %3099 = vmatprep.subr.mxu0 0.0
      %3100 = vmatpush1.msra.mxu0 0.0
      %3101 = vmatprep.subr.mxu0 0.0
      %3102 = vmatpush1.msra.mxu0 0.0
      %3103 = vmatprep.subr.mxu0 0.0
      %3104 = vmatpush1.msra.mxu0 0.0
      %3105 = vmatprep.subr.mxu0 0.0
      %3106 = vmatpush1.msra.mxu0 0.0
      %3107 = vmatprep.subr.mxu0 0.0
      %3108 = vmatpush1.msra.mxu0 0.0
      %3109 = vmatprep.subr.mxu0 0.0
      %3110 = vmatpush1.msra.mxu0 0.0
      %3111 = vmatprep.subr.mxu0 0.0
      %3112 = vmatpush1.msra.mxu0 0.0
      %3113 = vmatprep.subr.mxu0 0.0
      %3114 = vmatpush1.msra.mxu0 0.0
      %3115 = vmatprep.subr.mxu0 0.0
      %3116 = vmatpush1.msra.mxu0 0.0
      %3117 = vmatprep.subr.mxu0 0.0
      %3118 = vmatpush1.msra.mxu0 0.0
      %3119 = vmatprep.subr.mxu0 0.0
      %3120 = vmatpush1.msra.mxu0 0.0
      %3121 = vmatprep.subr.mxu0 0.0
      %3122 = vmatpush1.msra.mxu0 0.0
      %3123 = vmatprep.mubr.f32.mxu0 0.0
      %3124 = vmatmul.mubr.f32.gmra.mrb[0].mxu0 %v3057
      %v3125 = vpop.f32.mrb[0].mxu0
      %v3126 = vadd.f32 %v3054, %v3125
      %v3127 = vpop.f32.mrb[0].mxu0
      %3128 = vdwg.mxu0
      %v3129 = vtanh.pop %v3126
      %vm3130 = vcmp.eq.s32.totalorder %v2526, 1
      %v3131 = vsel %vm3130, 1, 0
      %v3132 = vcvt.s32.f32 %v3131
      %3134 = vset.pattern.permute.xlu0 0
      %3135 = vperm.xlu0 %3134, %v3132
      %v3136 = vpop.permute.xlu0 %3135
      %v3138 = vmul.f32 %v3136, %v3129
      %v3139 = vadd.f32 %v2830, %v3138
      %s3140 = scalar_lea.vmem [#allocation14], 512
      %v3141 = vld [vmem:[%s3140] sm:$0xff]
      %v3142 = vld [vmem:[%s3140 + $0x8] sm:$0xff]
      %v3143 = vld [vmem:[%s3140 + $0x10] sm:$0xff]
      %v3144 = vld [vmem:[%s3140 + $0x18] sm:$0xff]
      %v3145 = vld [vmem:[%s3140 + $0x20] sm:$0xff]
      %v3146 = vld [vmem:[%s3140 + $0x28] sm:$0xff]
      %v3147 = vld [vmem:[%s3140 + $0x30] sm:$0xff]
      %v3148 = vld [vmem:[%s3140 + $0x38] sm:$0xff]
      %v3149 = vld [vmem:[%s3140 + $0x40] sm:$0xff]
      %v3150 = vld [vmem:[%s3140 + $0x48] sm:$0xff]
      %v3151 = vld [vmem:[%s3140 + $0x50] sm:$0xff]
      %v3152 = vld [vmem:[%s3140 + $0x58] sm:$0xff]
      %v3153 = vld [vmem:[%s3140 + $0x60] sm:$0xff]
      %v3154 = vld [vmem:[%s3140 + $0x68] sm:$0xff]
      %v3155 = vld [vmem:[%s3140 + $0x70] sm:$0xff]
      %v3156 = vld [vmem:[%s3140 + $0x78] sm:$0xff]
      %v3157 = vld [vmem:[%s3140 + $0x80] sm:$0xff]
      %v3158 = vld [vmem:[%s3140 + $0x88] sm:$0xff]
      %v3159 = vld [vmem:[%s3140 + $0x90] sm:$0xff]
      %v3160 = vld [vmem:[%s3140 + $0x98] sm:$0xff]
      %v3161 = vld [vmem:[%s3140 + $0xa0] sm:$0xff]
      %v3162 = vld [vmem:[%s3140 + $0xa8] sm:$0xff]
      %v3163 = vld [vmem:[%s3140 + $0xb0] sm:$0xff]
      %v3164 = vld [vmem:[%s3140 + $0xb8] sm:$0xff]
      %v3165 = vld [vmem:[%s3140 + $0xc0] sm:$0xff]
      %v3166 = vld [vmem:[%s3140 + $0xc8] sm:$0xff]
      %v3167 = vld [vmem:[%s3140 + $0xd0] sm:$0xff]
      %v3168 = vld [vmem:[%s3140 + $0xd8] sm:$0xff]
      %v3169 = vld [vmem:[%s3140 + $0xe0] sm:$0xff]
      %v3170 = vld [vmem:[%s3140 + $0xe8] sm:$0xff]
      %v3171 = vld [vmem:[%s3140 + $0xf0] sm:$0xff]
      %v3172 = vld [vmem:[%s3140 + $0xf8] sm:$0xff]
      %s3173 = scalar_lea.vmem [#allocation16], 2
      %v3174 = vld [vmem:[%s3173] sm:$0x1]
      %v3176 = vlaneseq
      %v3177 = vshrl.u32 %v3176, 7
      %v3178 = vsub.s32 0, %v3177
      %v3179 = vrot.slane %v3174, %v3178
      %3181 = vmatprep.subr.mxu0 0.0
      %3182 = vmatpush1.msra.mxu0 %v3141
      %3183 = vmatprep.subr.mxu0 0.0
      %3184 = vmatpush1.msra.mxu0 %v3142
      %3185 = vmatprep.subr.mxu0 0.0
      %3186 = vmatpush1.msra.mxu0 %v3143
      %3187 = vmatprep.subr.mxu0 0.0
      %3188 = vmatpush1.msra.mxu0 %v3144
      %3189 = vmatprep.subr.mxu0 0.0
      %3190 = vmatpush1.msra.mxu0 %v3145
      %3191 = vmatprep.subr.mxu0 0.0
      %3192 = vmatpush1.msra.mxu0 %v3146
      %3193 = vmatprep.subr.mxu0 0.0
      %3194 = vmatpush1.msra.mxu0 %v3147
      %3195 = vmatprep.subr.mxu0 0.0
      %3196 = vmatpush1.msra.mxu0 %v3148
      %3197 = vmatprep.subr.mxu0 0.0
      %3198 = vmatpush1.msra.mxu0 %v3149
      %3199 = vmatprep.subr.mxu0 0.0
      %3200 = vmatpush1.msra.mxu0 %v3150
      %3201 = vmatprep.subr.mxu0 0.0
      %3202 = vmatpush1.msra.mxu0 %v3151
      %3203 = vmatprep.subr.mxu0 0.0
      %3204 = vmatpush1.msra.mxu0 %v3152
      %3205 = vmatprep.subr.mxu0 0.0
      %3206 = vmatpush1.msra.mxu0 %v3153
      %3207 = vmatprep.subr.mxu0 0.0
      %3208 = vmatpush1.msra.mxu0 %v3154
      %3209 = vmatprep.subr.mxu0 0.0
      %3210 = vmatpush1.msra.mxu0 %v3155
      %3211 = vmatprep.subr.mxu0 0.0
      %3212 = vmatpush1.msra.mxu0 %v3156
      %3213 = vmatprep.subr.mxu0 0.0
      %3214 = vmatpush1.msra.mxu0 %v3157
      %3215 = vmatprep.subr.mxu0 0.0
      %3216 = vmatpush1.msra.mxu0 %v3158
      %3217 = vmatprep.subr.mxu0 0.0
      %3218 = vmatpush1.msra.mxu0 %v3159
      %3219 = vmatprep.subr.mxu0 0.0
      %3220 = vmatpush1.msra.mxu0 %v3160
      %3221 = vmatprep.subr.mxu0 0.0
      %3222 = vmatpush1.msra.mxu0 %v3161
      %3223 = vmatprep.subr.mxu0 0.0
      %3224 = vmatpush1.msra.mxu0 %v3162
      %3225 = vmatprep.subr.mxu0 0.0
      %3226 = vmatpush1.msra.mxu0 %v3163
      %3227 = vmatprep.subr.mxu0 0.0
      %3228 = vmatpush1.msra.mxu0 %v3164
      %3229 = vmatprep.subr.mxu0 0.0
      %3230 = vmatpush1.msra.mxu0 %v3165
      %3231 = vmatprep.subr.mxu0 0.0
      %3232 = vmatpush1.msra.mxu0 %v3166
      %3233 = vmatprep.subr.mxu0 0.0
      %3234 = vmatpush1.msra.mxu0 %v3167
      %3235 = vmatprep.subr.mxu0 0.0
      %3236 = vmatpush1.msra.mxu0 %v3168
      %3237 = vmatprep.subr.mxu0 0.0
      %3238 = vmatpush1.msra.mxu0 %v3169
      %3239 = vmatprep.subr.mxu0 0.0
      %3240 = vmatpush1.msra.mxu0 %v3170
      %3241 = vmatprep.subr.mxu0 0.0
      %3242 = vmatpush1.msra.mxu0 %v3171
      %3243 = vmatprep.subr.mxu0 0.0
      %3244 = vmatpush1.msra.mxu0 %v3172
      %3245 = vmatprep.mubr.f32.mxu0 %v2525
      %3246 = vmatmul.mubr.f32.gmra.mrb[0].mxu0 %v2524
      %v3247 = vpop.f32.mrb[0].mxu0
      %v3248 = vadd.f32 %v3179, %v3247
      %v3249 = vpop.f32.mrb[0].mxu0
      %3250 = vdwg.mxu0
      %v3251 = vmax.f32 %v3248, 0.0
      %s3252 = scalar_lea.vmem %s10, 256
      %v3253 = vld [vmem:[%s3252] sm:$0xff]
      %v3254 = vld [vmem:[%s3252 + $0x8] sm:$0xff]
      %v3255 = vld [vmem:[%s3252 + $0x10] sm:$0xff]
      %v3256 = vld [vmem:[%s3252 + $0x18] sm:$0xff]
      %v3257 = vld [vmem:[%s3252 + $0x20] sm:$0xff]
      %v3258 = vld [vmem:[%s3252 + $0x28] sm:$0xff]
      %v3259 = vld [vmem:[%s3252 + $0x30] sm:$0xff]
      %v3260 = vld [vmem:[%s3252 + $0x38] sm:$0xff]
      %v3261 = vld [vmem:[%s3252 + $0x40] sm:$0xff]
      %v3262 = vld [vmem:[%s3252 + $0x48] sm:$0xff]
      %v3263 = vld [vmem:[%s3252 + $0x50] sm:$0xff]
      %v3264 = vld [vmem:[%s3252 + $0x58] sm:$0xff]
      %v3265 = vld [vmem:[%s3252 + $0x60] sm:$0xff]
      %v3266 = vld [vmem:[%s3252 + $0x68] sm:$0xff]
      %v3267 = vld [vmem:[%s3252 + $0x70] sm:$0xff]
      %v3268 = vld [vmem:[%s3252 + $0x78] sm:$0xff]
      %s3269 = scalar_lea.vmem [#allocation17], 2
      %v3270 = vld [vmem:[%s3269] sm:$0x1]
      %v3272 = vlaneseq
      %v3273 = vshrl.u32 %v3272, 7
      %v3274 = vsub.s32 0, %v3273
      %v3275 = vrot.slane %v3270, %v3274
      %3277 = vmatprep.subr.mxu0 0.0
      %3278 = vmatpush1.msra.mxu0 %v3253
      %3279 = vmatprep.subr.mxu0 0.0
      %3280 = vmatpush1.msra.mxu0 %v3254
      %3281 = vmatprep.subr.mxu0 0.0
      %3282 = vmatpush1.msra.mxu0 %v3255
      %3283 = vmatprep.subr.mxu0 0.0
      %3284 = vmatpush1.msra.mxu0 %v3256
      %3285 = vmatprep.subr.mxu0 0.0
      %3286 = vmatpush1.msra.mxu0 %v3257
      %3287 = vmatprep.subr.mxu0 0.0
      %3288 = vmatpush1.msra.mxu0 %v3258
      %3289 = vmatprep.subr.mxu0 0.0
      %3290 = vmatpush1.msra.mxu0 %v3259
      %3291 = vmatprep.subr.mxu0 0.0
      %3292 = vmatpush1.msra.mxu0 %v3260
      %3293 = vmatprep.subr.mxu0 0.0
      %3294 = vmatpush1.msra.mxu0 %v3261
      %3295 = vmatprep.subr.mxu0 0.0
      %3296 = vmatpush1.msra.mxu0 %v3262
      %3297 = vmatprep.subr.mxu0 0.0
      %3298 = vmatpush1.msra.mxu0 %v3263
      %3299 = vmatprep.subr.mxu0 0.0
      %3300 = vmatpush1.msra.mxu0 %v3264
      %3301 = vmatprep.subr.mxu0 0.0
      %3302 = vmatpush1.msra.mxu0 %v3265
      %3303 = vmatprep.subr.mxu0 0.0
      %3304 = vmatpush1.msra.mxu0 %v3266
      %3305 = vmatprep.subr.mxu0 0.0
      %3306 = vmatpush1.msra.mxu0 %v3267
      %3307 = vmatprep.subr.mxu0 0.0
      %3308 = vmatpush1.msra.mxu0 %v3268
      %3309 = vmatprep.subr.mxu0 0.0
      %3310 = vmatpush1.msra.mxu0 0.0
      %3311 = vmatprep.subr.mxu0 0.0
      %3312 = vmatpush1.msra.mxu0 0.0
      %3313 = vmatprep.subr.mxu0 0.0
      %3314 = vmatpush1.msra.mxu0 0.0
      %3315 = vmatprep.subr.mxu0 0.0
      %3316 = vmatpush1.msra.mxu0 0.0
      %3317 = vmatprep.subr.mxu0 0.0
      %3318 = vmatpush1.msra.mxu0 0.0
      %3319 = vmatprep.subr.mxu0 0.0
      %3320 = vmatpush1.msra.mxu0 0.0
      %3321 = vmatprep.subr.mxu0 0.0
      %3322 = vmatpush1.msra.mxu0 0.0
      %3323 = vmatprep.subr.mxu0 0.0
      %3324 = vmatpush1.msra.mxu0 0.0
      %3325 = vmatprep.subr.mxu0 0.0
      %3326 = vmatpush1.msra.mxu0 0.0
      %3327 = vmatprep.subr.mxu0 0.0
      %3328 = vmatpush1.msra.mxu0 0.0
      %3329 = vmatprep.subr.mxu0 0.0
      %3330 = vmatpush1.msra.mxu0 0.0
      %3331 = vmatprep.subr.mxu0 0.0
      %3332 = vmatpush1.msra.mxu0 0.0
      %3333 = vmatprep.subr.mxu0 0.0
      %3334 = vmatpush1.msra.mxu0 0.0
      %3335 = vmatprep.subr.mxu0 0.0
      %3336 = vmatpush1.msra.mxu0 0.0
      %3337 = vmatprep.subr.mxu0 0.0
      %3338 = vmatpush1.msra.mxu0 0.0
      %3339 = vmatprep.subr.mxu0 0.0
      %3340 = vmatpush1.msra.mxu0 0.0
      %3341 = vmatprep.mubr.f32.mxu0 0.0
      %3342 = vmatmul.mubr.f32.gmra.mrb[0].mxu0 %v3251
      %v3343 = vpop.f32.mrb[0].mxu0
      %v3344 = vadd.f32 %v3275, %v3343
      %v3345 = vpop.f32.mrb[0].mxu0
      %3346 = vdwg.mxu0
      %v3347 = vmax.f32 %v3344, 0.0
      %s3348 = scalar_lea.vmem %s12, 128
      %v3349 = vld [vmem:[%s3348] sm:$0xff]
      %v3350 = vld [vmem:[%s3348 + $0x8] sm:$0xff]
      %v3351 = vld [vmem:[%s3348 + $0x10] sm:$0xff]
      %v3352 = vld [vmem:[%s3348 + $0x18] sm:$0xff]
      %v3353 = vld [vmem:[%s3348 + $0x20] sm:$0xff]
      %v3354 = vld [vmem:[%s3348 + $0x28] sm:$0xff]
      %v3355 = vld [vmem:[%s3348 + $0x30] sm:$0xff]
      %v3356 = vld [vmem:[%s3348 + $0x38] sm:$0xff]
      %s3357 = scalar_lea.vmem %s13, 2
      %v3358 = vld [vmem:[%s3357] sm:$0x1]
      %v3360 = vlaneseq
      %v3361 = vshrl.u32 %v3360, 7
      %v3362 = vsub.s32 0, %v3361
      %v3363 = vrot.slane %v3358, %v3362
      %v3366 = vsel %vm2746, %v3347, 0
      %3368 = vmatprep.subr.mxu0 0.0
      %3369 = vmatpush1.msra.mxu0 %v3349
      %3370 = vmatprep.subr.mxu0 0.0
      %3371 = vmatpush1.msra.mxu0 %v3350
      %3372 = vmatprep.subr.mxu0 0.0
      %3373 = vmatpush1.msra.mxu0 %v3351
      %3374 = vmatprep.subr.mxu0 0.0
      %3375 = vmatpush1.msra.mxu0 %v3352
      %3376 = vmatprep.subr.mxu0 0.0
      %3377 = vmatpush1.msra.mxu0 %v3353
      %3378 = vmatprep.subr.mxu0 0.0
      %3379 = vmatpush1.msra.mxu0 %v3354
      %3380 = vmatprep.subr.mxu0 0.0
      %3381 = vmatpush1.msra.mxu0 %v3355
      %3382 = vmatprep.subr.mxu0 0.0
      %3383 = vmatpush1.msra.mxu0 %v3356
      %3384 = vmatprep.subr.mxu0 0.0
      %3385 = vmatpush1.msra.mxu0 0.0
      %3386 = vmatprep.subr.mxu0 0.0
      %3387 = vmatpush1.msra.mxu0 0.0
      %3388 = vmatprep.subr.mxu0 0.0
      %3389 = vmatpush1.msra.mxu0 0.0
      %3390 = vmatprep.subr.mxu0 0.0
      %3391 = vmatpush1.msra.mxu0 0.0
      %3392 = vmatprep.subr.mxu0 0.0
      %3393 = vmatpush1.msra.mxu0 0.0
      %3394 = vmatprep.subr.mxu0 0.0
      %3395 = vmatpush1.msra.mxu0 0.0
      %3396 = vmatprep.subr.mxu0 0.0
      %3397 = vmatpush1.msra.mxu0 0.0
      %3398 = vmatprep.subr.mxu0 0.0
      %3399 = vmatpush1.msra.mxu0 0.0
      %3400 = vmatprep.subr.mxu0 0.0
      %3401 = vmatpush1.msra.mxu0 0.0
      %3402 = vmatprep.subr.mxu0 0.0
      %3403 = vmatpush1.msra.mxu0 0.0
      %3404 = vmatprep.subr.mxu0 0.0
      %3405 = vmatpush1.msra.mxu0 0.0
      %3406 = vmatprep.subr.mxu0 0.0
      %3407 = vmatpush1.msra.mxu0 0.0
      %3408 = vmatprep.subr.mxu0 0.0
      %3409 = vmatpush1.msra.mxu0 0.0
      %3410 = vmatprep.subr.mxu0 0.0
      %3411 = vmatpush1.msra.mxu0 0.0
      %3412 = vmatprep.subr.mxu0 0.0
      %3413 = vmatpush1.msra.mxu0 0.0
      %3414 = vmatprep.subr.mxu0 0.0
      %3415 = vmatpush1.msra.mxu0 0.0
      %3416 = vmatprep.subr.mxu0 0.0
      %3417 = vmatpush1.msra.mxu0 0.0
      %3418 = vmatprep.subr.mxu0 0.0
      %3419 = vmatpush1.msra.mxu0 0.0
      %3420 = vmatprep.subr.mxu0 0.0
      %3421 = vmatpush1.msra.mxu0 0.0
      %3422 = vmatprep.subr.mxu0 0.0
      %3423 = vmatpush1.msra.mxu0 0.0
      %3424 = vmatprep.subr.mxu0 0.0
      %3425 = vmatpush1.msra.mxu0 0.0
      %3426 = vmatprep.subr.mxu0 0.0
      %3427 = vmatpush1.msra.mxu0 0.0
      %3428 = vmatprep.subr.mxu0 0.0
      %3429 = vmatpush1.msra.mxu0 0.0
      %3430 = vmatprep.subr.mxu0 0.0
      %3431 = vmatpush1.msra.mxu0 0.0
      %3432 = vmatprep.mubr.f32.mxu0 0.0
      %3433 = vmatmul.mubr.f32.gmra.mrb[0].mxu0 %v3366
      %v3434 = vpop.f32.mrb[0].mxu0
      %v3435 = vadd.f32 %v3363, %v3434
      %v3436 = vpop.f32.mrb[0].mxu0
      %3437 = vdwg.mxu0
      %v3438 = vtanh.pop %v3435
      %vm3439 = vcmp.eq.s32.totalorder %v2526, 2
      %v3440 = vsel %vm3439, 1, 0
      %v3441 = vcvt.s32.f32 %v3440
      %3443 = vset.pattern.permute.xlu0 0
      %3444 = vperm.xlu0 %3443, %v3441
      %v3445 = vpop.permute.xlu0 %3444
      %v3447 = vmul.f32 %v3445, %v3438
      %v3448 = vadd.f32 %v3139, %v3447
      %v3449 = vld [vmem:[#allocation19] sm:$0xff]
      %v3450 = vld [vmem:[#allocation19 + $0x8] sm:$0xff]
      %v3451 = vld [vmem:[#allocation19 + $0x10] sm:$0xff]
      %v3452 = vld [vmem:[#allocation19 + $0x18] sm:$0xff]
      %v3453 = vld [vmem:[#allocation19 + $0x20] sm:$0xff]
      %v3454 = vld [vmem:[#allocation19 + $0x28] sm:$0xff]
      %v3455 = vld [vmem:[#allocation19 + $0x30] sm:$0xff]
      %v3456 = vld [vmem:[#allocation19 + $0x38] sm:$0xff]
      %v3457 = vld [vmem:[#allocation19 + $0x40] sm:$0xff]
      %v3458 = vld [vmem:[#allocation19 + $0x48] sm:$0xff]
      %v3459 = vld [vmem:[#allocation19 + $0x50] sm:$0xff]
      %v3460 = vld [vmem:[#allocation19 + $0x58] sm:$0xff]
      %v3461 = vld [vmem:[#allocation19 + $0x60] sm:$0xff]
      %v3462 = vld [vmem:[#allocation19 + $0x68] sm:$0xff]
      %v3463 = vld [vmem:[#allocation19 + $0x70] sm:$0xff]
      %v3464 = vld [vmem:[#allocation19 + $0x78] sm:$0xff]
      %v3465 = vld [vmem:[#allocation19 + $0x80] sm:$0xff]
      %v3466 = vld [vmem:[#allocation19 + $0x88] sm:$0xff]
      %v3467 = vld [vmem:[#allocation19 + $0x90] sm:$0xff]
      %v3468 = vld [vmem:[#allocation19 + $0x98] sm:$0xff]
      %v3469 = vld [vmem:[#allocation19 + $0xa0] sm:$0xff]
      %v3470 = vld [vmem:[#allocation19 + $0xa8] sm:$0xff]
      %v3471 = vld [vmem:[#allocation19 + $0xb0] sm:$0xff]
      %v3472 = vld [vmem:[#allocation19 + $0xb8] sm:$0xff]
      %v3473 = vld [vmem:[#allocation19 + $0xc0] sm:$0xff]
      %v3474 = vld [vmem:[#allocation19 + $0xc8] sm:$0xff]
      %v3475 = vld [vmem:[#allocation19 + $0xd0] sm:$0xff]
      %v3476 = vld [vmem:[#allocation19 + $0xd8] sm:$0xff]
      %v3477 = vld [vmem:[#allocation19 + $0xe0] sm:$0xff]
      %v3478 = vld [vmem:[#allocation19 + $0xe8] sm:$0xff]
      %v3479 = vld [vmem:[#allocation19 + $0xf0] sm:$0xff]
      %v3480 = vld [vmem:[#allocation19 + $0xf8] sm:$0xff]
      %v3481 = vld [vmem:[#allocation20] sm:$0x1]
      %v3483 = vlaneseq
      %v3484 = vshrl.u32 %v3483, 7
      %v3485 = vsub.s32 0, %v3484
      %v3486 = vrot.slane %v3481, %v3485
      %3488 = vmatprep.subr.mxu0 0.0
      %3489 = vmatpush1.msra.mxu0 %v3449
      %3490 = vmatprep.subr.mxu0 0.0
      %3491 = vmatpush1.msra.mxu0 %v3450
      %3492 = vmatprep.subr.mxu0 0.0
      %3493 = vmatpush1.msra.mxu0 %v3451
      %3494 = vmatprep.subr.mxu0 0.0
      %3495 = vmatpush1.msra.mxu0 %v3452
      %3496 = vmatprep.subr.mxu0 0.0
      %3497 = vmatpush1.msra.mxu0 %v3453
      %3498 = vmatprep.subr.mxu0 0.0
      %3499 = vmatpush1.msra.mxu0 %v3454
      %3500 = vmatprep.subr.mxu0 0.0
      %3501 = vmatpush1.msra.mxu0 %v3455
      %3502 = vmatprep.subr.mxu0 0.0
      %3503 = vmatpush1.msra.mxu0 %v3456
      %3504 = vmatprep.subr.mxu0 0.0
      %3505 = vmatpush1.msra.mxu0 %v3457
      %3506 = vmatprep.subr.mxu0 0.0
      %3507 = vmatpush1.msra.mxu0 %v3458
      %3508 = vmatprep.subr.mxu0 0.0
      %3509 = vmatpush1.msra.mxu0 %v3459
      %3510 = vmatprep.subr.mxu0 0.0
      %3511 = vmatpush1.msra.mxu0 %v3460
      %3512 = vmatprep.subr.mxu0 0.0
      %3513 = vmatpush1.msra.mxu0 %v3461
      %3514 = vmatprep.subr.mxu0 0.0
      %3515 = vmatpush1.msra.mxu0 %v3462
      %3516 = vmatprep.subr.mxu0 0.0
      %3517 = vmatpush1.msra.mxu0 %v3463
      %3518 = vmatprep.subr.mxu0 0.0
      %3519 = vmatpush1.msra.mxu0 %v3464
      %3520 = vmatprep.subr.mxu0 0.0
      %3521 = vmatpush1.msra.mxu0 %v3465
      %3522 = vmatprep.subr.mxu0 0.0
      %3523 = vmatpush1.msra.mxu0 %v3466
      %3524 = vmatprep.subr.mxu0 0.0
      %3525 = vmatpush1.msra.mxu0 %v3467
      %3526 = vmatprep.subr.mxu0 0.0
      %3527 = vmatpush1.msra.mxu0 %v3468
      %3528 = vmatprep.subr.mxu0 0.0
      %3529 = vmatpush1.msra.mxu0 %v3469
      %3530 = vmatprep.subr.mxu0 0.0
      %3531 = vmatpush1.msra.mxu0 %v3470
      %3532 = vmatprep.subr.mxu0 0.0
      %3533 = vmatpush1.msra.mxu0 %v3471
      %3534 = vmatprep.subr.mxu0 0.0
      %3535 = vmatpush1.msra.mxu0 %v3472
      %3536 = vmatprep.subr.mxu0 0.0
      %3537 = vmatpush1.msra.mxu0 %v3473
      %3538 = vmatprep.subr.mxu0 0.0
      %3539 = vmatpush1.msra.mxu0 %v3474
      %3540 = vmatprep.subr.mxu0 0.0
      %3541 = vmatpush1.msra.mxu0 %v3475
      %3542 = vmatprep.subr.mxu0 0.0
      %3543 = vmatpush1.msra.mxu0 %v3476
      %3544 = vmatprep.subr.mxu0 0.0
      %3545 = vmatpush1.msra.mxu0 %v3477
      %3546 = vmatprep.subr.mxu0 0.0
      %3547 = vmatpush1.msra.mxu0 %v3478
      %3548 = vmatprep.subr.mxu0 0.0
      %3549 = vmatpush1.msra.mxu0 %v3479
      %3550 = vmatprep.subr.mxu0 0.0
      %3551 = vmatpush1.msra.mxu0 %v3480
      %3552 = vmatprep.mubr.f32.mxu0 %v2525
      %3553 = vmatmul.mubr.f32.gmra.mrb[0].mxu0 %v2524
      %v3554 = vpop.f32.mrb[0].mxu0
      %v3555 = vadd.f32 %v3486, %v3554
      %v3556 = vpop.f32.mrb[0].mxu0
      %3557 = vdwg.mxu0
      %v3558 = vmax.f32 %v3555, 0.0
      %v3559 = vld [vmem:[%s16] sm:$0xff]
      %v3560 = vld [vmem:[%s16 + $0x8] sm:$0xff]
      %v3561 = vld [vmem:[%s16 + $0x10] sm:$0xff]
      %v3562 = vld [vmem:[%s16 + $0x18] sm:$0xff]
      %v3563 = vld [vmem:[%s16 + $0x20] sm:$0xff]
      %v3564 = vld [vmem:[%s16 + $0x28] sm:$0xff]
      %v3565 = vld [vmem:[%s16 + $0x30] sm:$0xff]
      %v3566 = vld [vmem:[%s16 + $0x38] sm:$0xff]
      %v3567 = vld [vmem:[%s16 + $0x40] sm:$0xff]
      %v3568 = vld [vmem:[%s16 + $0x48] sm:$0xff]
      %v3569 = vld [vmem:[%s16 + $0x50] sm:$0xff]
      %v3570 = vld [vmem:[%s16 + $0x58] sm:$0xff]
      %v3571 = vld [vmem:[%s16 + $0x60] sm:$0xff]
      %v3572 = vld [vmem:[%s16 + $0x68] sm:$0xff]
      %v3573 = vld [vmem:[%s16 + $0x70] sm:$0xff]
      %v3574 = vld [vmem:[%s16 + $0x78] sm:$0xff]
      %v3575 = vld [vmem:[#allocation22] sm:$0x1]
      %v3577 = vlaneseq
      %v3578 = vshrl.u32 %v3577, 7
      %v3579 = vsub.s32 0, %v3578
      %v3580 = vrot.slane %v3575, %v3579
      %3582 = vmatprep.subr.mxu0 0.0
      %3583 = vmatpush1.msra.mxu0 %v3559
      %3584 = vmatprep.subr.mxu0 0.0
      %3585 = vmatpush1.msra.mxu0 %v3560
      %3586 = vmatprep.subr.mxu0 0.0
      %3587 = vmatpush1.msra.mxu0 %v3561
      %3588 = vmatprep.subr.mxu0 0.0
      %3589 = vmatpush1.msra.mxu0 %v3562
      %3590 = vmatprep.subr.mxu0 0.0
      %3591 = vmatpush1.msra.mxu0 %v3563
      %3592 = vmatprep.subr.mxu0 0.0
      %3593 = vmatpush1.msra.mxu0 %v3564
      %3594 = vmatprep.subr.mxu0 0.0
      %3595 = vmatpush1.msra.mxu0 %v3565
      %3596 = vmatprep.subr.mxu0 0.0
      %3597 = vmatpush1.msra.mxu0 %v3566
      %3598 = vmatprep.subr.mxu0 0.0
      %3599 = vmatpush1.msra.mxu0 %v3567
      %3600 = vmatprep.subr.mxu0 0.0
      %3601 = vmatpush1.msra.mxu0 %v3568
      %3602 = vmatprep.subr.mxu0 0.0
      %3603 = vmatpush1.msra.mxu0 %v3569
      %3604 = vmatprep.subr.mxu0 0.0
      %3605 = vmatpush1.msra.mxu0 %v3570
      %3606 = vmatprep.subr.mxu0 0.0
      %3607 = vmatpush1.msra.mxu0 %v3571
      %3608 = vmatprep.subr.mxu0 0.0
      %3609 = vmatpush1.msra.mxu0 %v3572
      %3610 = vmatprep.subr.mxu0 0.0
      %3611 = vmatpush1.msra.mxu0 %v3573
      %3612 = vmatprep.subr.mxu0 0.0
      %3613 = vmatpush1.msra.mxu0 %v3574
      %3614 = vmatprep.subr.mxu0 0.0
      %3615 = vmatpush1.msra.mxu0 0.0
      %3616 = vmatprep.subr.mxu0 0.0
      %3617 = vmatpush1.msra.mxu0 0.0
      %3618 = vmatprep.subr.mxu0 0.0
      %3619 = vmatpush1.msra.mxu0 0.0
      %3620 = vmatprep.subr.mxu0 0.0
      %3621 = vmatpush1.msra.mxu0 0.0
      %3622 = vmatprep.subr.mxu0 0.0
      %3623 = vmatpush1.msra.mxu0 0.0
      %3624 = vmatprep.subr.mxu0 0.0
      %3625 = vmatpush1.msra.mxu0 0.0
      %3626 = vmatprep.subr.mxu0 0.0
      %3627 = vmatpush1.msra.mxu0 0.0
      %3628 = vmatprep.subr.mxu0 0.0
      %3629 = vmatpush1.msra.mxu0 0.0
      %3630 = vmatprep.subr.mxu0 0.0
      %3631 = vmatpush1.msra.mxu0 0.0
      %3632 = vmatprep.subr.mxu0 0.0
      %3633 = vmatpush1.msra.mxu0 0.0
      %3634 = vmatprep.subr.mxu0 0.0
      %3635 = vmatpush1.msra.mxu0 0.0
      %3636 = vmatprep.subr.mxu0 0.0
      %3637 = vmatpush1.msra.mxu0 0.0
      %3638 = vmatprep.subr.mxu0 0.0
      %3639 = vmatpush1.msra.mxu0 0.0
      %3640 = vmatprep.subr.mxu0 0.0
      %3641 = vmatpush1.msra.mxu0 0.0
      %3642 = vmatprep.subr.mxu0 0.0
      %3643 = vmatpush1.msra.mxu0 0.0
      %3644 = vmatprep.subr.mxu0 0.0
      %3645 = vmatpush1.msra.mxu0 0.0
      %3646 = vmatprep.mubr.f32.mxu0 0.0
      %3647 = vmatmul.mubr.f32.gmra.mrb[0].mxu0 %v3558
      %v3648 = vpop.f32.mrb[0].mxu0
      %v3649 = vadd.f32 %v3580, %v3648
      %v3650 = vpop.f32.mrb[0].mxu0
      %3651 = vdwg.mxu0
      %v3652 = vtanh.pop %v3649
      %vm3653 = vcmp.ge.s32.totalorder %v2526, 0
      %vm3654 = vcmp.lt.s32.totalorder %v2526, 3
      %vm3655 = vmand %vm3653, %vm3654
      %v3656 = vsel %vm3655, 1, 0
      %3657 = vset.pattern.permute.xlu0 0
      %3658 = vperm.xlu0 %3657, %v3656
      %v3659 = vpop.permute.xlu0 %3658
      %vm3660 = vcmp.eq.s32.totalorder %v3659, 1
      %v3661 = vsel %vm3660, %v3448, %v3652
      %v3662 = vmul.f32 %v3661, 3.0
      %vm3663 = vcmask 15360
      %3664 = vst.msk [vmem:[%s18] sm:$0xff] %vm3663, %v3662
    $region133: #{tpu_custom_call.1} parent=1 // pred_fallthru
      _
    // Predicated region
    $region134: #{tpu_custom_call.1} parent=1 // pred_check
      _
    $region135: #{tpu_custom_call.1} parent=1 // pred_check_branch
      %3666 = sbr.rel (0) target = $region137
    $region136: #{tpu_custom_call.1} parent=1 // pred_region
      _
    $region137: #{tpu_custom_call.1} parent=1 // pred_fallthru
      _
    // Predicated region
    $region138: #{tpu_custom_call.1} parent=1 // pred_check
      _
    $region139: #{tpu_custom_call.1} parent=1 // pred_check_branch
      %3668 = sbr.rel (0) target = $region141
    $region140: #{tpu_custom_call.1} parent=1 // pred_region
      _
    $region141: #{tpu_custom_call.1} parent=1 // pred_fallthru
      _
    %3669 = vsyncpa [#allocation4], 1
    %3670 = vsyncpa [#allocation6], 1
    %3671 = vsyncpa [#allocation9], 1
    %3672 = vsyncpa [#allocation12], 1
    %3673 = vsyncpa [#allocation15], 1
    %3674 = vsyncpa [#allocation18], 1
    %3675 = vsyncpa [#allocation21], 1

</llo_original>
